<compile_context>
chip_gen: v7x
topology: tpu7x:2x2x1
jax: 0.10.0
libtpu: 0.0.40
codegen_flags: <defaults>
</compile_context>

<pallas_src>
import functools
import math

import jax
import jax.numpy as jnp
from jax.experimental import pallas as pl
from jax.experimental.pallas import tpu as pltpu


_VMEM_LIMIT = 64 * 1024 * 1024  # safe on v5e/v6e (128 MiB) and v7x (64 MiB)
_LN_EPS = 1e-5
_GELU_C = 0.7978845608028654  # sqrt(2/pi), SAT gelu_impl (tanh approximation)


def _pick_tile(dim, target, align):
    """Largest `align`-aligned tile <= target that evenly divides `dim`.

    Falls back to the full dim when dim is small or has no aligned divisor
    (full-extent blocks are always legal for Pallas TPU)."""
    if dim <= target:
        return dim
    t = (target // align) * align
    while t >= align:
        if dim % t == 0:
            return t
        t -= align
    return dim


# --------------------------------------------------------------------------
# Fused LayerNorm -> Linear (+ optional tanh-GELU).   x:(M,K) f32, w:(K,N) bf16
# Grid (M//tm, N//tn); K kept whole per row-tile so the LN prologue sees the
# full feature dim (LN is recomputed per N tile; negligible vs. the matmul).
# --------------------------------------------------------------------------
def _ln_linear_kernel(x_ref, g_ref, b_ref, w_ref, bias_ref, o_ref, *, activation):
    x = x_ref[...].astype(jnp.float32)                     # (tm, K)
    mean = jnp.mean(x, axis=-1, keepdims=True)
    var = jnp.mean(jnp.square(x - mean), axis=-1, keepdims=True)
    xn = (x - mean) * jax.lax.rsqrt(var + _LN_EPS)
    xn = xn * g_ref[...] + b_ref[...]
    acc = jnp.dot(xn.astype(jnp.bfloat16), w_ref[...],
                  preferred_element_type=jnp.float32)       # (tm, tn) f32 acc
    acc = acc + bias_ref[...].astype(jnp.float32)
    if activation == "gelu":
        acc = 0.5 * acc * (1.0 + jnp.tanh(_GELU_C * acc * (1.0 + 0.044715 * acc * acc)))
    o_ref[...] = acc.astype(o_ref.dtype)


def ln_linear(x, gamma, beta, w, bias, *, activation=None, out_dtype=None,
              tm=256, tn=512):
    M, K = x.shape
    N = w.shape[1]
    tm = _pick_tile(M, tm, 8)
    tn = _pick_tile(N, tn, 128)
    out_dtype = x.dtype if out_dtype is None else out_dtype
    return pl.pallas_call(
        functools.partial(_ln_linear_kernel, activation=activation),
        out_shape=jax.ShapeDtypeStruct((M, N), out_dtype),
        grid=(M // tm, N // tn),
        in_specs=[
            pl.BlockSpec((tm, K), lambda i, j: (i, 0)),
            pl.BlockSpec((1, K), lambda i, j: (0, 0)),
            pl.BlockSpec((1, K), lambda i, j: (0, 0)),
            pl.BlockSpec((K, tn), lambda i, j: (0, j)),
            pl.BlockSpec((1, tn), lambda i, j: (0, j)),
        ],
        out_specs=pl.BlockSpec((tm, tn), lambda i, j: (i, j)),
        compiler_params=pltpu.CompilerParams(
            dimension_semantics=("parallel", "parallel"),
            vmem_limit_bytes=_VMEM_LIMIT),
    )(x, gamma, beta, w, bias)


# --------------------------------------------------------------------------
# Tiled Linear with K-reduction grid axis + fused bias + residual-add epilogue.
# Grid (M//tm, N//tn, K//tk), f32 VMEM accumulator.
# --------------------------------------------------------------------------
def _linear_residual_kernel(x_ref, w_ref, bias_ref, res_ref, o_ref, acc_ref):
    k = pl.program_id(2)

    @pl.when(k == 0)
    def _init():
        acc_ref[...] = jnp.zeros_like(acc_ref)

    acc_ref[...] += jnp.dot(x_ref[...].astype(jnp.bfloat16), w_ref[...],
                            preferred_element_type=jnp.float32)

    @pl.when(k == pl.num_programs(2) - 1)
    def _finalize():
        out = (acc_ref[...] + bias_ref[...].astype(jnp.float32)
               + res_ref[...].astype(jnp.float32))
        o_ref[...] = out.astype(o_ref.dtype)


def linear_residual(x, w, bias, residual, *, tm=256, tn=512, tk=512):
    M, K = x.shape
    N = w.shape[1]
    tm = _pick_tile(M, tm, 8)
    tn = _pick_tile(N, tn, 128)
    tk = _pick_tile(K, tk, 128)
    return pl.pallas_call(
        _linear_residual_kernel,
        out_shape=jax.ShapeDtypeStruct((M, N), residual.dtype),
        grid=(M // tm, N // tn, K // tk),
        in_specs=[
            pl.BlockSpec((tm, tk), lambda i, j, k: (i, k)),
            pl.BlockSpec((tk, tn), lambda i, j, k: (k, j)),
            pl.BlockSpec((1, tn), lambda i, j, k: (0, j)),
            pl.BlockSpec((tm, tn), lambda i, j, k: (i, j)),
        ],
        out_specs=pl.BlockSpec((tm, tn), lambda i, j, k: (i, j)),
        scratch_shapes=[pltpu.VMEM((tm, tn), jnp.float32)],
        compiler_params=pltpu.CompilerParams(
            dimension_semantics=("parallel", "parallel", "arbitrary"),
            vmem_limit_bytes=_VMEM_LIMIT),
    )(x, w, bias, residual)


# --------------------------------------------------------------------------
# Flash-style causal self-attention over a head group.
# qkv is viewed as (B, S, 3, nh, d); Q/K/V tiles are sliced by index_map
# (no host-side transposes).  Output is (B, S, nh, d).
# --------------------------------------------------------------------------
def _flash_attn_kernel(q_ref, k_ref, v_ref, o_ref, m_ref, l_ref, acc_ref, *, scale):
    qi = pl.program_id(2)
    ki = pl.program_id(3)
    n_k = pl.num_programs(3)
    _, tq, _, G, d = q_ref.shape
    tk = k_ref.shape[1]

    @pl.when(ki == 0)
    def _init():
        m_ref[...] = jnp.full(m_ref.shape, -jnp.inf, jnp.float32)
        l_ref[...] = jnp.zeros(l_ref.shape, jnp.float32)
        acc_ref[...] = jnp.zeros(acc_ref.shape, jnp.float32)

    q_start = qi * tq
    k_start = ki * tk

    # Skip KV tiles that lie entirely in the causal future of this Q tile
    # (their softmax contribution is exactly 0 in f32).
    @pl.when(k_start <= q_start + (tq - 1))
    def _compute():
        # (1, t, 1, G, d) -> (G, t, d): leading-dim reshape + cheap relayout.
        q = jnp.swapaxes(q_ref[...].reshape(tq, G, d), 0, 1).astype(jnp.bfloat16)
        k = jnp.swapaxes(k_ref[...].reshape(tk, G, d), 0, 1).astype(jnp.bfloat16)
        v = jnp.swapaxes(v_ref[...].reshape(tk, G, d), 0, 1).astype(jnp.bfloat16)

        s = jnp.einsum("hqd,hkd->hqk", q, k,
                       preferred_element_type=jnp.float32) * scale   # (G, tq, tk)

        # In-kernel causal mask (SAT convention: scores*mask - 10000*(1-mask)).
        rows = q_start + jax.lax.broadcasted_iota(jnp.int32, (1, tq, tk), 1)
        cols = k_start + jax.lax.broadcasted_iota(jnp.int32, (1, tq, tk), 2)
        s = jnp.where(rows >= cols, s, -10000.0)

        m_prev = m_ref[...]                                          # (G, tq, 1)
        m_new = jnp.maximum(m_prev, jnp.max(s, axis=-1, keepdims=True))
        alpha = jnp.exp(m_prev - m_new)
        p = jnp.exp(s - m_new)
        l_ref[...] = alpha * l_ref[...] + jnp.sum(p, axis=-1, keepdims=True)
        acc_ref[...] = alpha * acc_ref[...] + jnp.einsum(
            "hqk,hkd->hqd", p.astype(jnp.bfloat16), v,
            preferred_element_type=jnp.float32)
        m_ref[...] = m_new

    @pl.when(ki == n_k - 1)
    def _finalize():
        out = acc_ref[...] * pl.reciprocal(l_ref[...], approx=True)  # (G, tq, d)
        o_ref[0] = jnp.swapaxes(out, 0, 1).astype(o_ref.dtype)       # (tq, G, d)


def flash_attention(qkv, B, S, num_heads, d, *, tq=128, tk=128):
    # qkv: (B*S, 3*H) with last axis laid out as (3, nh, d) -> free reshape.
    qkv5 = qkv.reshape(B, S, 3, num_heads, d)
    tq = _pick_tile(S, tq, 8)
    tk = _pick_tile(S, tk, 8)
    G = _pick_tile(num_heads, 8, 8)          # heads per grid step
    nhg = num_heads // G
    scale = 1.0 / math.sqrt(d)

    q_spec = pl.BlockSpec((1, tq, 1, G, d), lambda b, g, qi, ki: (b, qi, 0, g, 0))
    k_spec = pl.BlockSpec((1, tk, 1, G, d), lambda b, g, qi, ki: (b, ki, 1, g, 0))
    v_spec = pl.BlockSpec((1, tk, 1, G, d), lambda b, g, qi, ki: (b, ki, 2, g, 0))
    o_spec = pl.BlockSpec((1, tq, G, d), lambda b, g, qi, ki: (b, qi, g, 0))

    out = pl.pallas_call(
        functools.partial(_flash_attn_kernel, scale=scale),
        out_shape=jax.ShapeDtypeStruct((B, S, num_heads, d), jnp.bfloat16),
        grid=(B, nhg, S // tq, S // tk),
        in_specs=[q_spec, k_spec, v_spec],
        out_specs=o_spec,
        scratch_shapes=[
            pltpu.VMEM((G, tq, 1), jnp.float32),   # m (running max)
            pltpu.VMEM((G, tq, 1), jnp.float32),   # l (running denom)
            pltpu.VMEM((G, tq, d), jnp.float32),   # acc
        ],
        compiler_params=pltpu.CompilerParams(
            dimension_semantics=("parallel", "parallel", "parallel", "arbitrary"),
            vmem_limit_bytes=_VMEM_LIMIT),
    )(qkv5, qkv5, qkv5)
    return out.reshape(B * S, num_heads * d)     # free reshape: (B,S,nh,d)->(B*S,H)


# --------------------------------------------------------------------------
# Fused final LayerNorm + logits = LN(h) @ word_emb.T, contracting over H
# against word_emb stored as (V, H) (no transposed copy, no zero bias).
# --------------------------------------------------------------------------
def _ln_logits_kernel(x_ref, g_ref, b_ref, emb_ref, o_ref):
    x = x_ref[...].astype(jnp.float32)                     # (tm, H)
    mean = jnp.mean(x, axis=-1, keepdims=True)
    var = jnp.mean(jnp.square(x - mean), axis=-1, keepdims=True)
    xn = (x - mean) * jax.lax.rsqrt(var + _LN_EPS)
    xn = (xn * g_ref[...] + b_ref[...]).astype(jnp.bfloat16)
    o_ref[...] = jax.lax.dot_general(
        xn, emb_ref[...],
        dimension_numbers=(((1,), (1,)), ((), ())),        # contract H with H
        preferred_element_type=jnp.float32).astype(o_ref.dtype)


def ln_logits(h, gamma, beta, word_emb, *, tm=256, tv=512):
    M, H = h.shape
    V = word_emb.shape[0]
    tm = _pick_tile(M, tm, 8)
    tv = _pick_tile(V, tv, 128)
    return pl.pallas_call(
        _ln_logits_kernel,
        out_shape=jax.ShapeDtypeStruct((M, V), jnp.float32),
        grid=(M // tm, V // tv),
        in_specs=[
            pl.BlockSpec((tm, H), lambda i, j: (i, 0)),
            pl.BlockSpec((1, H), lambda i, j: (0, 0)),
            pl.BlockSpec((1, H), lambda i, j: (0, 0)),
            pl.BlockSpec((tv, H), lambda i, j: (j, 0)),
        ],
        out_specs=pl.BlockSpec((tm, tv), lambda i, j: (i, j)),
        compiler_params=pltpu.CompilerParams(
            dimension_semantics=("parallel", "parallel"),
            vmem_limit_bytes=_VMEM_LIMIT),
    )(h, gamma, beta, word_emb)


# ----------------------------- model (glue) -----------------------------

def init_params(key, *, num_layers, vocab_size, hidden_size, num_heads,
                max_sequence_length, inner_hidden_size):
    def nrm(k, shape, std=0.02, dtype=jnp.bfloat16):
        return (std * jax.random.normal(k, shape, jnp.float32)).astype(dtype)

    keys = iter(jax.random.split(key, 8 + 8 * num_layers))
    params = {
        "word_emb": nrm(next(keys), (vocab_size, hidden_size)),      # bf16 (V,H)
        "pos_emb": nrm(next(keys), (max_sequence_length, hidden_size)),
        "final_ln_g": jnp.ones((1, hidden_size), jnp.float32),
        "final_ln_b": jnp.zeros((1, hidden_size), jnp.float32),
        "layers": [],
    }
    for _ in range(num_layers):
        layer = {
            "ln1_g": jnp.ones((1, hidden_size), jnp.float32),
            "ln1_b": jnp.zeros((1, hidden_size), jnp.float32),
            "qkv_w": nrm(next(keys), (hidden_size, 3 * hidden_size)),
            "qkv_b": jnp.zeros((1, 3 * hidden_size), jnp.float32),
            "attn_out_w": nrm(next(keys), (hidden_size, hidden_size)),
            "attn_out_b": jnp.zeros((1, hidden_size), jnp.float32),
            "ln2_g": jnp.ones((1, hidden_size), jnp.float32),
            "ln2_b": jnp.zeros((1, hidden_size), jnp.float32),
            "fc1_w": nrm(next(keys), (hidden_size, inner_hidden_size)),
            "fc1_b": jnp.zeros((1, inner_hidden_size), jnp.float32),
            "fc2_w": nrm(next(keys), (inner_hidden_size, hidden_size)),
            "fc2_b": jnp.zeros((1, hidden_size), jnp.float32),
        }
        params["layers"].append(layer)
    return params


def base_model_forward(params, input_ids, position_ids, *, num_heads):
    # Dropout probs are applied in eval mode (no-op) -> deterministic inference.
    B, S = input_ids.shape
    H = params["word_emb"].shape[1]
    d = H // num_heads

    # Embedding gathers: data-dependent row gather left in plain JAX.
    word = jnp.take(params["word_emb"], input_ids, axis=0)       # (B, S, H) bf16
    pos = jnp.take(params["pos_emb"], position_ids, axis=0)      # (B, S, H) bf16
    h = (word.astype(jnp.float32) + pos.astype(jnp.float32)).reshape(B * S, H)

    for layer in params["layers"]:
        # ---- pre-LN self-attention (LN fused into QKV projection) ----
        qkv = ln_linear(h, layer["ln1_g"], layer["ln1_b"],
                        layer["qkv_w"], layer["qkv_b"],
                        out_dtype=jnp.bfloat16)                   # (B*S, 3H)
        ctx = flash_attention(qkv, B, S, num_heads, d)            # (B*S, H) bf16
        h = linear_residual(ctx, layer["attn_out_w"], layer["attn_out_b"], h)

        # ---- pre-LN MLP (LN fused into fc1, residual fused into fc2) ----
        inter = ln_linear(h, layer["ln2_g"], layer["ln2_b"],
                          layer["fc1_w"], layer["fc1_b"],
                          activation="gelu", out_dtype=jnp.bfloat16)
        h = linear_residual(inter, layer["fc2_w"], layer["fc2_b"], h)

    # final LN + logits = LN(h) @ word_emb.T (default final_forward hook)
    logits = ln_logits(h, params["final_ln_g"], params["final_ln_b"],
                       params["word_emb"])                        # (B*S, V) f32
    V = params["word_emb"].shape[0]
    return logits.reshape(B, S, V)


# TODO(synk): mixin/hook registration, checkpoint loading (from_pretrained) and
# activation checkpointing are host-side control flow with no tensor compute.

if __name__ == "__main__":
    # Small config consistent with BaseTransformer(args...)
    NUM_LAYERS = 2
    VOCAB = 64
    HIDDEN = 32
    NUM_HEADS = 2
    MAX_SEQ = 16
    INNER = 4 * HIDDEN
    B, S = 2, 8

    key = jax.random.PRNGKey(0)
    pkey, dkey = jax.random.split(key)
    params = init_params(
        pkey, num_layers=NUM_LAYERS, vocab_size=VOCAB, hidden_size=HIDDEN,
        num_heads=NUM_HEADS, max_sequence_length=MAX_SEQ,
        inner_hidden_size=INNER)

    input_ids = jax.random.randint(dkey, (B, S), 0, VOCAB, dtype=jnp.int32)
    position_ids = jnp.broadcast_to(jnp.arange(S, dtype=jnp.int32), (B, S))

    fwd = jax.jit(functools.partial(base_model_forward, num_heads=NUM_HEADS))
    logits = fwd(params, input_ids, position_ids)
    jax.block_until_ready(logits)

    assert logits.shape == (B, S, VOCAB)
    assert jnp.all(jnp.isfinite(logits))
    print("KERNEL_OK")
</pallas_src>

<mosaic_0001>
module attributes {stable_mosaic.version = 11 : i64} {
  func.func @_ln_linear_kernel(%arg0: i32, %arg1: i32, %arg2: memref<16x32xf32, #tpu.memory_space<vmem>>, %arg3: memref<1x32xf32, #tpu.memory_space<vmem>>, %arg4: memref<1x32xf32, #tpu.memory_space<vmem>>, %arg5: memref<32x96xbf16, #tpu.memory_space<vmem>>, %arg6: memref<1x96xf32, #tpu.memory_space<vmem>>, %arg7: memref<16x96xbf16, #tpu.memory_space<vmem>>) attributes {dimension_semantics = [#tpu.dimension_semantics<parallel>, #tpu.dimension_semantics<parallel>], iteration_bounds = array<i64: 1, 1>, scalar_prefetch = 0 : i64, scratch_operands = 0 : i64, tpu.core_type = #tpu.core_type<tc>, window_params = [{transform_indices = @transform_0, window_bounds = array<i64: 16, 32>}, {pipeline_mode = #tpu.pipeline_mode<synchronous>, transform_indices = @transform_1, window_bounds = array<i64: 1, 32>}, {pipeline_mode = #tpu.pipeline_mode<synchronous>, transform_indices = @transform_2, window_bounds = array<i64: 1, 32>}, {transform_indices = @transform_3, window_bounds = array<i64: 32, 96>}, {transform_indices = @transform_4, window_bounds = array<i64: 1, 96>}, {transform_indices = @transform_5, window_bounds = array<i64: 16, 96>}]} {
    %c0 = arith.constant 0 : index
    %c0_0 = arith.constant 0 : index
    %0 = vector.load %arg2[%c0, %c0_0] : memref<16x32xf32, #tpu.memory_space<vmem>>, vector<16x32xf32>
    %cst = arith.constant dense<0.000000e+00> : vector<16xf32>
    %1 = vector.multi_reduction <add>, %0, %cst [1] : vector<16x32xf32> to vector<16xf32>
    %2 = vector.shape_cast %1 : vector<16xf32> to vector<16x1xf32>
    %cst_1 = arith.constant 3.200000e+01 : f32
    %3 = vector.broadcast %cst_1 : f32 to vector<16x1xf32>
    %4 = arith.divf %2, %3 : vector<16x1xf32>
    %5 = vector.broadcast %4 : vector<16x1xf32> to vector<16x32xf32>
    %6 = arith.subf %0, %5 : vector<16x32xf32>
    %7 = arith.mulf %6, %6 : vector<16x32xf32>
    %cst_2 = arith.constant dense<0.000000e+00> : vector<16xf32>
    %8 = vector.multi_reduction <add>, %7, %cst_2 [1] : vector<16x32xf32> to vector<16xf32>
    %9 = vector.shape_cast %8 : vector<16xf32> to vector<16x1xf32>
    %cst_3 = arith.constant 3.200000e+01 : f32
    %10 = vector.broadcast %cst_3 : f32 to vector<16x1xf32>
    %11 = arith.divf %9, %10 : vector<16x1xf32>
    %12 = vector.broadcast %4 : vector<16x1xf32> to vector<16x32xf32>
    %13 = arith.subf %0, %12 : vector<16x32xf32>
    %cst_4 = arith.constant 9.99999974E-6 : f32
    %14 = vector.broadcast %cst_4 : f32 to vector<16x1xf32>
    %15 = arith.addf %11, %14 : vector<16x1xf32>
    %16 = math.rsqrt %15 : vector<16x1xf32>
    %17 = vector.broadcast %16 : vector<16x1xf32> to vector<16x32xf32>
    %18 = arith.mulf %13, %17 : vector<16x32xf32>
    %c0_5 = arith.constant 0 : index
    %c0_6 = arith.constant 0 : index
    %19 = vector.load %arg3[%c0_5, %c0_6] : memref<1x32xf32, #tpu.memory_space<vmem>>, vector<1x32xf32>
    %20 = vector.broadcast %19 : vector<1x32xf32> to vector<16x32xf32>
    %21 = arith.mulf %18, %20 : vector<16x32xf32>
    %c0_7 = arith.constant 0 : index
    %c0_8 = arith.constant 0 : index
    %22 = vector.load %arg4[%c0_7, %c0_8] : memref<1x32xf32, #tpu.memory_space<vmem>>, vector<1x32xf32>
    %23 = vector.broadcast %22 : vector<1x32xf32> to vector<16x32xf32>
    %24 = arith.addf %21, %23 : vector<16x32xf32>
    %25 = arith.truncf %24 : vector<16x32xf32> to vector<16x32xbf16>
    %c0_9 = arith.constant 0 : index
    %c0_10 = arith.constant 0 : index
    %26 = vector.load %arg5[%c0_9, %c0_10] : memref<32x96xbf16, #tpu.memory_space<vmem>>, vector<32x96xbf16>
    %cst_11 = arith.constant dense<0.000000e+00> : vector<16x96xf32>
    %27 = tpu.matmul %25, %26, %cst_11 {dimension_numbers = #tpu.dot_dimension_numbers<[1], [0], [0], [1], [0, 0, 1, 1], [], []>} : vector<16x32xbf16>, vector<32x96xbf16>, vector<16x96xf32> -> vector<16x96xf32>
    %c0_12 = arith.constant 0 : index
    %c0_13 = arith.constant 0 : index
    %28 = vector.load %arg6[%c0_12, %c0_13] : memref<1x96xf32, #tpu.memory_space<vmem>>, vector<1x96xf32>
    %29 = vector.broadcast %28 : vector<1x96xf32> to vector<16x96xf32>
    %30 = arith.addf %27, %29 : vector<16x96xf32>
    %31 = arith.truncf %30 : vector<16x96xf32> to vector<16x96xbf16>
    %c0_14 = arith.constant 0 : index
    %c0_15 = arith.constant 0 : index
    %32 = vector.load %arg7[%c0_14, %c0_15] : memref<16x96xbf16, #tpu.memory_space<vmem>>, vector<16x96xbf16>
    tpu.vector_store %arg7[%c0_14, %c0_15], %31 {strides = array<i32>} : memref<16x96xbf16, #tpu.memory_space<vmem>>, vector<16x96xbf16>,
    return
  }
  func.func @transform_0(%arg0: i32, %arg1: i32) -> (i32, i32) {
    %c0_i32 = arith.constant 0 : i32
    %c0_i32_0 = arith.constant 0 : i32
    return %arg0, %c0_i32 : i32, i32
  }
  func.func @transform_1(%arg0: i32, %arg1: i32) -> (i32, i32) {
    %c0_i32 = arith.constant 0 : i32
    %c0_i32_0 = arith.constant 0 : i32
    %c0_i32_1 = arith.constant 0 : i32
    return %c0_i32, %c0_i32_0 : i32, i32
  }
  func.func @transform_2(%arg0: i32, %arg1: i32) -> (i32, i32) {
    %c0_i32 = arith.constant 0 : i32
    %c0_i32_0 = arith.constant 0 : i32
    %c0_i32_1 = arith.constant 0 : i32
    return %c0_i32, %c0_i32_0 : i32, i32
  }
  func.func @transform_3(%arg0: i32, %arg1: i32) -> (i32, i32) {
    %c0_i32 = arith.constant 0 : i32
    %c0_i32_0 = arith.constant 0 : i32
    return %c0_i32, %arg1 : i32, i32
  }
  func.func @transform_4(%arg0: i32, %arg1: i32) -> (i32, i32) {
    %c0_i32 = arith.constant 0 : i32
    %c0_i32_0 = arith.constant 0 : i32
    return %c0_i32, %arg1 : i32, i32
  }
  func.func @transform_5(%arg0: i32, %arg1: i32) -> (i32, i32) {
    %c0_i32 = arith.constant 0 : i32
    return %arg0, %arg1 : i32, i32
  }
}

module attributes {stable_mosaic.version = 11 : i64} {
  func.func @_flash_attn_kernel(%arg0: i32, %arg1: i32, %arg2: i32, %arg3: i32, %arg4: memref<1x8x1x2x16xbf16, #tpu.memory_space<vmem>>, %arg5: memref<1x8x1x2x16xbf16, #tpu.memory_space<vmem>>, %arg6: memref<1x8x1x2x16xbf16, #tpu.memory_space<vmem>>, %arg7: memref<1x8x2x16xbf16, #tpu.memory_space<vmem>>, %arg8: memref<2x8x1xf32, #tpu.memory_space<vmem>>, %arg9: memref<2x8x1xf32, #tpu.memory_space<vmem>>, %arg10: memref<2x8x16xf32, #tpu.memory_space<vmem>>) attributes {dimension_semantics = [#tpu.dimension_semantics<parallel>, #tpu.dimension_semantics<parallel>, #tpu.dimension_semantics<parallel>, #tpu.dimension_semantics<arbitrary>], iteration_bounds = array<i64: 2, 1, 1, 1>, scalar_prefetch = 0 : i64, scratch_operands = 3 : i64, tpu.core_type = #tpu.core_type<tc>, window_params = [{transform_indices = @transform_0, window_bounds = array<i64: 1, 8, 1, 2, 16>}, {transform_indices = @transform_1, window_bounds = array<i64: 1, 8, 1, 2, 16>}, {transform_indices = @transform_2, window_bounds = array<i64: 1, 8, 1, 2, 16>}, {transform_indices = @transform_3, window_bounds = array<i64: 1, 8, 2, 16>}]} {
    %c0_i32 = arith.constant 0 : i32
    %0 = arith.cmpi eq, %arg3, %c0_i32 : i32
    %1 = arith.extui %0 : i1 to i32
    %c0_i32_0 = arith.constant 0 : i32
    %2 = arith.cmpi ne, %1, %c0_i32_0 : i32
    scf.if %2 {
      %cst = arith.constant 0xFF800000 : f32
      %12 = vector.broadcast %cst : f32 to vector<2x8x1xf32>
      %c0 = arith.constant 0 : index
      %c0_5 = arith.constant 0 : index
      %c0_6 = arith.constant 0 : index
      %13 = vector.load %arg8[%c0, %c0_5, %c0_6] : memref<2x8x1xf32, #tpu.memory_space<vmem>>, vector<2x8x1xf32>
      tpu.vector_store %arg8[%c0, %c0_5, %c0_6], %12 {strides = array<i32>} : memref<2x8x1xf32, #tpu.memory_space<vmem>>, vector<2x8x1xf32>,
      %cst_7 = arith.constant 0.000000e+00 : f32
      %14 = vector.broadcast %cst_7 : f32 to vector<2x8x1xf32>
      %c0_8 = arith.constant 0 : index
      %c0_9 = arith.constant 0 : index
      %c0_10 = arith.constant 0 : index
      %15 = vector.load %arg9[%c0_8, %c0_9, %c0_10] : memref<2x8x1xf32, #tpu.memory_space<vmem>>, vector<2x8x1xf32>
      tpu.vector_store %arg9[%c0_8, %c0_9, %c0_10], %14 {strides = array<i32>} : memref<2x8x1xf32, #tpu.memory_space<vmem>>, vector<2x8x1xf32>,
      %cst_11 = arith.constant 0.000000e+00 : f32
      %16 = vector.broadcast %cst_11 : f32 to vector<2x8x16xf32>
      %c0_12 = arith.constant 0 : index
      %c0_13 = arith.constant 0 : index
      %c0_14 = arith.constant 0 : index
      %17 = vector.load %arg10[%c0_12, %c0_13, %c0_14] : memref<2x8x16xf32, #tpu.memory_space<vmem>>, vector<2x8x16xf32>
      tpu.vector_store %arg10[%c0_12, %c0_13, %c0_14], %16 {strides = array<i32>} : memref<2x8x16xf32, #tpu.memory_space<vmem>>, vector<2x8x16xf32>,
    } else {
    }
    %c8_i32 = arith.constant 8 : i32
    %3 = arith.muli %arg2, %c8_i32 : i32
    %c8_i32_1 = arith.constant 8 : i32
    %4 = arith.muli %arg3, %c8_i32_1 : i32
    %c7_i32 = arith.constant 7 : i32
    %5 = arith.addi %3, %c7_i32 : i32
    %6 = arith.cmpi sle, %4, %5 : i32
    %7 = arith.extui %6 : i1 to i32
    %c0_i32_2 = arith.constant 0 : i32
    %8 = arith.cmpi ne, %7, %c0_i32_2 : i32
    scf.if %8 {
      %c0 = arith.constant 0 : index
      %c0_5 = arith.constant 0 : index
      %c0_6 = arith.constant 0 : index
      %c0_7 = arith.constant 0 : index
      %c0_8 = arith.constant 0 : index
      %12 = vector.load %arg4[%c0, %c0_5, %c0_6, %c0_7, %c0_8] : memref<1x8x1x2x16xbf16, #tpu.memory_space<vmem>>, vector<1x8x1x2x16xbf16>
      %13 = vector.shape_cast %12 : vector<1x8x1x2x16xbf16> to vector<8x2x16xbf16>
      %14 = tpu.transpose %13, [1, 0, 2] : vector<8x2x16xbf16> -> vector<2x8x16xbf16>
      %c0_9 = arith.constant 0 : index
      %c0_10 = arith.constant 0 : index
      %c0_11 = arith.constant 0 : index
      %c0_12 = arith.constant 0 : index
      %c0_13 = arith.constant 0 : index
      %15 = vector.load %arg5[%c0_9, %c0_10, %c0_11, %c0_12, %c0_13] : memref<1x8x1x2x16xbf16, #tpu.memory_space<vmem>>, vector<1x8x1x2x16xbf16>
      %16 = vector.shape_cast %15 : vector<1x8x1x2x16xbf16> to vector<8x2x16xbf16>
      %17 = tpu.transpose %16, [1, 0, 2] : vector<8x2x16xbf16> -> vector<2x8x16xbf16>
      %c0_14 = arith.constant 0 : index
      %c0_15 = arith.constant 0 : index
      %c0_16 = arith.constant 0 : index
      %c0_17 = arith.constant 0 : index
      %c0_18 = arith.constant 0 : index
      %18 = vector.load %arg6[%c0_14, %c0_15, %c0_16, %c0_17, %c0_18] : memref<1x8x1x2x16xbf16, #tpu.memory_space<vmem>>, vector<1x8x1x2x16xbf16>
      %19 = vector.shape_cast %18 : vector<1x8x1x2x16xbf16> to vector<8x2x16xbf16>
      %20 = tpu.transpose %19, [1, 0, 2] : vector<8x2x16xbf16> -> vector<2x8x16xbf16>
      "tpu.trace_start"() <{level = 10 : i32, message = "hqd,hkd->hqk"}> : () -> ()
      %cst = arith.constant dense<0.000000e+00> : vector<2x8x8xf32>
      %21 = tpu.matmul %14, %17, %cst {dimension_numbers = #tpu.dot_dimension_numbers<[2], [2], [1], [1], [0, 0, 0, 1, 1, 1], [0], [0]>} : vector<2x8x16xbf16>, vector<2x8x16xbf16>, vector<2x8x8xf32> -> vector<2x8x8xf32>
      "tpu.trace_stop"() : () -> ()
      %cst_19 = arith.constant 2.500000e-01 : f32
      %22 = vector.broadcast %cst_19 : f32 to vector<2x8x8xf32>
      %23 = arith.mulf %21, %22 : vector<2x8x8xf32>
      %24 = tpu.iota {dimensions = array<i32: 1>} : vector<1x8x8xi32>
      %25 = vector.broadcast %3 : i32 to vector<1x8x8xi32>
      %26 = arith.addi %25, %24 : vector<1x8x8xi32>
      %27 = tpu.iota {dimensions = array<i32: 2>} : vector<1x8x8xi32>
      %28 = vector.broadcast %4 : i32 to vector<1x8x8xi32>
      %29 = arith.addi %28, %27 : vector<1x8x8xi32>
      %30 = arith.cmpi sge, %26, %29 : vector<1x8x8xi32>
      %cst_20 = arith.constant -1.000000e+04 : f32
      %31 = vector.shape_cast %30 : vector<1x8x8xi1> to vector<1x8x8xi1>
      %32 = vector.broadcast %31 : vector<1x8x8xi1> to vector<2x8x8xi1>
      %33 = vector.broadcast %cst_20 : f32 to vector<2x8x8xf32>
      %34 = arith.select %32, %23, %33 : vector<2x8x8xi1>, vector<2x8x8xf32>
      %c0_21 = arith.constant 0 : index
      %c0_22 = arith.constant 0 : index
      %c0_23 = arith.constant 0 : index
      %35 = vector.load %arg8[%c0_21, %c0_22, %c0_23] : memref<2x8x1xf32, #tpu.memory_space<vmem>>, vector<2x8x1xf32>
      %cst_24 = arith.constant dense<0xFF800000> : vector<2x8xf32>
      %36 = vector.multi_reduction <maximumf>, %34, %cst_24 [2] : vector<2x8x8xf32> to vector<2x8xf32>
      %37 = vector.shape_cast %36 : vector<2x8xf32> to vector<2x8x1xf32>
      %38 = arith.maximumf %35, %37 : vector<2x8x1xf32>
      %39 = arith.subf %35, %38 : vector<2x8x1xf32>
      %40 = math.exp %39 : vector<2x8x1xf32>
      %41 = vector.broadcast %38 : vector<2x8x1xf32> to vector<2x8x8xf32>
      %42 = arith.subf %34, %41 : vector<2x8x8xf32>
      %43 = math.exp %42 : vector<2x8x8xf32>
      %c0_25 = arith.constant 0 : index
      %c0_26 = arith.constant 0 : index
      %c0_27 = arith.constant 0 : index
      %44 = vector.load %arg9[%c0_25, %c0_26, %c0_27] : memref<2x8x1xf32, #tpu.memory_space<vmem>>, vector<2x8x1xf32>
      %45 = arith.mulf %40, %44 : vector<2x8x1xf32>
      %cst_28 = arith.constant dense<0.000000e+00> : vector<2x8xf32>
      %46 = vector.multi_reduction <add>, %43, %cst_28 [2] : vector<2x8x8xf32> to vector<2x8xf32>
      %47 = vector.shape_cast %46 : vector<2x8xf32> to vector<2x8x1xf32>
      %48 = arith.addf %45, %47 : vector<2x8x1xf32>
      %c0_29 = arith.constant 0 : index
      %c0_30 = arith.constant 0 : index
      %c0_31 = arith.constant 0 : index
      %49 = vector.load %arg9[%c0_29, %c0_30, %c0_31] : memref<2x8x1xf32, #tpu.memory_space<vmem>>, vector<2x8x1xf32>
      tpu.vector_store %arg9[%c0_29, %c0_30, %c0_31], %48 {strides = array<i32>} : memref<2x8x1xf32, #tpu.memory_space<vmem>>, vector<2x8x1xf32>,
      %c0_32 = arith.constant 0 : index
      %c0_33 = arith.constant 0 : index
      %c0_34 = arith.constant 0 : index
      %50 = vector.load %arg10[%c0_32, %c0_33, %c0_34] : memref<2x8x16xf32, #tpu.memory_space<vmem>>, vector<2x8x16xf32>
      %51 = vector.broadcast %40 : vector<2x8x1xf32> to vector<2x8x16xf32>
      %52 = arith.mulf %51, %50 : vector<2x8x16xf32>
      %53 = arith.truncf %43 : vector<2x8x8xf32> to vector<2x8x8xbf16>
      "tpu.trace_start"() <{level = 10 : i32, message = "hqk,hkd->hqd"}> : () -> ()
      %cst_35 = arith.constant dense<0.000000e+00> : vector<2x8x16xf32>
      %54 = tpu.matmul %53, %20, %cst_35 {dimension_numbers = #tpu.dot_dimension_numbers<[2], [1], [1], [2], [0, 0, 0, 1, 1, 2], [0], [0]>} : vector<2x8x8xbf16>, vector<2x8x16xbf16>, vector<2x8x16xf32> -> vector<2x8x16xf32>
      "tpu.trace_stop"() : () -> ()
      %55 = arith.addf %52, %54 : vector<2x8x16xf32>
      %c0_36 = arith.constant 0 : index
      %c0_37 = arith.constant 0 : index
      %c0_38 = arith.constant 0 : index
      %56 = vector.load %arg10[%c0_36, %c0_37, %c0_38] : memref<2x8x16xf32, #tpu.memory_space<vmem>>, vector<2x8x16xf32>
      tpu.vector_store %arg10[%c0_36, %c0_37, %c0_38], %55 {strides = array<i32>} : memref<2x8x16xf32, #tpu.memory_space<vmem>>, vector<2x8x16xf32>,
      %c0_39 = arith.constant 0 : index
      %c0_40 = arith.constant 0 : index
      %c0_41 = arith.constant 0 : index
      %57 = vector.load %arg8[%c0_39, %c0_40, %c0_41] : memref<2x8x1xf32, #tpu.memory_space<vmem>>, vector<2x8x1xf32>
      tpu.vector_store %arg8[%c0_39, %c0_40, %c0_41], %38 {strides = array<i32>} : memref<2x8x1xf32, #tpu.memory_space<vmem>>, vector<2x8x1xf32>,
    } else {
    }
    %c0_i32_3 = arith.constant 0 : i32
    %9 = arith.cmpi eq, %arg3, %c0_i32_3 : i32
    %10 = arith.extui %9 : i1 to i32
    %c0_i32_4 = arith.constant 0 : i32
    %11 = arith.cmpi ne, %10, %c0_i32_4 : i32
    scf.if %11 {
      %c0 = arith.constant 0 : index
      %c0_5 = arith.constant 0 : index
      %c0_6 = arith.constant 0 : index
      %12 = vector.load %arg10[%c0, %c0_5, %c0_6] : memref<2x8x16xf32, #tpu.memory_space<vmem>>, vector<2x8x16xf32>
      %c0_7 = arith.constant 0 : index
      %c0_8 = arith.constant 0 : index
      %c0_9 = arith.constant 0 : index
      %13 = vector.load %arg9[%c0_7, %c0_8, %c0_9] : memref<2x8x1xf32, #tpu.memory_space<vmem>>, vector<2x8x1xf32>
      %14 = tpu.reciprocal %13 {approx = true} : vector<2x8x1xf32> -> vector<2x8x1xf32>
      %15 = vector.broadcast %14 : vector<2x8x1xf32> to vector<2x8x16xf32>
      %16 = arith.mulf %12, %15 : vector<2x8x16xf32>
      %17 = tpu.transpose %16, [1, 0, 2] : vector<2x8x16xf32> -> vector<8x2x16xf32>
      %18 = arith.truncf %17 : vector<8x2x16xf32> to vector<8x2x16xbf16>
      %c0_10 = arith.constant 0 : index
      %c0_11 = arith.constant 0 : index
      %c0_12 = arith.constant 0 : index
      %c0_13 = arith.constant 0 : index
      %19 = vector.load %arg7[%c0_10, %c0_11, %c0_12, %c0_13] : memref<1x8x2x16xbf16, #tpu.memory_space<vmem>>, vector<1x8x2x16xbf16>
      %20 = vector.shape_cast %19 : vector<1x8x2x16xbf16> to vector<8x2x16xbf16>
      %21 = vector.shape_cast %18 : vector<8x2x16xbf16> to vector<1x8x2x16xbf16>
      tpu.vector_store %arg7[%c0_10, %c0_11, %c0_12, %c0_13], %21 {strides = array<i32>} : memref<1x8x2x16xbf16, #tpu.memory_space<vmem>>, vector<1x8x2x16xbf16>,
    } else {
    }
    return
  }
  func.func @transform_0(%arg0: i32, %arg1: i32, %arg2: i32, %arg3: i32) -> (i32, i32, i32, i32, i32) {
    %c0_i32 = arith.constant 0 : i32
    %c0_i32_0 = arith.constant 0 : i32
    %c0_i32_1 = arith.constant 0 : i32
    return %arg0, %arg2, %c0_i32, %arg1, %c0_i32_0 : i32, i32, i32, i32, i32
  }
  func.func @transform_1(%arg0: i32, %arg1: i32, %arg2: i32, %arg3: i32) -> (i32, i32, i32, i32, i32) {
    %c1_i32 = arith.constant 1 : i32
    %c0_i32 = arith.constant 0 : i32
    %c0_i32_0 = arith.constant 0 : i32
    return %arg0, %arg3, %c1_i32, %arg1, %c0_i32 : i32, i32, i32, i32, i32
  }
  func.func @transform_2(%arg0: i32, %arg1: i32, %arg2: i32, %arg3: i32) -> (i32, i32, i32, i32, i32) {
    %c2_i32 = arith.constant 2 : i32
    %c0_i32 = arith.constant 0 : i32
    %c0_i32_0 = arith.constant 0 : i32
    return %arg0, %arg3, %c2_i32, %arg1, %c0_i32 : i32, i32, i32, i32, i32
  }
  func.func @transform_3(%arg0: i32, %arg1: i32, %arg2: i32, %arg3: i32) -> (i32, i32, i32, i32) {
    %c0_i32 = arith.constant 0 : i32
    %c0_i32_0 = arith.constant 0 : i32
    return %arg0, %arg2, %arg1, %c0_i32 : i32, i32, i32, i32
  }
}

module attributes {stable_mosaic.version = 11 : i64} {
  func.func @_linear_residual_kernel(%arg0: i32, %arg1: i32, %arg2: i32, %arg3: memref<16x32xbf16, #tpu.memory_space<vmem>>, %arg4: memref<32x32xbf16, #tpu.memory_space<vmem>>, %arg5: memref<1x32xf32, #tpu.memory_space<vmem>>, %arg6: memref<16x32xf32, #tpu.memory_space<vmem>>, %arg7: memref<16x32xf32, #tpu.memory_space<vmem>>, %arg8: memref<16x32xf32, #tpu.memory_space<vmem>>) attributes {dimension_semantics = [#tpu.dimension_semantics<parallel>, #tpu.dimension_semantics<parallel>, #tpu.dimension_semantics<arbitrary>], iteration_bounds = array<i64: 1, 1, 1>, scalar_prefetch = 0 : i64, scratch_operands = 1 : i64, tpu.core_type = #tpu.core_type<tc>, window_params = [{transform_indices = @transform_0, window_bounds = array<i64: 16, 32>}, {transform_indices = @transform_1, window_bounds = array<i64: 32, 32>}, {transform_indices = @transform_2, window_bounds = array<i64: 1, 32>}, {transform_indices = @transform_3, window_bounds = array<i64: 16, 32>}, {transform_indices = @transform_4, window_bounds = array<i64: 16, 32>}]} {
    %c0_i32 = arith.constant 0 : i32
    %0 = arith.cmpi eq, %arg2, %c0_i32 : i32
    %1 = arith.extui %0 : i1 to i32
    %c0_i32_0 = arith.constant 0 : i32
    %2 = arith.cmpi ne, %1, %c0_i32_0 : i32
    scf.if %2 {
      %cst_10 = arith.constant 0.000000e+00 : f32
      %12 = vector.broadcast %cst_10 : f32 to vector<16x32xf32>
      %c0_11 = arith.constant 0 : index
      %c0_12 = arith.constant 0 : index
      %13 = vector.load %arg8[%c0_11, %c0_12] : memref<16x32xf32, #tpu.memory_space<vmem>>, vector<16x32xf32>
      tpu.vector_store %arg8[%c0_11, %c0_12], %12 {strides = array<i32>} : memref<16x32xf32, #tpu.memory_space<vmem>>, vector<16x32xf32>,
    } else {
    }
    %c0 = arith.constant 0 : index
    %c0_1 = arith.constant 0 : index
    %3 = vector.load %arg8[%c0, %c0_1] : memref<16x32xf32, #tpu.memory_space<vmem>>, vector<16x32xf32>
    %c0_2 = arith.constant 0 : index
    %c0_3 = arith.constant 0 : index
    %4 = vector.load %arg3[%c0_2, %c0_3] : memref<16x32xbf16, #tpu.memory_space<vmem>>, vector<16x32xbf16>
    %c0_4 = arith.constant 0 : index
    %c0_5 = arith.constant 0 : index
    %5 = vector.load %arg4[%c0_4, %c0_5] : memref<32x32xbf16, #tpu.memory_space<vmem>>, vector<32x32xbf16>
    %cst = arith.constant dense<0.000000e+00> : vector<16x32xf32>
    %6 = tpu.matmul %4, %5, %cst {dimension_numbers = #tpu.dot_dimension_numbers<[1], [0], [0], [1], [0, 0, 1, 1], [], []>} : vector<16x32xbf16>, vector<32x32xbf16>, vector<16x32xf32> -> vector<16x32xf32>
    %7 = arith.addf %3, %6 : vector<16x32xf32>
    %c0_6 = arith.constant 0 : index
    %c0_7 = arith.constant 0 : index
    %8 = vector.load %arg8[%c0_6, %c0_7] : memref<16x32xf32, #tpu.memory_space<vmem>>, vector<16x32xf32>
    tpu.vector_store %arg8[%c0_6, %c0_7], %7 {strides = array<i32>} : memref<16x32xf32, #tpu.memory_space<vmem>>, vector<16x32xf32>,
    %c0_i32_8 = arith.constant 0 : i32
    %9 = arith.cmpi eq, %arg2, %c0_i32_8 : i32
    %10 = arith.extui %9 : i1 to i32
    %c0_i32_9 = arith.constant 0 : i32
    %11 = arith.cmpi ne, %10, %c0_i32_9 : i32
    scf.if %11 {
      %c0_10 = arith.constant 0 : index
      %c0_11 = arith.constant 0 : index
      %12 = vector.load %arg8[%c0_10, %c0_11] : memref<16x32xf32, #tpu.memory_space<vmem>>, vector<16x32xf32>
      %c0_12 = arith.constant 0 : index
      %c0_13 = arith.constant 0 : index
      %13 = vector.load %arg5[%c0_12, %c0_13] : memref<1x32xf32, #tpu.memory_space<vmem>>, vector<1x32xf32>
      %14 = vector.broadcast %13 : vector<1x32xf32> to vector<16x32xf32>
      %15 = arith.addf %12, %14 : vector<16x32xf32>
      %c0_14 = arith.constant 0 : index
      %c0_15 = arith.constant 0 : index
      %16 = vector.load %arg6[%c0_14, %c0_15] : memref<16x32xf32, #tpu.memory_space<vmem>>, vector<16x32xf32>
      %17 = arith.addf %15, %16 : vector<16x32xf32>
      %c0_16 = arith.constant 0 : index
      %c0_17 = arith.constant 0 : index
      %18 = vector.load %arg7[%c0_16, %c0_17] : memref<16x32xf32, #tpu.memory_space<vmem>>, vector<16x32xf32>
      tpu.vector_store %arg7[%c0_16, %c0_17], %17 {strides = array<i32>} : memref<16x32xf32, #tpu.memory_space<vmem>>, vector<16x32xf32>,
    } else {
    }
    return
  }
  func.func @transform_0(%arg0: i32, %arg1: i32, %arg2: i32) -> (i32, i32) {
    %c0_i32 = arith.constant 0 : i32
    return %arg0, %arg2 : i32, i32
  }
  func.func @transform_1(%arg0: i32, %arg1: i32, %arg2: i32) -> (i32, i32) {
    %c0_i32 = arith.constant 0 : i32
    return %arg2, %arg1 : i32, i32
  }
  func.func @transform_2(%arg0: i32, %arg1: i32, %arg2: i32) -> (i32, i32) {
    %c0_i32 = arith.constant 0 : i32
    %c0_i32_0 = arith.constant 0 : i32
    return %c0_i32, %arg1 : i32, i32
  }
  func.func @transform_3(%arg0: i32, %arg1: i32, %arg2: i32) -> (i32, i32) {
    %c0_i32 = arith.constant 0 : i32
    return %arg0, %arg1 : i32, i32
  }
  func.func @transform_4(%arg0: i32, %arg1: i32, %arg2: i32) -> (i32, i32) {
    %c0_i32 = arith.constant 0 : i32
    return %arg0, %arg1 : i32, i32
  }
}

module attributes {stable_mosaic.version = 11 : i64} {
  func.func @_ln_linear_kernel(%arg0: i32, %arg1: i32, %arg2: memref<16x32xf32, #tpu.memory_space<vmem>>, %arg3: memref<1x32xf32, #tpu.memory_space<vmem>>, %arg4: memref<1x32xf32, #tpu.memory_space<vmem>>, %arg5: memref<32x128xbf16, #tpu.memory_space<vmem>>, %arg6: memref<1x128xf32, #tpu.memory_space<vmem>>, %arg7: memref<16x128xbf16, #tpu.memory_space<vmem>>) attributes {dimension_semantics = [#tpu.dimension_semantics<parallel>, #tpu.dimension_semantics<parallel>], iteration_bounds = array<i64: 1, 1>, scalar_prefetch = 0 : i64, scratch_operands = 0 : i64, tpu.core_type = #tpu.core_type<tc>, window_params = [{transform_indices = @transform_0, window_bounds = array<i64: 16, 32>}, {pipeline_mode = #tpu.pipeline_mode<synchronous>, transform_indices = @transform_1, window_bounds = array<i64: 1, 32>}, {pipeline_mode = #tpu.pipeline_mode<synchronous>, transform_indices = @transform_2, window_bounds = array<i64: 1, 32>}, {transform_indices = @transform_3, window_bounds = array<i64: 32, 128>}, {transform_indices = @transform_4, window_bounds = array<i64: 1, 128>}, {transform_indices = @transform_5, window_bounds = array<i64: 16, 128>}]} {
    %c0 = arith.constant 0 : index
    %c0_0 = arith.constant 0 : index
    %0 = vector.load %arg2[%c0, %c0_0] : memref<16x32xf32, #tpu.memory_space<vmem>>, vector<16x32xf32>
    %cst = arith.constant dense<0.000000e+00> : vector<16xf32>
    %1 = vector.multi_reduction <add>, %0, %cst [1] : vector<16x32xf32> to vector<16xf32>
    %2 = vector.shape_cast %1 : vector<16xf32> to vector<16x1xf32>
    %cst_1 = arith.constant 3.200000e+01 : f32
    %3 = vector.broadcast %cst_1 : f32 to vector<16x1xf32>
    %4 = arith.divf %2, %3 : vector<16x1xf32>
    %5 = vector.broadcast %4 : vector<16x1xf32> to vector<16x32xf32>
    %6 = arith.subf %0, %5 : vector<16x32xf32>
    %7 = arith.mulf %6, %6 : vector<16x32xf32>
    %cst_2 = arith.constant dense<0.000000e+00> : vector<16xf32>
    %8 = vector.multi_reduction <add>, %7, %cst_2 [1] : vector<16x32xf32> to vector<16xf32>
    %9 = vector.shape_cast %8 : vector<16xf32> to vector<16x1xf32>
    %cst_3 = arith.constant 3.200000e+01 : f32
    %10 = vector.broadcast %cst_3 : f32 to vector<16x1xf32>
    %11 = arith.divf %9, %10 : vector<16x1xf32>
    %12 = vector.broadcast %4 : vector<16x1xf32> to vector<16x32xf32>
    %13 = arith.subf %0, %12 : vector<16x32xf32>
    %cst_4 = arith.constant 9.99999974E-6 : f32
    %14 = vector.broadcast %cst_4 : f32 to vector<16x1xf32>
    %15 = arith.addf %11, %14 : vector<16x1xf32>
    %16 = math.rsqrt %15 : vector<16x1xf32>
    %17 = vector.broadcast %16 : vector<16x1xf32> to vector<16x32xf32>
    %18 = arith.mulf %13, %17 : vector<16x32xf32>
    %c0_5 = arith.constant 0 : index
    %c0_6 = arith.constant 0 : index
    %19 = vector.load %arg3[%c0_5, %c0_6] : memref<1x32xf32, #tpu.memory_space<vmem>>, vector<1x32xf32>
    %20 = vector.broadcast %19 : vector<1x32xf32> to vector<16x32xf32>
    %21 = arith.mulf %18, %20 : vector<16x32xf32>
    %c0_7 = arith.constant 0 : index
    %c0_8 = arith.constant 0 : index
    %22 = vector.load %arg4[%c0_7, %c0_8] : memref<1x32xf32, #tpu.memory_space<vmem>>, vector<1x32xf32>
    %23 = vector.broadcast %22 : vector<1x32xf32> to vector<16x32xf32>
    %24 = arith.addf %21, %23 : vector<16x32xf32>
    %25 = arith.truncf %24 : vector<16x32xf32> to vector<16x32xbf16>
    %c0_9 = arith.constant 0 : index
    %c0_10 = arith.constant 0 : index
    %26 = vector.load %arg5[%c0_9, %c0_10] : memref<32x128xbf16, #tpu.memory_space<vmem>>, vector<32x128xbf16>
    %cst_11 = arith.constant dense<0.000000e+00> : vector<16x128xf32>
    %27 = tpu.matmul %25, %26, %cst_11 {dimension_numbers = #tpu.dot_dimension_numbers<[1], [0], [0], [1], [0, 0, 1, 1], [], []>} : vector<16x32xbf16>, vector<32x128xbf16>, vector<16x128xf32> -> vector<16x128xf32>
    %c0_12 = arith.constant 0 : index
    %c0_13 = arith.constant 0 : index
    %28 = vector.load %arg6[%c0_12, %c0_13] : memref<1x128xf32, #tpu.memory_space<vmem>>, vector<1x128xf32>
    %29 = vector.broadcast %28 : vector<1x128xf32> to vector<16x128xf32>
    %30 = arith.addf %27, %29 : vector<16x128xf32>
    %cst_14 = arith.constant 5.000000e-01 : f32
    %31 = vector.broadcast %cst_14 : f32 to vector<16x128xf32>
    %32 = arith.mulf %31, %30 : vector<16x128xf32>
    %cst_15 = arith.constant 0.797884583 : f32
    %33 = vector.broadcast %cst_15 : f32 to vector<16x128xf32>
    %34 = arith.mulf %33, %30 : vector<16x128xf32>
    %cst_16 = arith.constant 4.471500e-02 : f32
    %35 = vector.broadcast %cst_16 : f32 to vector<16x128xf32>
    %36 = arith.mulf %35, %30 : vector<16x128xf32>
    %37 = arith.mulf %36, %30 : vector<16x128xf32>
    %cst_17 = arith.constant 1.000000e+00 : f32
    %38 = vector.broadcast %cst_17 : f32 to vector<16x128xf32>
    %39 = arith.addf %38, %37 : vector<16x128xf32>
    %40 = arith.mulf %34, %39 : vector<16x128xf32>
    %41 = math.tanh %40 : vector<16x128xf32>
    %cst_18 = arith.constant 1.000000e+00 : f32
    %42 = vector.broadcast %cst_18 : f32 to vector<16x128xf32>
    %43 = arith.addf %42, %41 : vector<16x128xf32>
    %44 = arith.mulf %32, %43 : vector<16x128xf32>
    %45 = arith.truncf %44 : vector<16x128xf32> to vector<16x128xbf16>
    %c0_19 = arith.constant 0 : index
    %c0_20 = arith.constant 0 : index
    %46 = vector.load %arg7[%c0_19, %c0_20] : memref<16x128xbf16, #tpu.memory_space<vmem>>, vector<16x128xbf16>
    tpu.vector_store %arg7[%c0_19, %c0_20], %45 {strides = array<i32>} : memref<16x128xbf16, #tpu.memory_space<vmem>>, vector<16x128xbf16>,
    return
  }
  func.func @transform_0(%arg0: i32, %arg1: i32) -> (i32, i32) {
    %c0_i32 = arith.constant 0 : i32
    %c0_i32_0 = arith.constant 0 : i32
    return %arg0, %c0_i32 : i32, i32
  }
  func.func @transform_1(%arg0: i32, %arg1: i32) -> (i32, i32) {
    %c0_i32 = arith.constant 0 : i32
    %c0_i32_0 = arith.constant 0 : i32
    %c0_i32_1 = arith.constant 0 : i32
    return %c0_i32, %c0_i32_0 : i32, i32
  }
  func.func @transform_2(%arg0: i32, %arg1: i32) -> (i32, i32) {
    %c0_i32 = arith.constant 0 : i32
    %c0_i32_0 = arith.constant 0 : i32
    %c0_i32_1 = arith.constant 0 : i32
    return %c0_i32, %c0_i32_0 : i32, i32
  }
  func.func @transform_3(%arg0: i32, %arg1: i32) -> (i32, i32) {
    %c0_i32 = arith.constant 0 : i32
    %c0_i32_0 = arith.constant 0 : i32
    return %c0_i32, %arg1 : i32, i32
  }
  func.func @transform_4(%arg0: i32, %arg1: i32) -> (i32, i32) {
    %c0_i32 = arith.constant 0 : i32
    %c0_i32_0 = arith.constant 0 : i32
    return %c0_i32, %arg1 : i32, i32
  }
  func.func @transform_5(%arg0: i32, %arg1: i32) -> (i32, i32) {
    %c0_i32 = arith.constant 0 : i32
    return %arg0, %arg1 : i32, i32
  }
}

module attributes {stable_mosaic.version = 11 : i64} {
  func.func @_ln_logits_kernel(%arg0: i32, %arg1: i32, %arg2: memref<16x32xf32, #tpu.memory_space<vmem>>, %arg3: memref<1x32xf32, #tpu.memory_space<vmem>>, %arg4: memref<1x32xf32, #tpu.memory_space<vmem>>, %arg5: memref<64x32xbf16, #tpu.memory_space<vmem>>, %arg6: memref<16x64xf32, #tpu.memory_space<vmem>>) attributes {dimension_semantics = [#tpu.dimension_semantics<parallel>, #tpu.dimension_semantics<parallel>], iteration_bounds = array<i64: 1, 1>, scalar_prefetch = 0 : i64, scratch_operands = 0 : i64, tpu.core_type = #tpu.core_type<tc>, window_params = [{transform_indices = @transform_0, window_bounds = array<i64: 16, 32>}, {pipeline_mode = #tpu.pipeline_mode<synchronous>, transform_indices = @transform_1, window_bounds = array<i64: 1, 32>}, {pipeline_mode = #tpu.pipeline_mode<synchronous>, transform_indices = @transform_2, window_bounds = array<i64: 1, 32>}, {transform_indices = @transform_3, window_bounds = array<i64: 64, 32>}, {transform_indices = @transform_4, window_bounds = array<i64: 16, 64>}]} {
    %c0 = arith.constant 0 : index
    %c0_0 = arith.constant 0 : index
    %0 = vector.load %arg2[%c0, %c0_0] : memref<16x32xf32, #tpu.memory_space<vmem>>, vector<16x32xf32>
    %cst = arith.constant dense<0.000000e+00> : vector<16xf32>
    %1 = vector.multi_reduction <add>, %0, %cst [1] : vector<16x32xf32> to vector<16xf32>
    %2 = vector.shape_cast %1 : vector<16xf32> to vector<16x1xf32>
    %cst_1 = arith.constant 3.200000e+01 : f32
    %3 = vector.broadcast %cst_1 : f32 to vector<16x1xf32>
    %4 = arith.divf %2, %3 : vector<16x1xf32>
    %5 = vector.broadcast %4 : vector<16x1xf32> to vector<16x32xf32>
    %6 = arith.subf %0, %5 : vector<16x32xf32>
    %7 = arith.mulf %6, %6 : vector<16x32xf32>
    %cst_2 = arith.constant dense<0.000000e+00> : vector<16xf32>
    %8 = vector.multi_reduction <add>, %7, %cst_2 [1] : vector<16x32xf32> to vector<16xf32>
    %9 = vector.shape_cast %8 : vector<16xf32> to vector<16x1xf32>
    %cst_3 = arith.constant 3.200000e+01 : f32
    %10 = vector.broadcast %cst_3 : f32 to vector<16x1xf32>
    %11 = arith.divf %9, %10 : vector<16x1xf32>
    %12 = vector.broadcast %4 : vector<16x1xf32> to vector<16x32xf32>
    %13 = arith.subf %0, %12 : vector<16x32xf32>
    %cst_4 = arith.constant 9.99999974E-6 : f32
    %14 = vector.broadcast %cst_4 : f32 to vector<16x1xf32>
    %15 = arith.addf %11, %14 : vector<16x1xf32>
    %16 = math.rsqrt %15 : vector<16x1xf32>
    %17 = vector.broadcast %16 : vector<16x1xf32> to vector<16x32xf32>
    %18 = arith.mulf %13, %17 : vector<16x32xf32>
    %c0_5 = arith.constant 0 : index
    %c0_6 = arith.constant 0 : index
    %19 = vector.load %arg3[%c0_5, %c0_6] : memref<1x32xf32, #tpu.memory_space<vmem>>, vector<1x32xf32>
    %20 = vector.broadcast %19 : vector<1x32xf32> to vector<16x32xf32>
    %21 = arith.mulf %18, %20 : vector<16x32xf32>
    %c0_7 = arith.constant 0 : index
    %c0_8 = arith.constant 0 : index
    %22 = vector.load %arg4[%c0_7, %c0_8] : memref<1x32xf32, #tpu.memory_space<vmem>>, vector<1x32xf32>
    %23 = vector.broadcast %22 : vector<1x32xf32> to vector<16x32xf32>
    %24 = arith.addf %21, %23 : vector<16x32xf32>
    %25 = arith.truncf %24 : vector<16x32xf32> to vector<16x32xbf16>
    %c0_9 = arith.constant 0 : index
    %c0_10 = arith.constant 0 : index
    %26 = vector.load %arg5[%c0_9, %c0_10] : memref<64x32xbf16, #tpu.memory_space<vmem>>, vector<64x32xbf16>
    %cst_11 = arith.constant dense<0.000000e+00> : vector<16x64xf32>
    %27 = tpu.matmul %25, %26, %cst_11 {dimension_numbers = #tpu.dot_dimension_numbers<[1], [1], [0], [0], [0, 0, 1, 0], [], []>} : vector<16x32xbf16>, vector<64x32xbf16>, vector<16x64xf32> -> vector<16x64xf32>
    %c0_12 = arith.constant 0 : index
    %c0_13 = arith.constant 0 : index
    %28 = vector.load %arg6[%c0_12, %c0_13] : memref<16x64xf32, #tpu.memory_space<vmem>>, vector<16x64xf32>
    tpu.vector_store %arg6[%c0_12, %c0_13], %27 {strides = array<i32>} : memref<16x64xf32, #tpu.memory_space<vmem>>, vector<16x64xf32>,
    return
  }
  func.func @transform_0(%arg0: i32, %arg1: i32) -> (i32, i32) {
    %c0_i32 = arith.constant 0 : i32
    %c0_i32_0 = arith.constant 0 : i32
    return %arg0, %c0_i32 : i32, i32
  }
  func.func @transform_1(%arg0: i32, %arg1: i32) -> (i32, i32) {
    %c0_i32 = arith.constant 0 : i32
    %c0_i32_0 = arith.constant 0 : i32
    %c0_i32_1 = arith.constant 0 : i32
    return %c0_i32, %c0_i32_0 : i32, i32
  }
  func.func @transform_2(%arg0: i32, %arg1: i32) -> (i32, i32) {
    %c0_i32 = arith.constant 0 : i32
    %c0_i32_0 = arith.constant 0 : i32
    %c0_i32_1 = arith.constant 0 : i32
    return %c0_i32, %c0_i32_0 : i32, i32
  }
  func.func @transform_3(%arg0: i32, %arg1: i32) -> (i32, i32) {
    %c0_i32 = arith.constant 0 : i32
    %c0_i32_0 = arith.constant 0 : i32
    return %arg1, %c0_i32 : i32, i32
  }
  func.func @transform_4(%arg0: i32, %arg1: i32) -> (i32, i32) {
    %c0_i32 = arith.constant 0 : i32
    return %arg0, %arg1 : i32, i32
  }
}

module attributes {stable_mosaic.version = 11 : i64} {
  func.func @_linear_residual_kernel(%arg0: i32, %arg1: i32, %arg2: i32, %arg3: memref<16x128xbf16, #tpu.memory_space<vmem>>, %arg4: memref<128x32xbf16, #tpu.memory_space<vmem>>, %arg5: memref<1x32xf32, #tpu.memory_space<vmem>>, %arg6: memref<16x32xf32, #tpu.memory_space<vmem>>, %arg7: memref<16x32xf32, #tpu.memory_space<vmem>>, %arg8: memref<16x32xf32, #tpu.memory_space<vmem>>) attributes {dimension_semantics = [#tpu.dimension_semantics<parallel>, #tpu.dimension_semantics<parallel>, #tpu.dimension_semantics<arbitrary>], iteration_bounds = array<i64: 1, 1, 1>, scalar_prefetch = 0 : i64, scratch_operands = 1 : i64, tpu.core_type = #tpu.core_type<tc>, window_params = [{transform_indices = @transform_0, window_bounds = array<i64: 16, 128>}, {transform_indices = @transform_1, window_bounds = array<i64: 128, 32>}, {transform_indices = @transform_2, window_bounds = array<i64: 1, 32>}, {transform_indices = @transform_3, window_bounds = array<i64: 16, 32>}, {transform_indices = @transform_4, window_bounds = array<i64: 16, 32>}]} {
    %c0_i32 = arith.constant 0 : i32
    %0 = arith.cmpi eq, %arg2, %c0_i32 : i32
    %1 = arith.extui %0 : i1 to i32
    %c0_i32_0 = arith.constant 0 : i32
    %2 = arith.cmpi ne, %1, %c0_i32_0 : i32
    scf.if %2 {
      %cst_10 = arith.constant 0.000000e+00 : f32
      %12 = vector.broadcast %cst_10 : f32 to vector<16x32xf32>
      %c0_11 = arith.constant 0 : index
      %c0_12 = arith.constant 0 : index
      %13 = vector.load %arg8[%c0_11, %c0_12] : memref<16x32xf32, #tpu.memory_space<vmem>>, vector<16x32xf32>
      tpu.vector_store %arg8[%c0_11, %c0_12], %12 {strides = array<i32>} : memref<16x32xf32, #tpu.memory_space<vmem>>, vector<16x32xf32>,
    } else {
    }
    %c0 = arith.constant 0 : index
    %c0_1 = arith.constant 0 : index
    %3 = vector.load %arg8[%c0, %c0_1] : memref<16x32xf32, #tpu.memory_space<vmem>>, vector<16x32xf32>
    %c0_2 = arith.constant 0 : index
    %c0_3 = arith.constant 0 : index
    %4 = vector.load %arg3[%c0_2, %c0_3] : memref<16x128xbf16, #tpu.memory_space<vmem>>, vector<16x128xbf16>
    %c0_4 = arith.constant 0 : index
    %c0_5 = arith.constant 0 : index
    %5 = vector.load %arg4[%c0_4, %c0_5] : memref<128x32xbf16, #tpu.memory_space<vmem>>, vector<128x32xbf16>
    %cst = arith.constant dense<0.000000e+00> : vector<16x32xf32>
    %6 = tpu.matmul %4, %5, %cst {dimension_numbers = #tpu.dot_dimension_numbers<[1], [0], [0], [1], [0, 0, 1, 1], [], []>} : vector<16x128xbf16>, vector<128x32xbf16>, vector<16x32xf32> -> vector<16x32xf32>
    %7 = arith.addf %3, %6 : vector<16x32xf32>
    %c0_6 = arith.constant 0 : index
    %c0_7 = arith.constant 0 : index
    %8 = vector.load %arg8[%c0_6, %c0_7] : memref<16x32xf32, #tpu.memory_space<vmem>>, vector<16x32xf32>
    tpu.vector_store %arg8[%c0_6, %c0_7], %7 {strides = array<i32>} : memref<16x32xf32, #tpu.memory_space<vmem>>, vector<16x32xf32>,
    %c0_i32_8 = arith.constant 0 : i32
    %9 = arith.cmpi eq, %arg2, %c0_i32_8 : i32
    %10 = arith.extui %9 : i1 to i32
    %c0_i32_9 = arith.constant 0 : i32
    %11 = arith.cmpi ne, %10, %c0_i32_9 : i32
    scf.if %11 {
      %c0_10 = arith.constant 0 : index
      %c0_11 = arith.constant 0 : index
      %12 = vector.load %arg8[%c0_10, %c0_11] : memref<16x32xf32, #tpu.memory_space<vmem>>, vector<16x32xf32>
      %c0_12 = arith.constant 0 : index
      %c0_13 = arith.constant 0 : index
      %13 = vector.load %arg5[%c0_12, %c0_13] : memref<1x32xf32, #tpu.memory_space<vmem>>, vector<1x32xf32>
      %14 = vector.broadcast %13 : vector<1x32xf32> to vector<16x32xf32>
      %15 = arith.addf %12, %14 : vector<16x32xf32>
      %c0_14 = arith.constant 0 : index
      %c0_15 = arith.constant 0 : index
      %16 = vector.load %arg6[%c0_14, %c0_15] : memref<16x32xf32, #tpu.memory_space<vmem>>, vector<16x32xf32>
      %17 = arith.addf %15, %16 : vector<16x32xf32>
      %c0_16 = arith.constant 0 : index
      %c0_17 = arith.constant 0 : index
      %18 = vector.load %arg7[%c0_16, %c0_17] : memref<16x32xf32, #tpu.memory_space<vmem>>, vector<16x32xf32>
      tpu.vector_store %arg7[%c0_16, %c0_17], %17 {strides = array<i32>} : memref<16x32xf32, #tpu.memory_space<vmem>>, vector<16x32xf32>,
    } else {
    }
    return
  }
  func.func @transform_0(%arg0: i32, %arg1: i32, %arg2: i32) -> (i32, i32) {
    %c0_i32 = arith.constant 0 : i32
    return %arg0, %arg2 : i32, i32
  }
  func.func @transform_1(%arg0: i32, %arg1: i32, %arg2: i32) -> (i32, i32) {
    %c0_i32 = arith.constant 0 : i32
    return %arg2, %arg1 : i32, i32
  }
  func.func @transform_2(%arg0: i32, %arg1: i32, %arg2: i32) -> (i32, i32) {
    %c0_i32 = arith.constant 0 : i32
    %c0_i32_0 = arith.constant 0 : i32
    return %c0_i32, %arg1 : i32, i32
  }
  func.func @transform_3(%arg0: i32, %arg1: i32, %arg2: i32) -> (i32, i32) {
    %c0_i32 = arith.constant 0 : i32
    return %arg0, %arg1 : i32, i32
  }
  func.func @transform_4(%arg0: i32, %arg1: i32, %arg2: i32) -> (i32, i32) {
    %c0_i32 = arith.constant 0 : i32
    return %arg0, %arg1 : i32, i32
  }
}

</mosaic_0001>

<llo_original>
// kernel: base_model_forward.13
$region0: #{base_model_forward.13}
  #allocation0 [shape = 'u32[]', space=smem, size = 0x4, offset = 0x4, fixed_abs, tag = 'smem constant byte address 0x4 - core index']
  #allocation1 [shape = 'u32[144,128]{1,0:T(1,128)}', space=vmem, size = 0x12000, scoped, tag = 'internal scratch']
  #allocation2 [shape = 'f32[16,32]{1,0:T(8,128)}', space=vmem, size = 0x2000, scoped, tag = 'scratch operand']
  %s0 = inlined_call_operand.hbm [shape: bf16[16,32], index: 0, kind: input, shape index: {}]
  %s1 = inlined_call_operand.hbm [shape: bf16[32,32], index: 1, kind: input, shape index: {}]
  %s2 = inlined_call_operand.hbm [shape: f32[1,32], index: 2, kind: input, shape index: {}]
  %s3 = inlined_call_operand.hbm [shape: f32[16,32], index: 3, kind: input, shape index: {}]
  %s4 = inlined_call_operand.hbm [shape: f32[16,32], index: 4, kind: output, shape index: {}]
  %s5 = sld [smem:[#allocation0]]
  $region50: #{base_model_forward.13} parent=0
    _
  %s7 = ssub.s32 1, %s5
  %s8 = scalar_select 0, %s7, %s5
  $region1: #{base_model_forward.13} parent=0
    #allocation3 [shape = 'u8[4096]{0}', space=vmem, size = 0x1000, scoped, tag = 'input window, operand 0, single buffered']
    #allocation4 [shape = 's32[1]{0}', space=sflag, size = 0x4, scoped, tag = 'scoped memory for base_model_forward.13']
    #allocation5 [shape = 's32[1]{0}', space=sflag, size = 0x4, scoped, tag = 'scoped memory for base_model_forward.13']
    #allocation6 [shape = 'u8[8192]{0}', space=vmem, size = 0x2000, scoped, tag = 'input window, operand 1, single buffered']
    #allocation7 [shape = 's32[1]{0}', space=sflag, size = 0x4, scoped, tag = 'scoped memory for base_model_forward.13']
    #allocation8 [shape = 'u8[512]{0}', space=vmem, size = 0x400, scoped, tag = 'input window, operand 2, single buffered']
    #allocation9 [shape = 'u8[8192]{0}', space=vmem, size = 0x2000, scoped, tag = 'input window, operand 3, single buffered']
    #allocation10 [shape = 's32[1]{0}', space=sflag, size = 0x4, scoped, tag = 'scoped memory for base_model_forward.13']
    #allocation11 [shape = 'u8[8192]{0}', space=vmem, size = 0x2000, scoped, tag = 'output window, operand 0, single buffered']
    %9 = vsyncpa [#allocation4], 0
    %10 = vsyncpa [#allocation7], 0
    %11 = vsyncpa [#allocation10], 0
    %12 = vsyncpa [#allocation5], 0
    // Predicated region
    $region2: #{base_model_forward.13} parent=1 // pred_check
      _
    $region3: #{base_model_forward.13} parent=1 // pred_check_branch
      %14 = sbr.rel (0) target = $region5
    $region4: #{base_model_forward.13} parent=1 // pred_region
      %s16 = ssub.s32 128, 128
      %17 = vsyncadd [#allocation4], %s16
      %s18 = sshll.u32 [#allocation3], 4
      %s19 = int_to_ptr.vmem [resolvable:$true] %s18
      %24 = dma.hbm_to_vmem [thread:$0]  %s0, 128, %s19, [#allocation4], 64, 64, 4
    $region5: #{base_model_forward.13} parent=1 // pred_fallthru
      _
    // Predicated region
    $region6: #{base_model_forward.13} parent=1 // pred_check
      _
    $region7: #{base_model_forward.13} parent=1 // pred_check_branch
      %26 = sbr.rel (0) target = $region9
    $region8: #{base_model_forward.13} parent=1 // pred_region
      %s28 = ssub.s32 256, 256
      %29 = vsyncadd [#allocation7], %s28
      %s30 = sshll.u32 [#allocation6], 4
      %s31 = int_to_ptr.vmem [resolvable:$true] %s30
      %36 = dma.hbm_to_vmem [thread:$0]  %s1, 256, %s31, [#allocation7], 64, 64, 4
    $region9: #{base_model_forward.13} parent=1 // pred_fallthru
      _
    // Predicated region
    $region10: #{base_model_forward.13} parent=1 // pred_check
      _
    $region11: #{base_model_forward.13} parent=1 // pred_check_branch
      %38 = sbr.rel (0) target = $region13
    $region12: #{base_model_forward.13} parent=1 // pred_region
      %s40 = ssub.s32 16, 16
      %41 = vsyncadd [#allocation7], %s40
      %s43 = sshll.u32 [#allocation8], 4
      %s44 = int_to_ptr.vmem [resolvable:$true] %s43
      %46 = dma.hbm_to_vmem [thread:$0]  %s2, 16, %s44, [#allocation7]
    $region13: #{base_model_forward.13} parent=1 // pred_fallthru
      _
    // Predicated region
    $region14: #{base_model_forward.13} parent=1 // pred_check
      _
    $region15: #{base_model_forward.13} parent=1 // pred_check_branch
      %48 = sbr.rel (0) target = $region17
    $region16: #{base_model_forward.13} parent=1 // pred_region
      %s50 = ssub.s32 256, 256
      %51 = vsyncadd [#allocation10], %s50
      %s52 = sshll.u32 [#allocation9], 4
      %s53 = int_to_ptr.vmem [resolvable:$true] %s52
      %58 = dma.hbm_to_vmem [thread:$0]  %s3, 256, %s53, [#allocation10], 128, 128, 8
    $region17: #{base_model_forward.13} parent=1 // pred_fallthru
      _
    // Predicated region
    $region18: #{base_model_forward.13} parent=1 // pred_check
      _
    $region19: #{base_model_forward.13} parent=1 // pred_check_branch
      %60 = sbr.rel (0) target = $region21
    $region20: #{base_model_forward.13} parent=1 // pred_region
      %61 = dma.done [#allocation4], 128
    $region21: #{base_model_forward.13} parent=1 // pred_fallthru
      _
    // Predicated region
    $region22: #{base_model_forward.13} parent=1 // pred_check
      _
    $region23: #{base_model_forward.13} parent=1 // pred_check_branch
      %63 = sbr.rel (0) target = $region25
    $region24: #{base_model_forward.13} parent=1 // pred_region
      %64 = dma.done [#allocation7], 256
    $region25: #{base_model_forward.13} parent=1 // pred_fallthru
      _
    // Predicated region
    $region26: #{base_model_forward.13} parent=1 // pred_check
      _
    $region27: #{base_model_forward.13} parent=1 // pred_check_branch
      %66 = sbr.rel (0) target = $region29
    $region28: #{base_model_forward.13} parent=1 // pred_region
      %67 = dma.done [#allocation7], 16
    $region29: #{base_model_forward.13} parent=1 // pred_fallthru
      _
    // Predicated region
    $region30: #{base_model_forward.13} parent=1 // pred_check
      _
    $region31: #{base_model_forward.13} parent=1 // pred_check_branch
      %69 = sbr.rel (0) target = $region33
    $region32: #{base_model_forward.13} parent=1 // pred_region
      %70 = dma.done [#allocation10], 256
    $region33: #{base_model_forward.13} parent=1 // pred_fallthru
      _
    %p72 = scmp.eq.s32.totalorder 0, 0
    // Predicated region
    $region34: #{base_model_forward.13} parent=1 // pred_check
      %p73 = pneg %p72
    $region35: #{base_model_forward.13} parent=1 // pred_check_branch
      %75 = sbr.rel (%p73) target = $region37
    $region36: #{base_model_forward.13} parent=1 // pred_region
      %vm76 = vcmask 261120
      %77 = vst.msk [vmem:[#allocation2] sm:$0xff] %vm76, 0.0
      %78 = vst.msk [vmem:[#allocation2 + $0x8] sm:$0xff] %vm76, 0.0
    $region37: #{base_model_forward.13} parent=1 // pred_fallthru
      _
    %v79 = vld [vmem:[#allocation2] sm:$0xff]
    %v80 = vld [vmem:[#allocation2 + $0x8] sm:$0xff]
    %v81 = vld [vmem:[#allocation3] sm:$0xf]
    %v82 = vld [vmem:[#allocation3 + $0x4] sm:$0xf]
    %v83 = vld [vmem:[#allocation6] sm:$0xf]
    %v84 = vld [vmem:[#allocation6 + $0x4] sm:$0xf]
    %v85 = vld [vmem:[#allocation6 + $0x8] sm:$0xf]
    %v86 = vld [vmem:[#allocation6 + $0xc] sm:$0xf]
    %v89 = vunpack.c.l.b16 %v81
    %v90 = vunpack.c.l.b16 %v82
    %v91 = vpack.c.b16 %v90, %v89
    %v96 = vunpack.c.l.b16 %v83
    %v97 = vunpack.c.l.b16 %v84
    %v98 = vunpack.c.l.b16 %v85
    %v99 = vunpack.c.l.b16 %v86
    %v100 = vpack.c.b16 %v97, %v96
    %v101 = vpack.c.b16 %v99, %v98
    %vm104 = vcmask 261120
    %v106 = vsel %vm104, %v91, 0
    %108 = vmatprep.subr.bf16.mxu0 0
    %109 = vmatpush1.bf16.msra.mxu0 %v100
    %110 = vmatprep.subr.bf16.mxu0 0
    %111 = vmatpush1.bf16.msra.mxu0 %v101
    %112 = vmatprep.subr.bf16.mxu0 0
    %113 = vmatpush1.bf16.msra.mxu0 0
    %114 = vmatprep.subr.bf16.mxu0 0
    %115 = vmatpush1.bf16.msra.mxu0 0
    %116 = vmatprep.subr.bf16.mxu0 0
    %117 = vmatpush1.bf16.msra.mxu0 0
    %118 = vmatprep.subr.bf16.mxu0 0
    %119 = vmatpush1.bf16.msra.mxu0 0
    %120 = vmatprep.subr.bf16.mxu0 0
    %121 = vmatpush1.bf16.msra.mxu0 0
    %122 = vmatprep.subr.bf16.mxu0 0
    %123 = vmatpush1.bf16.msra.mxu0 0
    %124 = vmatprep.subr.bf16.mxu0 0
    %125 = vmatpush1.bf16.msra.mxu0 0
    %126 = vmatprep.subr.bf16.mxu0 0
    %127 = vmatpush1.bf16.msra.mxu0 0
    %128 = vmatprep.subr.bf16.mxu0 0
    %129 = vmatpush1.bf16.msra.mxu0 0
    %130 = vmatprep.subr.bf16.mxu0 0
    %131 = vmatpush1.bf16.msra.mxu0 0
    %132 = vmatprep.subr.bf16.mxu0 0
    %133 = vmatpush1.bf16.msra.mxu0 0
    %134 = vmatprep.subr.bf16.mxu0 0
    %135 = vmatpush1.bf16.msra.mxu0 0
    %136 = vmatprep.subr.bf16.mxu0 0
    %137 = vmatpush1.bf16.msra.mxu0 0
    %138 = vmatprep.subr.bf16.mxu0 0
    %139 = vmatpush1.bf16.msra.mxu0 0
    %140 = vmatprep.mubr.bf16.mxu0 0
    %141 = vmatmul.mubr.bf16.gmra.mrb[0].mxu0 %v106
    %v142 = vpop.f32.mrb[0].mxu0
    %v143 = vadd.f32 0.0, %v142
    %v144 = vpop.f32.mrb[0].mxu0
    %v145 = vpop.f32.mrb[0].mxu0
    %v146 = vadd.f32 0.0, %v145
    %v147 = vpop.f32.mrb[0].mxu0
    %148 = vdwg.mxu0
    %v149 = vadd.f32 %v79, %v143
    %v150 = vadd.f32 %v80, %v146
    %151 = vst.msk [vmem:[#allocation2] sm:$0xff] %vm104, %v149
    %152 = vst.msk [vmem:[#allocation2 + $0x8] sm:$0xff] %vm104, %v150
    // Predicated region
    $region38: #{base_model_forward.13} parent=1 // pred_check
      %p153 = pneg %p72
    $region39: #{base_model_forward.13} parent=1 // pred_check_branch
      %155 = sbr.rel (%p153) target = $region41
    $region40: #{base_model_forward.13} parent=1 // pred_region
      %v156 = vld [vmem:[#allocation2] sm:$0xff]
      %v157 = vld [vmem:[#allocation2 + $0x8] sm:$0xff]
      %v158 = vld [vmem:[#allocation8] sm:$0x1]
      %v160 = vlaneseq
      %v161 = vshrl.u32 %v160, 7
      %v162 = vsub.s32 0, %v161
      %v163 = vrot.slane %v158, %v162
      %v165 = vadd.f32 %v156, %v163
      %v166 = vadd.f32 %v157, %v163
      %v167 = vld [vmem:[#allocation9] sm:$0xff]
      %v168 = vld [vmem:[#allocation9 + $0x8] sm:$0xff]
      %v169 = vadd.f32 %v165, %v167
      %v170 = vadd.f32 %v166, %v168
      %171 = vst.msk [vmem:[#allocation11] sm:$0xff] %vm104, %v169
      %172 = vst.msk [vmem:[#allocation11 + $0x8] sm:$0xff] %vm104, %v170
    $region41: #{base_model_forward.13} parent=1 // pred_fallthru
      _
    // Predicated region
    $region42: #{base_model_forward.13} parent=1 // pred_check
      _
    $region43: #{base_model_forward.13} parent=1 // pred_check_branch
      %174 = sbr.rel (0) target = $region45
    $region44: #{base_model_forward.13} parent=1 // pred_region
      %s176 = ssub.s32 256, 256
      %177 = vsyncadd [#allocation5], %s176
      %s178 = sshll.u32 [#allocation11], 4
      %s179 = int_to_ptr.vmem [resolvable:$true] %s178
      %184 = dma.vmem_to_hbm [thread:$0]  %s179, 256, %s4, [#allocation5], 128, 128, 8
    $region45: #{base_model_forward.13} parent=1 // pred_fallthru
      _
    // Predicated region
    $region46: #{base_model_forward.13} parent=1 // pred_check
      _
    $region47: #{base_model_forward.13} parent=1 // pred_check_branch
      %186 = sbr.rel (0) target = $region49
    $region48: #{base_model_forward.13} parent=1 // pred_region
      %187 = dma.done [#allocation5], 256
    $region49: #{base_model_forward.13} parent=1 // pred_fallthru
      _
    %188 = vsyncpa [#allocation4], 1
    %189 = vsyncpa [#allocation7], 1
    %190 = vsyncpa [#allocation10], 1
    %191 = vsyncpa [#allocation5], 1

// kernel: base_model_forward.11
$region0: #{base_model_forward.11}
  #allocation0 [shape = 'u32[]', space=smem, size = 0x4, offset = 0x4, fixed_abs, tag = 'smem constant byte address 0x4 - core index']
  #allocation1 [shape = 'u32[144,128]{1,0:T(1,128)}', space=vmem, size = 0x12000, scoped, tag = 'internal scratch']
  %s0 = inlined_call_operand.hbm [shape: f32[16,32], index: 0, kind: input, shape index: {}]
  %s1 = inlined_call_operand.hbm [shape: f32[1,32], index: 1, kind: input, shape index: {}]
  %s2 = inlined_call_operand.hbm [shape: f32[1,32], index: 2, kind: input, shape index: {}]
  %s3 = inlined_call_operand.hbm [shape: bf16[32,96], index: 3, kind: input, shape index: {}]
  %s4 = inlined_call_operand.hbm [shape: f32[1,96], index: 4, kind: input, shape index: {}]
  %s5 = inlined_call_operand.hbm [shape: bf16[16,96], index: 5, kind: output, shape index: {}]
  %s6 = sld [smem:[#allocation0]]
  $region50: #{base_model_forward.11} parent=0
    _
  %s8 = ssub.s32 1, %s6
  %s9 = scalar_select 0, %s8, %s6
  $region1: #{base_model_forward.11} parent=0
    #allocation2 [shape = 'u8[8192]{0}', space=vmem, size = 0x2000, scoped, tag = 'input window, operand 0, single buffered']
    #allocation3 [shape = 's32[1]{0}', space=sflag, size = 0x4, scoped, tag = 'scoped memory for base_model_forward.11']
    #allocation4 [shape = 's32[1]{0}', space=sflag, size = 0x4, scoped, tag = 'scoped memory for base_model_forward.11']
    #allocation5 [shape = 'u8[512]{0}', space=vmem, size = 0x400, scoped, tag = 'input window, operand 1, single buffered']
    #allocation6 [shape = 's32[1]{0}', space=sflag, size = 0x4, scoped, tag = 'scoped memory for base_model_forward.11']
    #allocation7 [shape = 'u8[512]{0}', space=vmem, size = 0x400, scoped, tag = 'input window, operand 2, single buffered']
    #allocation8 [shape = 'u8[8192]{0}', space=vmem, size = 0x2000, scoped, tag = 'input window, operand 3, single buffered']
    #allocation9 [shape = 's32[1]{0}', space=sflag, size = 0x4, scoped, tag = 'scoped memory for base_model_forward.11']
    #allocation10 [shape = 'u8[512]{0}', space=vmem, size = 0x400, scoped, tag = 'input window, operand 4, single buffered']
    #allocation11 [shape = 'u8[4096]{0}', space=vmem, size = 0x1000, scoped, tag = 'output window, operand 0, single buffered']
    %10 = vsyncpa [#allocation3], 0
    %11 = vsyncpa [#allocation6], 0
    %12 = vsyncpa [#allocation9], 0
    %13 = vsyncpa [#allocation4], 0
    // Predicated region
    $region2: #{base_model_forward.11} parent=1 // pred_check
      _
    $region3: #{base_model_forward.11} parent=1 // pred_check_branch
      %15 = sbr.rel (0) target = $region5
    $region4: #{base_model_forward.11} parent=1 // pred_region
      %s17 = ssub.s32 256, 256
      %18 = vsyncadd [#allocation3], %s17
      %s19 = sshll.u32 [#allocation2], 4
      %s20 = int_to_ptr.vmem [resolvable:$true] %s19
      %25 = dma.hbm_to_vmem [thread:$0]  %s0, 256, %s20, [#allocation3], 128, 128, 8
    $region5: #{base_model_forward.11} parent=1 // pred_fallthru
      _
    // Predicated region
    $region6: #{base_model_forward.11} parent=1 // pred_check
      _
    $region7: #{base_model_forward.11} parent=1 // pred_check_branch
      %27 = sbr.rel (0) target = $region9
    $region8: #{base_model_forward.11} parent=1 // pred_region
      %s29 = ssub.s32 16, 16
      %30 = vsyncadd [#allocation6], %s29
      %s32 = sshll.u32 [#allocation5], 4
      %s33 = int_to_ptr.vmem [resolvable:$true] %s32
      %35 = dma.hbm_to_vmem [thread:$0]  %s1, 16, %s33, [#allocation6]
    $region9: #{base_model_forward.11} parent=1 // pred_fallthru
      _
    // Predicated region
    $region10: #{base_model_forward.11} parent=1 // pred_check
      _
    $region11: #{base_model_forward.11} parent=1 // pred_check_branch
      %37 = sbr.rel (0) target = $region13
    $region12: #{base_model_forward.11} parent=1 // pred_region
      %s39 = ssub.s32 16, 16
      %40 = vsyncadd [#allocation6], %s39
      %s42 = sshll.u32 [#allocation7], 4
      %s43 = int_to_ptr.vmem [resolvable:$true] %s42
      %45 = dma.hbm_to_vmem [thread:$0]  %s2, 16, %s43, [#allocation6]
    $region13: #{base_model_forward.11} parent=1 // pred_fallthru
      _
    // Predicated region
    $region14: #{base_model_forward.11} parent=1 // pred_check
      _
    $region15: #{base_model_forward.11} parent=1 // pred_check_branch
      %47 = sbr.rel (0) target = $region17
    $region16: #{base_model_forward.11} parent=1 // pred_region
      %s49 = ssub.s32 256, 256
      %50 = vsyncadd [#allocation9], %s49
      %s51 = sshll.u32 [#allocation8], 4
      %s52 = int_to_ptr.vmem [resolvable:$true] %s51
      %57 = dma.hbm_to_vmem [thread:$0]  %s3, 256, %s52, [#allocation9], 64, 64, 4
    $region17: #{base_model_forward.11} parent=1 // pred_fallthru
      _
    // Predicated region
    $region18: #{base_model_forward.11} parent=1 // pred_check
      _
    $region19: #{base_model_forward.11} parent=1 // pred_check_branch
      %59 = sbr.rel (0) target = $region21
    $region20: #{base_model_forward.11} parent=1 // pred_region
      %s61 = ssub.s32 16, 16
      %62 = vsyncadd [#allocation9], %s61
      %s64 = sshll.u32 [#allocation10], 4
      %s65 = int_to_ptr.vmem [resolvable:$true] %s64
      %67 = dma.hbm_to_vmem [thread:$0]  %s4, 16, %s65, [#allocation9]
    $region21: #{base_model_forward.11} parent=1 // pred_fallthru
      _
    // Predicated region
    $region22: #{base_model_forward.11} parent=1 // pred_check
      _
    $region23: #{base_model_forward.11} parent=1 // pred_check_branch
      %69 = sbr.rel (0) target = $region25
    $region24: #{base_model_forward.11} parent=1 // pred_region
      %70 = dma.done [#allocation3], 256
    $region25: #{base_model_forward.11} parent=1 // pred_fallthru
      _
    // Predicated region
    $region26: #{base_model_forward.11} parent=1 // pred_check
      _
    $region27: #{base_model_forward.11} parent=1 // pred_check_branch
      %72 = sbr.rel (0) target = $region29
    $region28: #{base_model_forward.11} parent=1 // pred_region
      %73 = dma.done [#allocation6], 16
    $region29: #{base_model_forward.11} parent=1 // pred_fallthru
      _
    // Predicated region
    $region30: #{base_model_forward.11} parent=1 // pred_check
      _
    $region31: #{base_model_forward.11} parent=1 // pred_check_branch
      %75 = sbr.rel (0) target = $region33
    $region32: #{base_model_forward.11} parent=1 // pred_region
      %76 = dma.done [#allocation6], 16
    $region33: #{base_model_forward.11} parent=1 // pred_fallthru
      _
    // Predicated region
    $region34: #{base_model_forward.11} parent=1 // pred_check
      _
    $region35: #{base_model_forward.11} parent=1 // pred_check_branch
      %78 = sbr.rel (0) target = $region37
    $region36: #{base_model_forward.11} parent=1 // pred_region
      %79 = dma.done [#allocation9], 256
    $region37: #{base_model_forward.11} parent=1 // pred_fallthru
      _
    // Predicated region
    $region38: #{base_model_forward.11} parent=1 // pred_check
      _
    $region39: #{base_model_forward.11} parent=1 // pred_check_branch
      %81 = sbr.rel (0) target = $region41
    $region40: #{base_model_forward.11} parent=1 // pred_region
      %82 = dma.done [#allocation9], 16
    $region41: #{base_model_forward.11} parent=1 // pred_fallthru
      _
    %v84 = vld [vmem:[#allocation2] sm:$0xff]
    %v85 = vld [vmem:[#allocation2 + $0x8] sm:$0xff]
    %vm86 = vcmask 261120
    %v87 = vsel %vm86, %v84, 0.0
    %88 = vadd.xlane.f32.xlu0 %v87
    %v89 = vpop.xlane.xlu0 %88
    %v90 = vsel %vm86, %v85, 0.0
    %91 = vadd.xlane.f32.xlu0 %v90
    %v92 = vpop.xlane.xlu0 %91
    %v93 = vrcp.pop 32.0
    %v94 = vmul.f32 %v89, %v93
    %v95 = vmul.f32 %v92, %v93
    %v96 = vsub.f32 %v84, %v94
    %v97 = vsub.f32 %v85, %v95
    %v98 = vmul.f32 %v96, %v96
    %v99 = vmul.f32 %v97, %v97
    %v100 = vsel %vm86, %v98, 0.0
    %101 = vadd.xlane.f32.xlu0 %v100
    %v102 = vpop.xlane.xlu0 %101
    %v103 = vsel %vm86, %v99, 0.0
    %104 = vadd.xlane.f32.xlu0 %v103
    %v105 = vpop.xlane.xlu0 %104
    %v106 = vmul.f32 %v102, %v93
    %v107 = vmul.f32 %v105, %v93
    %v108 = vadd.f32 %v106, 1e-05
    %v109 = vadd.f32 %v107, 1e-05
    %v110 = vrsqrt.pop %v108
    %v111 = vrsqrt.pop %v109
    %v112 = vmul.f32 %v96, %v110
    %v113 = vmul.f32 %v97, %v111
    %v114 = vld [vmem:[#allocation5] sm:$0x1]
    %v116 = vlaneseq
    %v117 = vshrl.u32 %v116, 7
    %v118 = vsub.s32 0, %v117
    %v119 = vrot.slane %v114, %v118
    %v121 = vmul.f32 %v112, %v119
    %v122 = vmul.f32 %v113, %v119
    %v123 = vld [vmem:[#allocation7] sm:$0x1]
    %v125 = vlaneseq
    %v126 = vshrl.u32 %v125, 7
    %v127 = vsub.s32 0, %v126
    %v128 = vrot.slane %v123, %v127
    %v130 = vadd.f32 %v121, %v128
    %v131 = vadd.f32 %v122, %v128
    %v132 = vpack.c.bf16 %v131, %v130
    %v133 = vld [vmem:[#allocation8] sm:$0xf]
    %v134 = vld [vmem:[#allocation8 + $0x4] sm:$0xf]
    %v135 = vld [vmem:[#allocation8 + $0x8] sm:$0xf]
    %v136 = vld [vmem:[#allocation8 + $0xc] sm:$0xf]
    %v137 = vld [vmem:[#allocation10] sm:$0x1]
    %v139 = vlaneseq
    %v140 = vshrl.u32 %v139, 7
    %v141 = vsub.s32 0, %v140
    %v142 = vrot.slane %v137, %v141
    %v148 = vunpack.c.l.b16 %v133
    %v149 = vunpack.c.l.b16 %v134
    %v150 = vunpack.c.l.b16 %v135
    %v151 = vunpack.c.l.b16 %v136
    %v152 = vpack.c.b16 %v149, %v148
    %v153 = vpack.c.b16 %v151, %v150
    %v157 = vsel %vm86, %v132, 0
    %159 = vmatprep.subr.bf16.mxu0 0
    %160 = vmatpush1.bf16.msra.mxu0 %v152
    %161 = vmatprep.subr.bf16.mxu0 0
    %162 = vmatpush1.bf16.msra.mxu0 %v153
    %163 = vmatprep.subr.bf16.mxu0 0
    %164 = vmatpush1.bf16.msra.mxu0 0
    %165 = vmatprep.subr.bf16.mxu0 0
    %166 = vmatpush1.bf16.msra.mxu0 0
    %167 = vmatprep.subr.bf16.mxu0 0
    %168 = vmatpush1.bf16.msra.mxu0 0
    %169 = vmatprep.subr.bf16.mxu0 0
    %170 = vmatpush1.bf16.msra.mxu0 0
    %171 = vmatprep.subr.bf16.mxu0 0
    %172 = vmatpush1.bf16.msra.mxu0 0
    %173 = vmatprep.subr.bf16.mxu0 0
    %174 = vmatpush1.bf16.msra.mxu0 0
    %175 = vmatprep.subr.bf16.mxu0 0
    %176 = vmatpush1.bf16.msra.mxu0 0
    %177 = vmatprep.subr.bf16.mxu0 0
    %178 = vmatpush1.bf16.msra.mxu0 0
    %179 = vmatprep.subr.bf16.mxu0 0
    %180 = vmatpush1.bf16.msra.mxu0 0
    %181 = vmatprep.subr.bf16.mxu0 0
    %182 = vmatpush1.bf16.msra.mxu0 0
    %183 = vmatprep.subr.bf16.mxu0 0
    %184 = vmatpush1.bf16.msra.mxu0 0
    %185 = vmatprep.subr.bf16.mxu0 0
    %186 = vmatpush1.bf16.msra.mxu0 0
    %187 = vmatprep.subr.bf16.mxu0 0
    %188 = vmatpush1.bf16.msra.mxu0 0
    %189 = vmatprep.subr.bf16.mxu0 0
    %190 = vmatpush1.bf16.msra.mxu0 0
    %191 = vmatprep.mubr.bf16.mxu0 0
    %192 = vmatmul.mubr.bf16.gmra.mrb[0].mxu0 %v157
    %v193 = vpop.f32.mrb[0].mxu0
    %v194 = vadd.f32 %v142, %v193
    %v195 = vpop.f32.mrb[0].mxu0
    %v196 = vpop.f32.mrb[0].mxu0
    %v197 = vadd.f32 %v142, %v196
    %v198 = vpop.f32.mrb[0].mxu0
    %199 = vdwg.mxu0
    %v200 = vpack.c.bf16 %v197, %v194
    %v202 = vunpack.c.l.b16 %v200
    %v203 = vunpack.c.h.b16 %v200
    %v204 = vpack.c.b16 %v202, %v202
    %v205 = vpack.c.b16 %v203, %v203
    %vm208 = vcmask 781312
    %209 = vst.msk [vmem:[#allocation11] sm:$0xf] %vm208, %v204
    %210 = vst.msk [vmem:[#allocation11 + $0x4] sm:$0xf] %vm208, %v205
    // Predicated region
    $region42: #{base_model_forward.11} parent=1 // pred_check
      _
    $region43: #{base_model_forward.11} parent=1 // pred_check_branch
      %212 = sbr.rel (0) target = $region45
    $region44: #{base_model_forward.11} parent=1 // pred_region
      %s214 = ssub.s32 128, 128
      %215 = vsyncadd [#allocation4], %s214
      %s216 = sshll.u32 [#allocation11], 4
      %s217 = int_to_ptr.vmem [resolvable:$true] %s216
      %222 = dma.vmem_to_hbm [thread:$0]  %s217, 128, %s5, [#allocation4], 64, 64, 4
    $region45: #{base_model_forward.11} parent=1 // pred_fallthru
      _
    // Predicated region
    $region46: #{base_model_forward.11} parent=1 // pred_check
      _
    $region47: #{base_model_forward.11} parent=1 // pred_check_branch
      %224 = sbr.rel (0) target = $region49
    $region48: #{base_model_forward.11} parent=1 // pred_region
      %225 = dma.done [#allocation4], 128
    $region49: #{base_model_forward.11} parent=1 // pred_fallthru
      _
    %226 = vsyncpa [#allocation3], 1
    %227 = vsyncpa [#allocation6], 1
    %228 = vsyncpa [#allocation9], 1
    %229 = vsyncpa [#allocation4], 1

// kernel: base_model_forward.14
$region0: #{base_model_forward.14}
  #allocation0 [shape = 'u32[]', space=smem, size = 0x4, offset = 0x4, fixed_abs, tag = 'smem constant byte address 0x4 - core index']
  #allocation1 [shape = 'u32[144,128]{1,0:T(1,128)}', space=vmem, size = 0x12000, scoped, tag = 'internal scratch']
  %s0 = inlined_call_operand.hbm [shape: f32[16,32], index: 0, kind: input, shape index: {}]
  %s1 = inlined_call_operand.hbm [shape: f32[1,32], index: 1, kind: input, shape index: {}]
  %s2 = inlined_call_operand.hbm [shape: f32[1,32], index: 2, kind: input, shape index: {}]
  %s3 = inlined_call_operand.hbm [shape: bf16[32,128], index: 3, kind: input, shape index: {}]
  %s4 = inlined_call_operand.hbm [shape: f32[1,128], index: 4, kind: input, shape index: {}]
  %s5 = inlined_call_operand.hbm [shape: bf16[16,128], index: 5, kind: output, shape index: {}]
  %s6 = sld [smem:[#allocation0]]
  $region50: #{base_model_forward.14} parent=0
    _
  %s8 = ssub.s32 1, %s6
  %s9 = scalar_select 0, %s8, %s6
  $region1: #{base_model_forward.14} parent=0
    #allocation2 [shape = 'u8[8192]{0}', space=vmem, size = 0x2000, scoped, tag = 'input window, operand 0, single buffered']
    #allocation3 [shape = 's32[1]{0}', space=sflag, size = 0x4, scoped, tag = 'scoped memory for base_model_forward.14']
    #allocation4 [shape = 's32[1]{0}', space=sflag, size = 0x4, scoped, tag = 'scoped memory for base_model_forward.14']
    #allocation5 [shape = 'u8[512]{0}', space=vmem, size = 0x400, scoped, tag = 'input window, operand 1, single buffered']
    #allocation6 [shape = 's32[1]{0}', space=sflag, size = 0x4, scoped, tag = 'scoped memory for base_model_forward.14']
    #allocation7 [shape = 'u8[512]{0}', space=vmem, size = 0x400, scoped, tag = 'input window, operand 2, single buffered']
    #allocation8 [shape = 'u8[8192]{0}', space=vmem, size = 0x2000, scoped, tag = 'input window, operand 3, single buffered']
    #allocation9 [shape = 's32[1]{0}', space=sflag, size = 0x4, scoped, tag = 'scoped memory for base_model_forward.14']
    #allocation10 [shape = 'u8[512]{0}', space=vmem, size = 0x400, scoped, tag = 'input window, operand 4, single buffered']
    #allocation11 [shape = 'u8[4096]{0}', space=vmem, size = 0x1000, scoped, tag = 'output window, operand 0, single buffered']
    %10 = vsyncpa [#allocation3], 0
    %11 = vsyncpa [#allocation6], 0
    %12 = vsyncpa [#allocation9], 0
    %13 = vsyncpa [#allocation4], 0
    // Predicated region
    $region2: #{base_model_forward.14} parent=1 // pred_check
      _
    $region3: #{base_model_forward.14} parent=1 // pred_check_branch
      %15 = sbr.rel (0) target = $region5
    $region4: #{base_model_forward.14} parent=1 // pred_region
      %s17 = ssub.s32 256, 256
      %18 = vsyncadd [#allocation3], %s17
      %s19 = sshll.u32 [#allocation2], 4
      %s20 = int_to_ptr.vmem [resolvable:$true] %s19
      %25 = dma.hbm_to_vmem [thread:$0]  %s0, 256, %s20, [#allocation3], 128, 128, 8
    $region5: #{base_model_forward.14} parent=1 // pred_fallthru
      _
    // Predicated region
    $region6: #{base_model_forward.14} parent=1 // pred_check
      _
    $region7: #{base_model_forward.14} parent=1 // pred_check_branch
      %27 = sbr.rel (0) target = $region9
    $region8: #{base_model_forward.14} parent=1 // pred_region
      %s29 = ssub.s32 16, 16
      %30 = vsyncadd [#allocation6], %s29
      %s32 = sshll.u32 [#allocation5], 4
      %s33 = int_to_ptr.vmem [resolvable:$true] %s32
      %35 = dma.hbm_to_vmem [thread:$0]  %s1, 16, %s33, [#allocation6]
    $region9: #{base_model_forward.14} parent=1 // pred_fallthru
      _
    // Predicated region
    $region10: #{base_model_forward.14} parent=1 // pred_check
      _
    $region11: #{base_model_forward.14} parent=1 // pred_check_branch
      %37 = sbr.rel (0) target = $region13
    $region12: #{base_model_forward.14} parent=1 // pred_region
      %s39 = ssub.s32 16, 16
      %40 = vsyncadd [#allocation6], %s39
      %s42 = sshll.u32 [#allocation7], 4
      %s43 = int_to_ptr.vmem [resolvable:$true] %s42
      %45 = dma.hbm_to_vmem [thread:$0]  %s2, 16, %s43, [#allocation6]
    $region13: #{base_model_forward.14} parent=1 // pred_fallthru
      _
    // Predicated region
    $region14: #{base_model_forward.14} parent=1 // pred_check
      _
    $region15: #{base_model_forward.14} parent=1 // pred_check_branch
      %47 = sbr.rel (0) target = $region17
    $region16: #{base_model_forward.14} parent=1 // pred_region
      %s49 = ssub.s32 256, 256
      %50 = vsyncadd [#allocation9], %s49
      %s51 = sshll.u32 [#allocation8], 4
      %s52 = int_to_ptr.vmem [resolvable:$true] %s51
      %57 = dma.hbm_to_vmem [thread:$0]  %s3, 256, %s52, [#allocation9], 64, 64, 4
    $region17: #{base_model_forward.14} parent=1 // pred_fallthru
      _
    // Predicated region
    $region18: #{base_model_forward.14} parent=1 // pred_check
      _
    $region19: #{base_model_forward.14} parent=1 // pred_check_branch
      %59 = sbr.rel (0) target = $region21
    $region20: #{base_model_forward.14} parent=1 // pred_region
      %s61 = ssub.s32 16, 16
      %62 = vsyncadd [#allocation9], %s61
      %s64 = sshll.u32 [#allocation10], 4
      %s65 = int_to_ptr.vmem [resolvable:$true] %s64
      %67 = dma.hbm_to_vmem [thread:$0]  %s4, 16, %s65, [#allocation9]
    $region21: #{base_model_forward.14} parent=1 // pred_fallthru
      _
    // Predicated region
    $region22: #{base_model_forward.14} parent=1 // pred_check
      _
    $region23: #{base_model_forward.14} parent=1 // pred_check_branch
      %69 = sbr.rel (0) target = $region25
    $region24: #{base_model_forward.14} parent=1 // pred_region
      %70 = dma.done [#allocation3], 256
    $region25: #{base_model_forward.14} parent=1 // pred_fallthru
      _
    // Predicated region
    $region26: #{base_model_forward.14} parent=1 // pred_check
      _
    $region27: #{base_model_forward.14} parent=1 // pred_check_branch
      %72 = sbr.rel (0) target = $region29
    $region28: #{base_model_forward.14} parent=1 // pred_region
      %73 = dma.done [#allocation6], 16
    $region29: #{base_model_forward.14} parent=1 // pred_fallthru
      _
    // Predicated region
    $region30: #{base_model_forward.14} parent=1 // pred_check
      _
    $region31: #{base_model_forward.14} parent=1 // pred_check_branch
      %75 = sbr.rel (0) target = $region33
    $region32: #{base_model_forward.14} parent=1 // pred_region
      %76 = dma.done [#allocation6], 16
    $region33: #{base_model_forward.14} parent=1 // pred_fallthru
      _
    // Predicated region
    $region34: #{base_model_forward.14} parent=1 // pred_check
      _
    $region35: #{base_model_forward.14} parent=1 // pred_check_branch
      %78 = sbr.rel (0) target = $region37
    $region36: #{base_model_forward.14} parent=1 // pred_region
      %79 = dma.done [#allocation9], 256
    $region37: #{base_model_forward.14} parent=1 // pred_fallthru
      _
    // Predicated region
    $region38: #{base_model_forward.14} parent=1 // pred_check
      _
    $region39: #{base_model_forward.14} parent=1 // pred_check_branch
      %81 = sbr.rel (0) target = $region41
    $region40: #{base_model_forward.14} parent=1 // pred_region
      %82 = dma.done [#allocation9], 16
    $region41: #{base_model_forward.14} parent=1 // pred_fallthru
      _
    %v84 = vld [vmem:[#allocation2] sm:$0xff]
    %v85 = vld [vmem:[#allocation2 + $0x8] sm:$0xff]
    %vm86 = vcmask 261120
    %v87 = vsel %vm86, %v84, 0.0
    %88 = vadd.xlane.f32.xlu0 %v87
    %v89 = vpop.xlane.xlu0 %88
    %v90 = vsel %vm86, %v85, 0.0
    %91 = vadd.xlane.f32.xlu0 %v90
    %v92 = vpop.xlane.xlu0 %91
    %v93 = vrcp.pop 32.0
    %v94 = vmul.f32 %v89, %v93
    %v95 = vmul.f32 %v92, %v93
    %v96 = vsub.f32 %v84, %v94
    %v97 = vsub.f32 %v85, %v95
    %v98 = vmul.f32 %v96, %v96
    %v99 = vmul.f32 %v97, %v97
    %v100 = vsel %vm86, %v98, 0.0
    %101 = vadd.xlane.f32.xlu0 %v100
    %v102 = vpop.xlane.xlu0 %101
    %v103 = vsel %vm86, %v99, 0.0
    %104 = vadd.xlane.f32.xlu0 %v103
    %v105 = vpop.xlane.xlu0 %104
    %v106 = vmul.f32 %v102, %v93
    %v107 = vmul.f32 %v105, %v93
    %v108 = vadd.f32 %v106, 1e-05
    %v109 = vadd.f32 %v107, 1e-05
    %v110 = vrsqrt.pop %v108
    %v111 = vrsqrt.pop %v109
    %v112 = vmul.f32 %v96, %v110
    %v113 = vmul.f32 %v97, %v111
    %v114 = vld [vmem:[#allocation5] sm:$0x1]
    %v116 = vlaneseq
    %v117 = vshrl.u32 %v116, 7
    %v118 = vsub.s32 0, %v117
    %v119 = vrot.slane %v114, %v118
    %v121 = vmul.f32 %v112, %v119
    %v122 = vmul.f32 %v113, %v119
    %v123 = vld [vmem:[#allocation7] sm:$0x1]
    %v125 = vlaneseq
    %v126 = vshrl.u32 %v125, 7
    %v127 = vsub.s32 0, %v126
    %v128 = vrot.slane %v123, %v127
    %v130 = vadd.f32 %v121, %v128
    %v131 = vadd.f32 %v122, %v128
    %v132 = vpack.c.bf16 %v131, %v130
    %v133 = vld [vmem:[#allocation8] sm:$0xf]
    %v134 = vld [vmem:[#allocation8 + $0x4] sm:$0xf]
    %v135 = vld [vmem:[#allocation8 + $0x8] sm:$0xf]
    %v136 = vld [vmem:[#allocation8 + $0xc] sm:$0xf]
    %v137 = vld [vmem:[#allocation10] sm:$0x1]
    %v139 = vlaneseq
    %v140 = vshrl.u32 %v139, 7
    %v141 = vsub.s32 0, %v140
    %v142 = vrot.slane %v137, %v141
    %v148 = vunpack.c.l.b16 %v133
    %v149 = vunpack.c.l.b16 %v134
    %v150 = vunpack.c.l.b16 %v135
    %v151 = vunpack.c.l.b16 %v136
    %v152 = vpack.c.b16 %v149, %v148
    %v153 = vpack.c.b16 %v151, %v150
    %v157 = vsel %vm86, %v132, 0
    %159 = vmatprep.subr.bf16.mxu0 0
    %160 = vmatpush1.bf16.msra.mxu0 %v152
    %161 = vmatprep.subr.bf16.mxu0 0
    %162 = vmatpush1.bf16.msra.mxu0 %v153
    %163 = vmatprep.subr.bf16.mxu0 0
    %164 = vmatpush1.bf16.msra.mxu0 0
    %165 = vmatprep.subr.bf16.mxu0 0
    %166 = vmatpush1.bf16.msra.mxu0 0
    %167 = vmatprep.subr.bf16.mxu0 0
    %168 = vmatpush1.bf16.msra.mxu0 0
    %169 = vmatprep.subr.bf16.mxu0 0
    %170 = vmatpush1.bf16.msra.mxu0 0
    %171 = vmatprep.subr.bf16.mxu0 0
    %172 = vmatpush1.bf16.msra.mxu0 0
    %173 = vmatprep.subr.bf16.mxu0 0
    %174 = vmatpush1.bf16.msra.mxu0 0
    %175 = vmatprep.subr.bf16.mxu0 0
    %176 = vmatpush1.bf16.msra.mxu0 0
    %177 = vmatprep.subr.bf16.mxu0 0
    %178 = vmatpush1.bf16.msra.mxu0 0
    %179 = vmatprep.subr.bf16.mxu0 0
    %180 = vmatpush1.bf16.msra.mxu0 0
    %181 = vmatprep.subr.bf16.mxu0 0
    %182 = vmatpush1.bf16.msra.mxu0 0
    %183 = vmatprep.subr.bf16.mxu0 0
    %184 = vmatpush1.bf16.msra.mxu0 0
    %185 = vmatprep.subr.bf16.mxu0 0
    %186 = vmatpush1.bf16.msra.mxu0 0
    %187 = vmatprep.subr.bf16.mxu0 0
    %188 = vmatpush1.bf16.msra.mxu0 0
    %189 = vmatprep.subr.bf16.mxu0 0
    %190 = vmatpush1.bf16.msra.mxu0 0
    %191 = vmatprep.mubr.bf16.mxu0 0
    %192 = vmatmul.mubr.bf16.gmra.mrb[0].mxu0 %v157
    %v193 = vpop.f32.mrb[0].mxu0
    %v194 = vadd.f32 %v142, %v193
    %v195 = vpop.f32.mrb[0].mxu0
    %v196 = vpop.f32.mrb[0].mxu0
    %v197 = vadd.f32 %v142, %v196
    %v198 = vpop.f32.mrb[0].mxu0
    %199 = vdwg.mxu0
    %v200 = vmul.f32 %v194, 0.5
    %v201 = vmul.f32 %v197, 0.5
    %v202 = vmul.f32 %v194, 0.7978846
    %v203 = vmul.f32 %v197, 0.7978846
    %v204 = vmul.f32 %v194, 0.044715
    %v205 = vmul.f32 %v197, 0.044715
    %v206 = vmul.f32 %v204, %v194
    %v207 = vmul.f32 %v205, %v197
    %v208 = vadd.f32 %v206, 1.0
    %v209 = vadd.f32 %v207, 1.0
    %v210 = vmul.f32 %v202, %v208
    %v211 = vmul.f32 %v203, %v209
    %v212 = vtanh.pop %v210
    %v213 = vtanh.pop %v211
    %v214 = vadd.f32 %v212, 1.0
    %v215 = vadd.f32 %v213, 1.0
    %v216 = vmul.f32 %v200, %v214
    %v217 = vmul.f32 %v201, %v215
    %v218 = vpack.c.bf16 %v217, %v216
    %v220 = vunpack.c.l.b16 %v218
    %v221 = vunpack.c.h.b16 %v218
    %v222 = vpack.c.b16 %v220, %v220
    %v223 = vpack.c.b16 %v221, %v221
    %226 = vst [vmem:[#allocation11] sm:$0xf] %v222
    %227 = vst [vmem:[#allocation11 + $0x4] sm:$0xf] %v223
    // Predicated region
    $region42: #{base_model_forward.14} parent=1 // pred_check
      _
    $region43: #{base_model_forward.14} parent=1 // pred_check_branch
      %229 = sbr.rel (0) target = $region45
    $region44: #{base_model_forward.14} parent=1 // pred_region
      %s231 = ssub.s32 128, 128
      %232 = vsyncadd [#allocation4], %s231
      %s233 = sshll.u32 [#allocation11], 4
      %s234 = int_to_ptr.vmem [resolvable:$true] %s233
      %239 = dma.vmem_to_hbm [thread:$0]  %s234, 128, %s5, [#allocation4], 64, 64, 4
    $region45: #{base_model_forward.14} parent=1 // pred_fallthru
      _
    // Predicated region
    $region46: #{base_model_forward.14} parent=1 // pred_check
      _
    $region47: #{base_model_forward.14} parent=1 // pred_check_branch
      %241 = sbr.rel (0) target = $region49
    $region48: #{base_model_forward.14} parent=1 // pred_region
      %242 = dma.done [#allocation4], 128
    $region49: #{base_model_forward.14} parent=1 // pred_fallthru
      _
    %243 = vsyncpa [#allocation3], 1
    %244 = vsyncpa [#allocation6], 1
    %245 = vsyncpa [#allocation9], 1
    %246 = vsyncpa [#allocation4], 1

// kernel: base_model_forward.12
$region0: #{base_model_forward.12}
  #allocation0 [shape = 'u32[]', space=smem, size = 0x4, offset = 0x4, fixed_abs, tag = 'smem constant byte address 0x4 - core index']
  #allocation1 [shape = 'u32[144,128]{1,0:T(1,128)}', space=vmem, size = 0x12000, scoped, tag = 'internal scratch']
  #allocation2 [shape = 'f32[2,8,1]{2,1,0:T(8,128)}', space=vmem, size = 0x2000, scoped, tag = 'scratch operand']
  #allocation3 [shape = 'f32[2,8,1]{2,1,0:T(8,128)}', space=vmem, size = 0x2000, scoped, tag = 'scratch operand']
  #allocation4 [shape = 'f32[2,8,16]{2,1,0:T(8,128)}', space=vmem, size = 0x2000, scoped, tag = 'scratch operand']
  %s0 = inlined_call_operand.hbm [shape: bf16[2,8,3,2,16], index: 0, kind: input, shape index: {}, may-alias: {0,1,2}]
  %s1 = inlined_call_operand.hbm [shape: bf16[2,8,3,2,16], index: 1, kind: input, shape index: {}, may-alias: {0,1,2}]
  %s2 = inlined_call_operand.hbm [shape: bf16[2,8,3,2,16], index: 2, kind: input, shape index: {}, may-alias: {0,1,2}]
  %s3 = inlined_call_operand.hbm [shape: bf16[2,8,2,16], index: 3, kind: output, shape index: {}]
  %s4 = sld [smem:[#allocation0]]
  $region69: #{base_model_forward.12} parent=0
    _
  %s6 = ssub.s32 1, %s4
  %s7 = scalar_select 0, %s6, %s4
  $region1: #{base_model_forward.12} parent=0
    #allocation5 [shape = 'u8[8192]{0}', space=vmem, size = 0x2000, scoped, tag = 'input window, operand 0']
    #allocation6 [shape = 's32[2]{0}', space=sflag, size = 0x8, scoped, tag = 'scoped memory for base_model_forward.12']
    #allocation7 [shape = 's32[2]{0}', space=sflag, size = 0x8, scoped, tag = 'scoped memory for base_model_forward.12']
    #allocation8 [shape = 'u8[8192]{0}', space=vmem, size = 0x2000, scoped, tag = 'input window, operand 1']
    #allocation9 [shape = 's32[2]{0}', space=sflag, size = 0x8, scoped, tag = 'scoped memory for base_model_forward.12']
    #allocation10 [shape = 'u8[8192]{0}', space=vmem, size = 0x2000, scoped, tag = 'input window, operand 2']
    #allocation11 [shape = 'u8[8192]{0}', space=vmem, size = 0x2000, scoped, tag = 'output window, operand 0']
    %8 = vsyncpa [#allocation6], 0
    %s9 = scalar_lea.sflag [#allocation6], 1
    %10 = vsyncpa %s9, 0
    %11 = vsyncpa [#allocation9], 0
    %s12 = scalar_lea.sflag [#allocation9], 1
    %13 = vsyncpa %s12, 0
    %14 = vsyncpa [#allocation7], 0
    %s15 = scalar_lea.sflag [#allocation7], 1
    %16 = vsyncpa %s15, 0
    loop: start=0, step=1, limit=4
    $region2: #{base_model_forward.12} parent=1 // loop_pre_header
      _
    $region3: #{base_model_forward.12} parent=1 // loop_header
      %s18 = sphi 0, %s22
      %p19 = scmp.ge.s32.totalorder %s18, 4
      %s25 = sphi 0, %s51
      %s26 = sphi 0, %s47
      %s27 = sphi 0, %s43
      %s28 = sphi 0, %s39
      %s29 = sphi 0, %s25
      %s30 = sphi 0, %s26
      %s31 = sphi 0, %s27
      %s32 = sphi 0, %s28
      %s33 = sphi 0, %s29
      %s34 = sphi 0, %s30
      %s35 = sphi 0, %s31
      %s36 = sphi 0, %s32
      %s58 = sphi 0, %s60
      %s61 = sphi 0, %s58
      %s62 = sphi 0, %s61
      %s78 = sphi 0, %s62
      %s88 = sphi 0, %s90
      %s91 = sphi 0, %s88
      %s92 = sphi 0, %s91
      %s108 = sphi 0, %s92
      %s118 = sphi 0, %s120
      %s121 = sphi 0, %s118
      %s122 = sphi 0, %s121
      %s138 = sphi 0, %s122
      %s148 = sphi 0, %s150
      %s151 = sphi 0, %s148
      %s152 = sphi 0, %s151
      %s168 = sphi 0, %s152
    $region4: #{base_model_forward.12} parent=1 // loop_header_branch
      %21 = sbr.rel (%p19) target = $region8
    $region5: #{base_model_forward.12} parent=1 // loop_body
      %s23 = ssub.s32 %s18, 1
      %s24 = ssub.s32 %s18, 2
      %s37 = sadd.s32 1, %s28
      %p38 = scmp.ge.s32.totalorder %s37, 1
      %s39 = scalar_select %p38, 0, %s37
      %s40 = sadd.s32 1, %s27
      %s41 = scalar_select %p38, %s40, %s27
      %p42 = scmp.ge.s32.totalorder %s41, 1
      %s43 = scalar_select %p42, 0, %s41
      %s44 = sadd.s32 1, %s26
      %s45 = scalar_select %p42, %s44, %s26
      %p46 = scmp.ge.s32.totalorder %s45, 1
      %s47 = scalar_select %p46, 0, %s45
      %s48 = sadd.s32 1, %s25
      %s49 = scalar_select %p46, %s48, %s25
      %p50 = scmp.ge.s32.totalorder %s49, 2
      %s51 = scalar_select %p50, 0, %s49
      %s52 = ssub.s32 %s25, %s51
      %s53 = ssub.s32 %s27, %s43
      %s54 = sor.u32 %s52, %s53
      %s55 = ssub.s32 %s26, %s47
      %s56 = sor.u32 %s54, %s55
      %p57 = scmp.eq.s32.totalorder %s56, 0
      %s59 = sadd.s32 %s58, 1
      %s60 = scalar_select %p57, %s58, %s59
      %p63 = pneg %p57
      %p64 = scmp.eq.s32.totalorder %s18, 1
      %p65 = por %p63, %p64
      %p66 = scmp.ne.s32.totalorder %s58, %s61
      %p67 = scmp.eq.s32.totalorder %s18, 0
      %p68 = por %p66, %p67
      %p69 = scmp.ne.s32.totalorder %s58, %s61
      %p70 = scmp.eq.s32.totalorder %s23, 1
      %p71 = por %p69, %p70
      %p72 = scmp.ne.s32.totalorder %s61, %s62
      %p73 = scmp.eq.s32.totalorder %s23, 0
      %p74 = por %p72, %p73
      %p75 = scmp.ne.s32.totalorder %s61, %s62
      %p76 = scmp.eq.s32.totalorder %s24, 1
      %p77 = por %p75, %p76
      %p79 = scmp.ne.s32.totalorder %s62, %s78
      %p80 = scmp.eq.s32.totalorder %s24, 0
      %p81 = por %p79, %p80
      %s82 = ssub.s32 %s25, %s51
      %s83 = ssub.s32 %s28, %s39
      %s84 = sor.u32 %s82, %s83
      %s85 = ssub.s32 %s26, %s47
      %s86 = sor.u32 %s84, %s85
      %p87 = scmp.eq.s32.totalorder %s86, 0
      %s89 = sadd.s32 %s88, 1
      %s90 = scalar_select %p87, %s88, %s89
      %p93 = pneg %p87
      %p94 = scmp.eq.s32.totalorder %s18, 1
      %p95 = por %p93, %p94
      %p96 = scmp.ne.s32.totalorder %s88, %s91
      %p97 = scmp.eq.s32.totalorder %s18, 0
      %p98 = por %p96, %p97
      %p99 = scmp.ne.s32.totalorder %s88, %s91
      %p100 = scmp.eq.s32.totalorder %s23, 1
      %p101 = por %p99, %p100
      %p102 = scmp.ne.s32.totalorder %s91, %s92
      %p103 = scmp.eq.s32.totalorder %s23, 0
      %p104 = por %p102, %p103
      %p105 = scmp.ne.s32.totalorder %s91, %s92
      %p106 = scmp.eq.s32.totalorder %s24, 1
      %p107 = por %p105, %p106
      %p109 = scmp.ne.s32.totalorder %s92, %s108
      %p110 = scmp.eq.s32.totalorder %s24, 0
      %p111 = por %p109, %p110
      %s112 = ssub.s32 %s25, %s51
      %s113 = ssub.s32 %s28, %s39
      %s114 = sor.u32 %s112, %s113
      %s115 = ssub.s32 %s26, %s47
      %s116 = sor.u32 %s114, %s115
      %p117 = scmp.eq.s32.totalorder %s116, 0
      %s119 = sadd.s32 %s118, 1
      %s120 = scalar_select %p117, %s118, %s119
      %p123 = pneg %p117
      %p124 = scmp.eq.s32.totalorder %s18, 1
      %p125 = por %p123, %p124
      %p126 = scmp.ne.s32.totalorder %s118, %s121
      %p127 = scmp.eq.s32.totalorder %s18, 0
      %p128 = por %p126, %p127
      %p129 = scmp.ne.s32.totalorder %s118, %s121
      %p130 = scmp.eq.s32.totalorder %s23, 1
      %p131 = por %p129, %p130
      %p132 = scmp.ne.s32.totalorder %s121, %s122
      %p133 = scmp.eq.s32.totalorder %s23, 0
      %p134 = por %p132, %p133
      %p135 = scmp.ne.s32.totalorder %s121, %s122
      %p136 = scmp.eq.s32.totalorder %s24, 1
      %p137 = por %p135, %p136
      %p139 = scmp.ne.s32.totalorder %s122, %s138
      %p140 = scmp.eq.s32.totalorder %s24, 0
      %p141 = por %p139, %p140
      %s142 = ssub.s32 %s25, %s51
      %s143 = ssub.s32 %s27, %s43
      %s144 = sor.u32 %s142, %s143
      %s145 = ssub.s32 %s26, %s47
      %s146 = sor.u32 %s144, %s145
      %p147 = scmp.eq.s32.totalorder %s146, 0
      %s149 = sadd.s32 %s148, 1
      %s150 = scalar_select %p147, %s148, %s149
      %p153 = pneg %p147
      %p154 = scmp.eq.s32.totalorder %s18, 1
      %p155 = por %p153, %p154
      %p156 = scmp.ne.s32.totalorder %s148, %s151
      %p157 = scmp.eq.s32.totalorder %s18, 0
      %p158 = por %p156, %p157
      %p159 = scmp.ne.s32.totalorder %s148, %s151
      %p160 = scmp.eq.s32.totalorder %s23, 1
      %p161 = por %p159, %p160
      %p162 = scmp.ne.s32.totalorder %s151, %s152
      %p163 = scmp.eq.s32.totalorder %s23, 0
      %p164 = por %p162, %p163
      %p165 = scmp.ne.s32.totalorder %s151, %s152
      %p166 = scmp.eq.s32.totalorder %s24, 1
      %p167 = por %p165, %p166
      %p169 = scmp.ne.s32.totalorder %s152, %s168
      %p170 = scmp.eq.s32.totalorder %s24, 0
      %p171 = por %p169, %p170
      %p172 = scmp.le.s32.totalorder 1, %s18
      %p173 = scmp.lt.s32.totalorder %s18, 3
      %p174 = pnand %p172, %p173
      %p175 = pneg %p174
      // Predicated region
      $region9: #{base_model_forward.12} parent=5 // pred_check
        _
      $region10: #{base_model_forward.12} parent=5 // pred_check_branch
        %177 = sbr.rel (%p174) target = $region12
      $region11: #{base_model_forward.12} parent=5 // pred_region
        %s178 = ssub.s32 %s18, 1
      $region12: #{base_model_forward.12} parent=5 // pred_fallthru
        _
      %p179 = scmp.lt.s32.totalorder %s18, 2
      // Predicated region
      $region13: #{base_model_forward.12} parent=5 // pred_check
        %p180 = pneg %p179
      $region14: #{base_model_forward.12} parent=5 // pred_check_branch
        %182 = sbr.rel (%p180) target = $region16
      $region15: #{base_model_forward.12} parent=5 // pred_region
        // Predicated region
        $region17: #{base_model_forward.12} parent=15 // pred_check
          %p183 = pneg %p68
        $region18: #{base_model_forward.12} parent=15 // pred_check_branch
          %185 = sbr.rel (%p183) target = $region20
        $region19: #{base_model_forward.12} parent=15 // pred_region
          %s186 = sand.u32 %s58, 1
          %s187 = scalar_lea.sflag [#allocation6], %s186
          %s188 = sand.u32 %s58, 1
          %s189 = smul.addr %s188, 8
          %s190 = scalar_lea.vmem [#allocation5], %s189
          %s191 = smul.u32 8, %s27
          %s193 = ssub.s32 128, 128
          %194 = vsyncadd %s187, %s193
          %s195 = smul.addr %s191, 3
          %s196 = sadd.s32 %s26, %s195
          %s197 = smul.addr %s25, 24
          %s198 = sadd.s32 %s196, %s197
          %s199 = smul.addr %s198, 16
          %s200 = scalar_lea.hbm %s0, %s199
          %s201 = sshll.u32 %s190, 4
          %s202 = int_to_ptr.vmem [resolvable:$true] %s201
          %207 = dma.hbm_to_vmem [thread:$0]  %s200, 128, %s202, %s187, 48, 16, 1
        $region20: #{base_model_forward.12} parent=15 // pred_fallthru
          _
        // Predicated region
        $region21: #{base_model_forward.12} parent=15 // pred_check
          %p208 = pneg %p98
        $region22: #{base_model_forward.12} parent=15 // pred_check_branch
          %210 = sbr.rel (%p208) target = $region24
        $region23: #{base_model_forward.12} parent=15 // pred_region
          %s211 = sand.u32 %s18, 1
          %s212 = scalar_lea.sflag [#allocation9], %s211
          %s213 = sand.u32 %s88, 1
          %s214 = smul.addr %s213, 8
          %s215 = scalar_lea.vmem [#allocation8], %s214
          %s216 = smul.u32 8, %s28
          %s218 = ssub.s32 128, 128
          %219 = vsyncadd %s212, %s218
          %s220 = sadd.s32 %s26, 1
          %s221 = smul.addr %s216, 3
          %s222 = sadd.s32 %s220, %s221
          %s223 = smul.addr %s25, 24
          %s224 = sadd.s32 %s222, %s223
          %s225 = smul.addr %s224, 16
          %s226 = scalar_lea.hbm %s1, %s225
          %s227 = sshll.u32 %s215, 4
          %s228 = int_to_ptr.vmem [resolvable:$true] %s227
          %233 = dma.hbm_to_vmem [thread:$0]  %s226, 128, %s228, %s212, 48, 16, 1
        $region24: #{base_model_forward.12} parent=15 // pred_fallthru
          _
        // Predicated region
        $region25: #{base_model_forward.12} parent=15 // pred_check
          %p234 = pneg %p128
        $region26: #{base_model_forward.12} parent=15 // pred_check_branch
          %236 = sbr.rel (%p234) target = $region28
        $region27: #{base_model_forward.12} parent=15 // pred_region
          %s237 = sand.u32 %s18, 1
          %s238 = scalar_lea.sflag [#allocation9], %s237
          %s239 = sand.u32 %s118, 1
          %s240 = smul.addr %s239, 8
          %s241 = scalar_lea.vmem [#allocation10], %s240
          %s242 = smul.u32 8, %s28
          %s244 = ssub.s32 128, 128
          %245 = vsyncadd %s238, %s244
          %s246 = sadd.s32 %s26, 2
          %s247 = smul.addr %s242, 3
          %s248 = sadd.s32 %s246, %s247
          %s249 = smul.addr %s25, 24
          %s250 = sadd.s32 %s248, %s249
          %s251 = smul.addr %s250, 16
          %s252 = scalar_lea.hbm %s2, %s251
          %s253 = sshll.u32 %s241, 4
          %s254 = int_to_ptr.vmem [resolvable:$true] %s253
          %259 = dma.hbm_to_vmem [thread:$0]  %s252, 128, %s254, %s238, 48, 16, 1
        $region28: #{base_model_forward.12} parent=15 // pred_fallthru
          _
      $region16: #{base_model_forward.12} parent=5 // pred_fallthru
        _
      %p260 = scmp.le.s32.totalorder 1, %s18
      %p261 = scmp.lt.s32.totalorder %s18, 3
      %p262 = pnand %p260, %p261
      %p263 = pneg %p262
      // Predicated region
      $region29: #{base_model_forward.12} parent=5 // pred_check
        _
      $region30: #{base_model_forward.12} parent=5 // pred_check_branch
        %265 = sbr.rel (%p262) target = $region32
      $region31: #{base_model_forward.12} parent=5 // pred_region
        %s266 = ssub.s32 %s18, 1
        %s267 = sand.u32 %s61, 1
        %s268 = scalar_lea.sflag [#allocation6], %s267
        %s269 = sand.u32 %s61, 1
        %s270 = smul.addr %s269, 8
        %s271 = scalar_lea.vmem [#allocation5], %s270
        // Predicated region
        $region33: #{base_model_forward.12} parent=31 // pred_check
          %p272 = pneg %p74
        $region34: #{base_model_forward.12} parent=31 // pred_check_branch
          %274 = sbr.rel (%p272) target = $region36
        $region35: #{base_model_forward.12} parent=31 // pred_region
          %275 = dma.done %s268, 128
        $region36: #{base_model_forward.12} parent=31 // pred_fallthru
          _
        %s276 = sand.u32 %s23, 1
        %s277 = scalar_lea.sflag [#allocation9], %s276
        %s278 = sand.u32 %s91, 1
        %s279 = smul.addr %s278, 8
        %s280 = scalar_lea.vmem [#allocation8], %s279
        // Predicated region
        $region37: #{base_model_forward.12} parent=31 // pred_check
          %p281 = pneg %p104
        $region38: #{base_model_forward.12} parent=31 // pred_check_branch
          %283 = sbr.rel (%p281) target = $region40
        $region39: #{base_model_forward.12} parent=31 // pred_region
          %284 = dma.done %s277, 128
        $region40: #{base_model_forward.12} parent=31 // pred_fallthru
          _
        %s285 = sand.u32 %s23, 1
        %s286 = scalar_lea.sflag [#allocation9], %s285
        %s287 = sand.u32 %s121, 1
        %s288 = smul.addr %s287, 8
        %s289 = scalar_lea.vmem [#allocation10], %s288
        // Predicated region
        $region41: #{base_model_forward.12} parent=31 // pred_check
          %p290 = pneg %p134
        $region42: #{base_model_forward.12} parent=31 // pred_check_branch
          %292 = sbr.rel (%p290) target = $region44
        $region43: #{base_model_forward.12} parent=31 // pred_region
          %293 = dma.done %s286, 128
        $region44: #{base_model_forward.12} parent=31 // pred_fallthru
          _
        %s294 = sand.u32 %s61, 1
        %s295 = scalar_lea.sflag [#allocation6], %s294
        %s296 = sand.u32 %s61, 1
        %s297 = smul.addr %s296, 8
        %s298 = scalar_lea.vmem [#allocation5], %s297
        %p299 = pneg %p74
        %p300 = pneg %p71
        %s301 = sand.u32 %s23, 1
        %s302 = scalar_lea.sflag [#allocation9], %s301
        %s303 = sand.u32 %s91, 1
        %s304 = smul.addr %s303, 8
        %s305 = scalar_lea.vmem [#allocation8], %s304
        %p306 = pneg %p104
        %p307 = pneg %p101
        %s308 = sand.u32 %s23, 1
        %s309 = scalar_lea.sflag [#allocation9], %s308
        %s310 = sand.u32 %s121, 1
        %s311 = smul.addr %s310, 8
        %s312 = scalar_lea.vmem [#allocation10], %s311
        %p313 = pneg %p134
        %p314 = pneg %p131
        %p315 = pneg %p164
        %p316 = pneg %p161
        %s317 = sand.u32 %s151, 1
        %s318 = scalar_lea.sflag [#allocation7], %s317
        %s319 = sand.u32 %s151, 1
        %s320 = smul.addr %s319, 8
        %s321 = scalar_lea.vmem [#allocation11], %s320
        %s322 = smul.u32 8, %s31
        %s323 = smul.u32 8, %s32
        %s324 = smul.u32 8, %s32
        %s325 = smul.u32 8, %s31
        %p327 = scmp.eq.s32.totalorder %s32, 0
        // Predicated region
        $region45: #{base_model_forward.12} parent=31 // pred_check
          %p328 = pneg %p327
        $region46: #{base_model_forward.12} parent=31 // pred_check_branch
          %330 = sbr.rel (%p328) target = $region48
        $region47: #{base_model_forward.12} parent=31 // pred_region
          %vm331 = vcmask 7168
          %332 = vst.msk [vmem:[#allocation2] sm:$0xff] %vm331, -inf
          %333 = vst.msk [vmem:[#allocation2 + $0x8] sm:$0xff] %vm331, -inf
          %334 = vst.msk [vmem:[#allocation3] sm:$0xff] %vm331, 0.0
          %335 = vst.msk [vmem:[#allocation3 + $0x8] sm:$0xff] %vm331, 0.0
          %vm336 = vcmask 130048
          %337 = vst.msk [vmem:[#allocation4] sm:$0xff] %vm336, 0.0
          %338 = vst.msk [vmem:[#allocation4 + $0x8] sm:$0xff] %vm336, 0.0
        $region48: #{base_model_forward.12} parent=31 // pred_fallthru
          _
        %s339 = smul.u32 %s31, 8
        %s340 = smul.u32 %s32, 8
        %s341 = sadd.s32 %s339, 7
        %p342 = scmp.le.s32.totalorder %s340, %s341
        // Predicated region
        $region49: #{base_model_forward.12} parent=31 // pred_check
          %p343 = pneg %p342
        $region50: #{base_model_forward.12} parent=31 // pred_check_branch
          %345 = sbr.rel (%p343) target = $region52
        $region51: #{base_model_forward.12} parent=31 // pred_region
          %v346 = vld [vmem:[%s271] sm:$0x1]
          %v347 = vld [vmem:[%s271 + $0x1] sm:$0x1]
          %v348 = vld [vmem:[%s271 + $0x2] sm:$0x1]
          %v349 = vld [vmem:[%s271 + $0x3] sm:$0x1]
          %v350 = vld [vmem:[%s271 + $0x4] sm:$0x1]
          %v351 = vld [vmem:[%s271 + $0x5] sm:$0x1]
          %v352 = vld [vmem:[%s271 + $0x6] sm:$0x1]
          %v353 = vld [vmem:[%s271 + $0x7] sm:$0x1]
          %v356 = vpack.i.b16 %v347, %v346
          %v357 = vshrl.u32 %v346, 16
          %v358 = vshrl.u32 %v347, 16
          %v359 = vpack.i.b16 %v358, %v357
          %v362 = vpack.i.b16 %v349, %v348
          %v363 = vshrl.u32 %v348, 16
          %v364 = vshrl.u32 %v349, 16
          %v365 = vpack.i.b16 %v364, %v363
          %v368 = vpack.i.b16 %v351, %v350
          %v369 = vshrl.u32 %v350, 16
          %v370 = vshrl.u32 %v351, 16
          %v371 = vpack.i.b16 %v370, %v369
          %v374 = vpack.i.b16 %v353, %v352
          %v375 = vshrl.u32 %v352, 16
          %v376 = vshrl.u32 %v353, 16
          %v377 = vpack.i.b16 %v376, %v375
          %v378 = vld [vmem:[%s280] sm:$0x1]
          %v379 = vld [vmem:[%s280 + $0x1] sm:$0x1]
          %v380 = vld [vmem:[%s280 + $0x2] sm:$0x1]
          %v381 = vld [vmem:[%s280 + $0x3] sm:$0x1]
          %v382 = vld [vmem:[%s280 + $0x4] sm:$0x1]
          %v383 = vld [vmem:[%s280 + $0x5] sm:$0x1]
          %v384 = vld [vmem:[%s280 + $0x6] sm:$0x1]
          %v385 = vld [vmem:[%s280 + $0x7] sm:$0x1]
          %v388 = vpack.i.b16 %v379, %v378
          %v389 = vshrl.u32 %v378, 16
          %v390 = vshrl.u32 %v379, 16
          %v391 = vpack.i.b16 %v390, %v389
          %v394 = vpack.i.b16 %v381, %v380
          %v395 = vshrl.u32 %v380, 16
          %v396 = vshrl.u32 %v381, 16
          %v397 = vpack.i.b16 %v396, %v395
          %v400 = vpack.i.b16 %v383, %v382
          %v401 = vshrl.u32 %v382, 16
          %v402 = vshrl.u32 %v383, 16
          %v403 = vpack.i.b16 %v402, %v401
          %v406 = vpack.i.b16 %v385, %v384
          %v407 = vshrl.u32 %v384, 16
          %v408 = vshrl.u32 %v385, 16
          %v409 = vpack.i.b16 %v408, %v407
          %v410 = vld [vmem:[%s289] sm:$0x1]
          %v411 = vld [vmem:[%s289 + $0x1] sm:$0x1]
          %v412 = vld [vmem:[%s289 + $0x2] sm:$0x1]
          %v413 = vld [vmem:[%s289 + $0x3] sm:$0x1]
          %v414 = vld [vmem:[%s289 + $0x4] sm:$0x1]
          %v415 = vld [vmem:[%s289 + $0x5] sm:$0x1]
          %v416 = vld [vmem:[%s289 + $0x6] sm:$0x1]
          %v417 = vld [vmem:[%s289 + $0x7] sm:$0x1]
          %v420 = vpack.i.b16 %v411, %v410
          %v421 = vshrl.u32 %v410, 16
          %v422 = vshrl.u32 %v411, 16
          %v423 = vpack.i.b16 %v422, %v421
          %v426 = vpack.i.b16 %v413, %v412
          %v427 = vshrl.u32 %v412, 16
          %v428 = vshrl.u32 %v413, 16
          %v429 = vpack.i.b16 %v428, %v427
          %v432 = vpack.i.b16 %v415, %v414
          %v433 = vshrl.u32 %v414, 16
          %v434 = vshrl.u32 %v415, 16
          %v435 = vpack.i.b16 %v434, %v433
          %v438 = vpack.i.b16 %v417, %v416
          %v439 = vshrl.u32 %v416, 16
          %v440 = vshrl.u32 %v417, 16
          %v441 = vpack.i.b16 %v440, %v439
          %v442 = vcombine.low %v356, %v362
          %v443 = vcombine.low %v368, %v374
          %v445 = vunpack.c.l.s4 1966171168
          %v446 = vunpack.c.0.s8 %v445
          %v447 = vlaneseq
          %v448 = vshrl.u32 %v447, 7
          %v449 = vsub.s32 %v446, %v448
          %v450 = vrot.slane %v442, %v449
          %v452 = vunpack.c.l.s4 1966171168
          %v453 = vunpack.c.0.s8 %v452
          %v454 = vlaneseq
          %v455 = vshrl.u32 %v454, 7
          %v456 = vsub.s32 %v453, %v455
          %v457 = vrot.slane %v443, %v456
          %v458 = vcombine.low %v450, %v457
          %v460 = vunpack.c.l.s4 1966171168
          %v461 = vunpack.c.0.s8 %v460
          %v462 = vlaneseq
          %v463 = vshrl.u32 %v462, 7
          %v464 = vsub.s32 %v461, %v463
          %v465 = vrot.slane %v458, %v464
          %v466 = vcombine.low %v388, %v394
          %v467 = vcombine.low %v400, %v406
          %v469 = vunpack.c.l.s4 1966171168
          %v470 = vunpack.c.0.s8 %v469
          %v471 = vlaneseq
          %v472 = vshrl.u32 %v471, 7
          %v473 = vsub.s32 %v470, %v472
          %v474 = vrot.slane %v466, %v473
          %v476 = vunpack.c.l.s4 1966171168
          %v477 = vunpack.c.0.s8 %v476
          %v478 = vlaneseq
          %v479 = vshrl.u32 %v478, 7
          %v480 = vsub.s32 %v477, %v479
          %v481 = vrot.slane %v467, %v480
          %v482 = vcombine.low %v474, %v481
          %v484 = vunpack.c.l.s4 1966171168
          %v485 = vunpack.c.0.s8 %v484
          %v486 = vlaneseq
          %v487 = vshrl.u32 %v486, 7
          %v488 = vsub.s32 %v485, %v487
          %v489 = vrot.slane %v482, %v488
          %vm490 = vcmask 130048
          %v492 = vsel %vm490, %v465, 0
          %v495 = vsel %vm490, %v489, 0
          %497 = vmatprep.subr.bf16.mxu0 0
          %498 = vmatpush1.bf16.xpose.msra.mxu0 %v495
          %499 = vmatprep.subr.bf16.mxu0 0
          %500 = vmatpush1.bf16.xpose.msra.mxu0 0
          %501 = vmatprep.subr.bf16.mxu0 0
          %502 = vmatpush1.bf16.xpose.msra.mxu0 0
          %503 = vmatprep.subr.bf16.mxu0 0
          %504 = vmatpush1.bf16.xpose.msra.mxu0 0
          %505 = vmatprep.subr.bf16.mxu0 0
          %506 = vmatpush1.bf16.xpose.msra.mxu0 0
          %507 = vmatprep.subr.bf16.mxu0 0
          %508 = vmatpush1.bf16.xpose.msra.mxu0 0
          %509 = vmatprep.subr.bf16.mxu0 0
          %510 = vmatpush1.bf16.xpose.msra.mxu0 0
          %511 = vmatprep.subr.bf16.mxu0 0
          %512 = vmatpush1.bf16.xpose.msra.mxu0 0
          %513 = vmatprep.subr.bf16.mxu0 0
          %514 = vmatpush1.bf16.xpose.msra.mxu0 0
          %515 = vmatprep.subr.bf16.mxu0 0
          %516 = vmatpush1.bf16.xpose.msra.mxu0 0
          %517 = vmatprep.subr.bf16.mxu0 0
          %518 = vmatpush1.bf16.xpose.msra.mxu0 0
          %519 = vmatprep.subr.bf16.mxu0 0
          %520 = vmatpush1.bf16.xpose.msra.mxu0 0
          %521 = vmatprep.subr.bf16.mxu0 0
          %522 = vmatpush1.bf16.xpose.msra.mxu0 0
          %523 = vmatprep.subr.bf16.mxu0 0
          %524 = vmatpush1.bf16.xpose.msra.mxu0 0
          %525 = vmatprep.subr.bf16.mxu0 0
          %526 = vmatpush1.bf16.xpose.msra.mxu0 0
          %527 = vmatprep.subr.bf16.mxu0 0
          %528 = vmatpush1.bf16.xpose.msra.mxu0 0
          %529 = vmatprep.mubr.bf16.mxu0 0
          %530 = vmatmul.mubr.bf16.gmra.mrb[0].mxu0 %v492
          %v531 = vpop.f32.mrb[0].mxu0
          %v532 = vadd.f32 0.0, %v531
          %v533 = vpop.f32.mrb[0].mxu0
          %v534 = vpop.f32.mrb[0].mxu0
          %v535 = vpop.f32.mrb[0].mxu0
          %536 = vdwg.mxu0
          %v537 = vcombine.low %v359, %v365
          %v538 = vcombine.low %v371, %v377
          %v540 = vunpack.c.l.s4 1966171168
          %v541 = vunpack.c.0.s8 %v540
          %v542 = vlaneseq
          %v543 = vshrl.u32 %v542, 7
          %v544 = vsub.s32 %v541, %v543
          %v545 = vrot.slane %v537, %v544
          %v547 = vunpack.c.l.s4 1966171168
          %v548 = vunpack.c.0.s8 %v547
          %v549 = vlaneseq
          %v550 = vshrl.u32 %v549, 7
          %v551 = vsub.s32 %v548, %v550
          %v552 = vrot.slane %v538, %v551
          %v553 = vcombine.low %v545, %v552
          %v555 = vunpack.c.l.s4 1966171168
          %v556 = vunpack.c.0.s8 %v555
          %v557 = vlaneseq
          %v558 = vshrl.u32 %v557, 7
          %v559 = vsub.s32 %v556, %v558
          %v560 = vrot.slane %v553, %v559
          %v561 = vcombine.low %v391, %v397
          %v562 = vcombine.low %v403, %v409
          %v564 = vunpack.c.l.s4 1966171168
          %v565 = vunpack.c.0.s8 %v564
          %v566 = vlaneseq
          %v567 = vshrl.u32 %v566, 7
          %v568 = vsub.s32 %v565, %v567
          %v569 = vrot.slane %v561, %v568
          %v571 = vunpack.c.l.s4 1966171168
          %v572 = vunpack.c.0.s8 %v571
          %v573 = vlaneseq
          %v574 = vshrl.u32 %v573, 7
          %v575 = vsub.s32 %v572, %v574
          %v576 = vrot.slane %v562, %v575
          %v577 = vcombine.low %v569, %v576
          %v579 = vunpack.c.l.s4 1966171168
          %v580 = vunpack.c.0.s8 %v579
          %v581 = vlaneseq
          %v582 = vshrl.u32 %v581, 7
          %v583 = vsub.s32 %v580, %v582
          %v584 = vrot.slane %v577, %v583
          %v586 = vsel %vm490, %v560, 0
          %v589 = vsel %vm490, %v584, 0
          %591 = vmatprep.subr.bf16.mxu0 0
          %592 = vmatpush1.bf16.xpose.msra.mxu0 %v589
          %593 = vmatprep.subr.bf16.mxu0 0
          %594 = vmatpush1.bf16.xpose.msra.mxu0 0
          %595 = vmatprep.subr.bf16.mxu0 0
          %596 = vmatpush1.bf16.xpose.msra.mxu0 0
          %597 = vmatprep.subr.bf16.mxu0 0
          %598 = vmatpush1.bf16.xpose.msra.mxu0 0
          %599 = vmatprep.subr.bf16.mxu0 0
          %600 = vmatpush1.bf16.xpose.msra.mxu0 0
          %601 = vmatprep.subr.bf16.mxu0 0
          %602 = vmatpush1.bf16.xpose.msra.mxu0 0
          %603 = vmatprep.subr.bf16.mxu0 0
          %604 = vmatpush1.bf16.xpose.msra.mxu0 0
          %605 = vmatprep.subr.bf16.mxu0 0
          %606 = vmatpush1.bf16.xpose.msra.mxu0 0
          %607 = vmatprep.subr.bf16.mxu0 0
          %608 = vmatpush1.bf16.xpose.msra.mxu0 0
          %609 = vmatprep.subr.bf16.mxu0 0
          %610 = vmatpush1.bf16.xpose.msra.mxu0 0
          %611 = vmatprep.subr.bf16.mxu0 0
          %612 = vmatpush1.bf16.xpose.msra.mxu0 0
          %613 = vmatprep.subr.bf16.mxu0 0
          %614 = vmatpush1.bf16.xpose.msra.mxu0 0
          %615 = vmatprep.subr.bf16.mxu0 0
          %616 = vmatpush1.bf16.xpose.msra.mxu0 0
          %617 = vmatprep.subr.bf16.mxu0 0
          %618 = vmatpush1.bf16.xpose.msra.mxu0 0
          %619 = vmatprep.subr.bf16.mxu0 0
          %620 = vmatpush1.bf16.xpose.msra.mxu0 0
          %621 = vmatprep.subr.bf16.mxu0 0
          %622 = vmatpush1.bf16.xpose.msra.mxu0 0
          %623 = vmatprep.mubr.bf16.mxu0 0
          %624 = vmatmul.mubr.bf16.gmra.mrb[0].mxu0 %v586
          %v625 = vpop.f32.mrb[0].mxu0
          %v626 = vadd.f32 0.0, %v625
          %v627 = vpop.f32.mrb[0].mxu0
          %v628 = vpop.f32.mrb[0].mxu0
          %v629 = vpop.f32.mrb[0].mxu0
          %630 = vdwg.mxu0
          %v631 = vmul.f32 %v532, 0.25
          %v632 = vmul.f32 %v626, 0.25
          %v633 = vlaneseq
          %v634 = vshrl.u32 %v633, 7
          %v635 = vstv %s339
          %v636 = vadd.s32 %v635, %v634
          %v637 = vlaneseq
          %v638 = vand.u32 %v637, 127
          %v639 = vstv %s340
          %v640 = vadd.s32 %v639, %v638
          %vm641 = vcmp.ge.s32.totalorder %v636, %v640
          %v642 = vsel %vm641, 1, 0
          %vm643 = vcmp.eq.s32.totalorder %v642, 1
          %v644 = vsel %vm643, %v631, -10000.0
          %v645 = vsel %vm643, %v632, -10000.0
          %v646 = vld [vmem:[#allocation2] sm:$0xff]
          %v647 = vld [vmem:[#allocation2 + $0x8] sm:$0xff]
          %vm648 = vcmask 64512
          %v649 = vsel %vm648, %v644, -inf
          %650 = vmax.xlane.f32.xlu0 %v649
          %v651 = vpop.xlane.xlu0 %650
          %v652 = vsel %vm648, %v645, -inf
          %653 = vmax.xlane.f32.xlu0 %v652
          %v654 = vpop.xlane.xlu0 %653
          %v655 = vmax.f32 %v646, %v651
          %v656 = vmax.f32 %v647, %v654
          %v657 = vsub.f32 %v646, %v655
          %v658 = vsub.f32 %v647, %v656
          %v659 = vmul.f32 %v657, 1.442695
          %v660 = vpow.pop %v659
          %v661 = vmul.f32 %v658, 1.442695
          %v662 = vpow.pop %v661
          %664 = vset.pattern.permute.xlu0 0
          %665 = vperm.xlu0 %664, %v655
          %v666 = vpop.permute.xlu0 %665
          %669 = vset.pattern.permute.xlu0 0
          %670 = vperm.xlu0 %669, %v656
          %v671 = vpop.permute.xlu0 %670
          %v673 = vsub.f32 %v644, %v666
          %v674 = vsub.f32 %v645, %v671
          %v675 = vmul.f32 %v673, 1.442695
          %v676 = vpow.pop %v675
          %v677 = vmul.f32 %v674, 1.442695
          %v678 = vpow.pop %v677
          %v679 = vld [vmem:[#allocation3] sm:$0xff]
          %v680 = vld [vmem:[#allocation3 + $0x8] sm:$0xff]
          %v681 = vmul.f32 %v660, %v679
          %v682 = vmul.f32 %v662, %v680
          %v683 = vsel %vm648, %v676, 0.0
          %684 = vadd.xlane.f32.xlu0 %v683
          %v685 = vpop.xlane.xlu0 %684
          %v686 = vsel %vm648, %v678, 0.0
          %687 = vadd.xlane.f32.xlu0 %v686
          %v688 = vpop.xlane.xlu0 %687
          %v689 = vadd.f32 %v681, %v685
          %v690 = vadd.f32 %v682, %v688
          %vm691 = vcmask 7168
          %692 = vst.msk [vmem:[#allocation3] sm:$0xff] %vm691, %v689
          %693 = vst.msk [vmem:[#allocation3 + $0x8] sm:$0xff] %vm691, %v690
          %v694 = vld [vmem:[#allocation4] sm:$0xff]
          %v695 = vld [vmem:[#allocation4 + $0x8] sm:$0xff]
          %697 = vset.pattern.permute.xlu0 0
          %698 = vperm.xlu0 %697, %v660
          %v699 = vpop.permute.xlu0 %698
          %702 = vset.pattern.permute.xlu0 0
          %703 = vperm.xlu0 %702, %v662
          %v704 = vpop.permute.xlu0 %703
          %v706 = vmul.f32 %v699, %v694
          %v707 = vmul.f32 %v704, %v695
          %v708 = vpack.c.bf16 %v676, %v676
          %v709 = vpack.c.bf16 %v678, %v678
          %v710 = vcombine.low %v420, %v426
          %v711 = vcombine.low %v432, %v438
          %v713 = vunpack.c.l.s4 1966171168
          %v714 = vunpack.c.0.s8 %v713
          %v715 = vlaneseq
          %v716 = vshrl.u32 %v715, 7
          %v717 = vsub.s32 %v714, %v716
          %v718 = vrot.slane %v710, %v717
          %v720 = vunpack.c.l.s4 1966171168
          %v721 = vunpack.c.0.s8 %v720
          %v722 = vlaneseq
          %v723 = vshrl.u32 %v722, 7
          %v724 = vsub.s32 %v721, %v723
          %v725 = vrot.slane %v711, %v724
          %v726 = vcombine.low %v718, %v725
          %v728 = vunpack.c.l.s4 1966171168
          %v729 = vunpack.c.0.s8 %v728
          %v730 = vlaneseq
          %v731 = vshrl.u32 %v730, 7
          %v732 = vsub.s32 %v729, %v731
          %v733 = vrot.slane %v726, %v732
          %v735 = vsel %vm648, %v708, 0
          %vm737 = vcmask 1043456
          %v739 = vsel %vm737, %v733, 0
          %741 = vmatprep.subr.bf16.mxu0 0
          %742 = vmatpush1.bf16.msra.mxu0 %v739
          %743 = vmatprep.subr.bf16.mxu0 0
          %744 = vmatpush1.bf16.msra.mxu0 0
          %745 = vmatprep.subr.bf16.mxu0 0
          %746 = vmatpush1.bf16.msra.mxu0 0
          %747 = vmatprep.subr.bf16.mxu0 0
          %748 = vmatpush1.bf16.msra.mxu0 0
          %749 = vmatprep.subr.bf16.mxu0 0
          %750 = vmatpush1.bf16.msra.mxu0 0
          %751 = vmatprep.subr.bf16.mxu0 0
          %752 = vmatpush1.bf16.msra.mxu0 0
          %753 = vmatprep.subr.bf16.mxu0 0
          %754 = vmatpush1.bf16.msra.mxu0 0
          %755 = vmatprep.subr.bf16.mxu0 0
          %756 = vmatpush1.bf16.msra.mxu0 0
          %757 = vmatprep.subr.bf16.mxu0 0
          %758 = vmatpush1.bf16.msra.mxu0 0
          %759 = vmatprep.subr.bf16.mxu0 0
          %760 = vmatpush1.bf16.msra.mxu0 0
          %761 = vmatprep.subr.bf16.mxu0 0
          %762 = vmatpush1.bf16.msra.mxu0 0
          %763 = vmatprep.subr.bf16.mxu0 0
          %764 = vmatpush1.bf16.msra.mxu0 0
          %765 = vmatprep.subr.bf16.mxu0 0
          %766 = vmatpush1.bf16.msra.mxu0 0
          %767 = vmatprep.subr.bf16.mxu0 0
          %768 = vmatpush1.bf16.msra.mxu0 0
          %769 = vmatprep.subr.bf16.mxu0 0
          %770 = vmatpush1.bf16.msra.mxu0 0
          %771 = vmatprep.subr.bf16.mxu0 0
          %772 = vmatpush1.bf16.msra.mxu0 0
          %773 = vmatprep.mubr.bf16.mxu0 0
          %774 = vmatmul.mubr.bf16.gmra.mrb[0].mxu0 %v735
          %v775 = vpop.f32.mrb[0].mxu0
          %v776 = vadd.f32 0.0, %v775
          %v777 = vpop.f32.mrb[0].mxu0
          %v778 = vpop.f32.mrb[0].mxu0
          %v779 = vpop.f32.mrb[0].mxu0
          %780 = vdwg.mxu0
          %v781 = vcombine.low %v423, %v429
          %v782 = vcombine.low %v435, %v441
          %v784 = vunpack.c.l.s4 1966171168
          %v785 = vunpack.c.0.s8 %v784
          %v786 = vlaneseq
          %v787 = vshrl.u32 %v786, 7
          %v788 = vsub.s32 %v785, %v787
          %v789 = vrot.slane %v781, %v788
          %v791 = vunpack.c.l.s4 1966171168
          %v792 = vunpack.c.0.s8 %v791
          %v793 = vlaneseq
          %v794 = vshrl.u32 %v793, 7
          %v795 = vsub.s32 %v792, %v794
          %v796 = vrot.slane %v782, %v795
          %v797 = vcombine.low %v789, %v796
          %v799 = vunpack.c.l.s4 1966171168
          %v800 = vunpack.c.0.s8 %v799
          %v801 = vlaneseq
          %v802 = vshrl.u32 %v801, 7
          %v803 = vsub.s32 %v800, %v802
          %v804 = vrot.slane %v797, %v803
          %v806 = vsel %vm648, %v709, 0
          %v809 = vsel %vm737, %v804, 0
          %811 = vmatprep.subr.bf16.mxu0 0
          %812 = vmatpush1.bf16.msra.mxu0 %v809
          %813 = vmatprep.subr.bf16.mxu0 0
          %814 = vmatpush1.bf16.msra.mxu0 0
          %815 = vmatprep.subr.bf16.mxu0 0
          %816 = vmatpush1.bf16.msra.mxu0 0
          %817 = vmatprep.subr.bf16.mxu0 0
          %818 = vmatpush1.bf16.msra.mxu0 0
          %819 = vmatprep.subr.bf16.mxu0 0
          %820 = vmatpush1.bf16.msra.mxu0 0
          %821 = vmatprep.subr.bf16.mxu0 0
          %822 = vmatpush1.bf16.msra.mxu0 0
          %823 = vmatprep.subr.bf16.mxu0 0
          %824 = vmatpush1.bf16.msra.mxu0 0
          %825 = vmatprep.subr.bf16.mxu0 0
          %826 = vmatpush1.bf16.msra.mxu0 0
          %827 = vmatprep.subr.bf16.mxu0 0
          %828 = vmatpush1.bf16.msra.mxu0 0
          %829 = vmatprep.subr.bf16.mxu0 0
          %830 = vmatpush1.bf16.msra.mxu0 0
          %831 = vmatprep.subr.bf16.mxu0 0
          %832 = vmatpush1.bf16.msra.mxu0 0
          %833 = vmatprep.subr.bf16.mxu0 0
          %834 = vmatpush1.bf16.msra.mxu0 0
          %835 = vmatprep.subr.bf16.mxu0 0
          %836 = vmatpush1.bf16.msra.mxu0 0
          %837 = vmatprep.subr.bf16.mxu0 0
          %838 = vmatpush1.bf16.msra.mxu0 0
          %839 = vmatprep.subr.bf16.mxu0 0
          %840 = vmatpush1.bf16.msra.mxu0 0
          %841 = vmatprep.subr.bf16.mxu0 0
          %842 = vmatpush1.bf16.msra.mxu0 0
          %843 = vmatprep.mubr.bf16.mxu0 0
          %844 = vmatmul.mubr.bf16.gmra.mrb[0].mxu0 %v806
          %v845 = vpop.f32.mrb[0].mxu0
          %v846 = vadd.f32 0.0, %v845
          %v847 = vpop.f32.mrb[0].mxu0
          %v848 = vpop.f32.mrb[0].mxu0
          %v849 = vpop.f32.mrb[0].mxu0
          %850 = vdwg.mxu0
          %v851 = vadd.f32 %v706, %v776
          %v852 = vadd.f32 %v707, %v846
          %853 = vst.msk [vmem:[#allocation4] sm:$0xff] %vm490, %v851
          %854 = vst.msk [vmem:[#allocation4 + $0x8] sm:$0xff] %vm490, %v852
          %855 = vst.msk [vmem:[#allocation2] sm:$0xff] %vm691, %v655
          %856 = vst.msk [vmem:[#allocation2 + $0x8] sm:$0xff] %vm691, %v656
        $region52: #{base_model_forward.12} parent=31 // pred_fallthru
          _
        // Predicated region
        $region53: #{base_model_forward.12} parent=31 // pred_check
          %p857 = pneg %p327
        $region54: #{base_model_forward.12} parent=31 // pred_check_branch
          %859 = sbr.rel (%p857) target = $region56
        $region55: #{base_model_forward.12} parent=31 // pred_region
          %v860 = vld [vmem:[#allocation4] sm:$0xff]
          %v861 = vld [vmem:[#allocation4 + $0x8] sm:$0xff]
          %v862 = vld [vmem:[#allocation3] sm:$0xff]
          %v863 = vld [vmem:[#allocation3 + $0x8] sm:$0xff]
          %v864 = vrcp.pop %v862
          %v865 = vrcp.pop %v863
          %867 = vset.pattern.permute.xlu0 0
          %868 = vperm.xlu0 %867, %v864
          %v869 = vpop.permute.xlu0 %868
          %872 = vset.pattern.permute.xlu0 0
          %873 = vperm.xlu0 %872, %v865
          %v874 = vpop.permute.xlu0 %873
          %v876 = vmul.f32 %v860, %v869
          %v877 = vmul.f32 %v861, %v874
          %v878 = vcombine.high %v876, 0.0
          %v880 = vunpack.c.l.s4 1983009808
          %v881 = vunpack.c.0.s8 %v880
          %v882 = vlaneseq
          %v883 = vshrl.u32 %v882, 7
          %v884 = vsub.s32 %v881, %v883
          %v885 = vrot.slane %v876, %v884
          %v887 = vunpack.c.l.s4 1983009808
          %v888 = vunpack.c.0.s8 %v887
          %v889 = vlaneseq
          %v890 = vshrl.u32 %v889, 7
          %v891 = vsub.s32 %v888, %v890
          %v892 = vrot.slane %v878, %v891
          %v893 = vcombine.high %v877, 0.0
          %v895 = vunpack.c.l.s4 1983009808
          %v896 = vunpack.c.0.s8 %v895
          %v897 = vlaneseq
          %v898 = vshrl.u32 %v897, 7
          %v899 = vsub.s32 %v896, %v898
          %v900 = vrot.slane %v877, %v899
          %v902 = vunpack.c.l.s4 1983009808
          %v903 = vunpack.c.0.s8 %v902
          %v904 = vlaneseq
          %v905 = vshrl.u32 %v904, 7
          %v906 = vsub.s32 %v903, %v905
          %v907 = vrot.slane %v893, %v906
          %v908 = vcombine.low %v885, %v900
          %v909 = vcombine.high %v885, %v900
          %v911 = vunpack.c.l.s4 1934713408
          %v912 = vunpack.c.0.s8 %v911
          %v913 = vlaneseq
          %v914 = vshrl.u32 %v913, 7
          %v915 = vsub.s32 %v912, %v914
          %v916 = vrot.slane %v908, %v915
          %v918 = vunpack.c.l.s4 1934713408
          %v919 = vunpack.c.0.s8 %v918
          %v920 = vlaneseq
          %v921 = vshrl.u32 %v920, 7
          %v922 = vsub.s32 %v919, %v921
          %v923 = vrot.slane %v909, %v922
          %v924 = vcombine.low %v892, %v907
          %v925 = vcombine.high %v892, %v907
          %v927 = vunpack.c.l.s4 1934713408
          %v928 = vunpack.c.0.s8 %v927
          %v929 = vlaneseq
          %v930 = vshrl.u32 %v929, 7
          %v931 = vsub.s32 %v928, %v930
          %v932 = vrot.slane %v924, %v931
          %v934 = vunpack.c.l.s4 1934713408
          %v935 = vunpack.c.0.s8 %v934
          %v936 = vlaneseq
          %v937 = vshrl.u32 %v936, 7
          %v938 = vsub.s32 %v935, %v937
          %v939 = vrot.slane %v925, %v938
          %v940 = vcombine.high %v916, 0.0
          %v941 = vcombine.high %v923, 0.0
          %v942 = vcombine.high %v932, 0.0
          %v943 = vcombine.high %v939, 0.0
          %v944 = vpack.c.bf16 %v916, %v916
          %v945 = vpack.c.bf16 %v940, %v940
          %v946 = vpack.c.bf16 %v923, %v923
          %v947 = vpack.c.bf16 %v941, %v941
          %v948 = vpack.c.bf16 %v932, %v932
          %v949 = vpack.c.bf16 %v942, %v942
          %v950 = vpack.c.bf16 %v939, %v939
          %v951 = vpack.c.bf16 %v943, %v943
          %vm952 = vcmask 122880
          %953 = vst.msk [vmem:[%s321] sm:$0x1] %vm952, %v944
          %954 = vst.msk [vmem:[%s321 + $0x1] sm:$0x1] %vm952, %v945
          %955 = vst.msk [vmem:[%s321 + $0x2] sm:$0x1] %vm952, %v946
          %956 = vst.msk [vmem:[%s321 + $0x3] sm:$0x1] %vm952, %v947
          %957 = vst.msk [vmem:[%s321 + $0x4] sm:$0x1] %vm952, %v948
          %958 = vst.msk [vmem:[%s321 + $0x5] sm:$0x1] %vm952, %v949
          %959 = vst.msk [vmem:[%s321 + $0x6] sm:$0x1] %vm952, %v950
          %960 = vst.msk [vmem:[%s321 + $0x7] sm:$0x1] %vm952, %v951
        $region56: #{base_model_forward.12} parent=31 // pred_fallthru
          _
        %s961 = sand.u32 %s151, 1
        %s962 = scalar_lea.sflag [#allocation7], %s961
        %s963 = sand.u32 %s151, 1
        %s964 = smul.addr %s963, 8
        %s965 = scalar_lea.vmem [#allocation11], %s964
        // Predicated region
        $region57: #{base_model_forward.12} parent=31 // pred_check
          %p966 = pneg %p161
        $region58: #{base_model_forward.12} parent=31 // pred_check_branch
          %968 = sbr.rel (%p966) target = $region60
        $region59: #{base_model_forward.12} parent=31 // pred_region
          %s969 = smul.u32 8, %s31
          %s971 = ssub.s32 128, 128
          %972 = vsyncadd %s962, %s971
          %s973 = sadd.s32 %s30, %s969
          %s974 = smul.addr %s29, 8
          %s975 = sadd.s32 %s973, %s974
          %s976 = smul.addr %s975, 16
          %s977 = scalar_lea.hbm %s3, %s976
          %s978 = sshll.u32 %s965, 4
          %s979 = int_to_ptr.vmem [resolvable:$true] %s978
          %984 = dma.vmem_to_hbm [thread:$0]  %s979, 128, %s977, %s962, 16, 16, 1
        $region60: #{base_model_forward.12} parent=31 // pred_fallthru
          _
      $region32: #{base_model_forward.12} parent=5 // pred_fallthru
        _
      %p985 = scmp.le.s32.totalorder 2, %s18
      // Predicated region
      $region61: #{base_model_forward.12} parent=5 // pred_check
        %p986 = pneg %p985
      $region62: #{base_model_forward.12} parent=5 // pred_check_branch
        %988 = sbr.rel (%p986) target = $region64
      $region63: #{base_model_forward.12} parent=5 // pred_region
        %s989 = ssub.s32 %s18, 2
        // Predicated region
        $region65: #{base_model_forward.12} parent=63 // pred_check
          %p990 = pneg %p167
        $region66: #{base_model_forward.12} parent=63 // pred_check_branch
          %992 = sbr.rel (%p990) target = $region68
        $region67: #{base_model_forward.12} parent=63 // pred_region
          %s993 = sand.u32 %s152, 1
          %s994 = scalar_lea.sflag [#allocation7], %s993
          %s995 = sand.u32 %s152, 1
          %s996 = smul.addr %s995, 8
          %s997 = scalar_lea.vmem [#allocation11], %s996
          %998 = dma.done %s994, 128
        $region68: #{base_model_forward.12} parent=63 // pred_fallthru
          _
      $region64: #{base_model_forward.12} parent=5 // pred_fallthru
        _
    $region6: #{base_model_forward.12} parent=1 // loop_footer
      %s22 = sadd.s32 1, %s18
    $region7: #{base_model_forward.12} parent=1 // loop_footer_branch
      %17 = sbr.rel target = $region3
    $region8: #{base_model_forward.12} parent=1 // loop_exit
      _
    %999 = vsyncpa [#allocation6], 1
    %s1000 = scalar_lea.sflag [#allocation6], 1
    %1001 = vsyncpa %s1000, 1
    %1002 = vsyncpa [#allocation9], 1
    %s1003 = scalar_lea.sflag [#allocation9], 1
    %1004 = vsyncpa %s1003, 1
    %1005 = vsyncpa [#allocation7], 1
    %s1006 = scalar_lea.sflag [#allocation7], 1
    %1007 = vsyncpa %s1006, 1

// kernel: base_model_forward.21
$region0: #{base_model_forward.21}
  #allocation0 [shape = 'u32[]', space=smem, size = 0x4, offset = 0x4, fixed_abs, tag = 'smem constant byte address 0x4 - core index']
  #allocation1 [shape = 'u32[144,128]{1,0:T(1,128)}', space=vmem, size = 0x12000, scoped, tag = 'internal scratch']
  %s0 = inlined_call_operand.hbm [shape: f32[16,32], index: 0, kind: input, shape index: {}]
  %s1 = inlined_call_operand.hbm [shape: f32[1,32], index: 1, kind: input, shape index: {}]
  %s2 = inlined_call_operand.hbm [shape: f32[1,32], index: 2, kind: input, shape index: {}]
  %s3 = inlined_call_operand.hbm [shape: bf16[64,32], index: 3, kind: input, shape index: {}]
  %s4 = inlined_call_operand.hbm [shape: f32[16,64], index: 4, kind: output, shape index: {}]
  %s5 = sld [smem:[#allocation0]]
  $region42: #{base_model_forward.21} parent=0
    _
  %s7 = ssub.s32 1, %s5
  %s8 = scalar_select 0, %s7, %s5
  $region1: #{base_model_forward.21} parent=0
    #allocation2 [shape = 'u8[8192]{0}', space=vmem, size = 0x2000, scoped, tag = 'input window, operand 0, single buffered']
    #allocation3 [shape = 's32[1]{0}', space=sflag, size = 0x4, scoped, tag = 'scoped memory for base_model_forward.21']
    #allocation4 [shape = 's32[1]{0}', space=sflag, size = 0x4, scoped, tag = 'scoped memory for base_model_forward.21']
    #allocation5 [shape = 'u8[512]{0}', space=vmem, size = 0x400, scoped, tag = 'input window, operand 1, single buffered']
    #allocation6 [shape = 's32[1]{0}', space=sflag, size = 0x4, scoped, tag = 'scoped memory for base_model_forward.21']
    #allocation7 [shape = 'u8[512]{0}', space=vmem, size = 0x400, scoped, tag = 'input window, operand 2, single buffered']
    #allocation8 [shape = 'u8[16384]{0}', space=vmem, size = 0x4000, scoped, tag = 'input window, operand 3, single buffered']
    #allocation9 [shape = 's32[1]{0}', space=sflag, size = 0x4, scoped, tag = 'scoped memory for base_model_forward.21']
    #allocation10 [shape = 'u8[8192]{0}', space=vmem, size = 0x2000, scoped, tag = 'output window, operand 0, single buffered']
    %9 = vsyncpa [#allocation3], 0
    %10 = vsyncpa [#allocation6], 0
    %11 = vsyncpa [#allocation9], 0
    %12 = vsyncpa [#allocation4], 0
    // Predicated region
    $region2: #{base_model_forward.21} parent=1 // pred_check
      _
    $region3: #{base_model_forward.21} parent=1 // pred_check_branch
      %14 = sbr.rel (0) target = $region5
    $region4: #{base_model_forward.21} parent=1 // pred_region
      %s16 = ssub.s32 256, 256
      %17 = vsyncadd [#allocation3], %s16
      %s18 = sshll.u32 [#allocation2], 4
      %s19 = int_to_ptr.vmem [resolvable:$true] %s18
      %24 = dma.hbm_to_vmem [thread:$0]  %s0, 256, %s19, [#allocation3], 128, 128, 8
    $region5: #{base_model_forward.21} parent=1 // pred_fallthru
      _
    // Predicated region
    $region6: #{base_model_forward.21} parent=1 // pred_check
      _
    $region7: #{base_model_forward.21} parent=1 // pred_check_branch
      %26 = sbr.rel (0) target = $region9
    $region8: #{base_model_forward.21} parent=1 // pred_region
      %s28 = ssub.s32 16, 16
      %29 = vsyncadd [#allocation6], %s28
      %s31 = sshll.u32 [#allocation5], 4
      %s32 = int_to_ptr.vmem [resolvable:$true] %s31
      %34 = dma.hbm_to_vmem [thread:$0]  %s1, 16, %s32, [#allocation6]
    $region9: #{base_model_forward.21} parent=1 // pred_fallthru
      _
    // Predicated region
    $region10: #{base_model_forward.21} parent=1 // pred_check
      _
    $region11: #{base_model_forward.21} parent=1 // pred_check_branch
      %36 = sbr.rel (0) target = $region13
    $region12: #{base_model_forward.21} parent=1 // pred_region
      %s38 = ssub.s32 16, 16
      %39 = vsyncadd [#allocation6], %s38
      %s41 = sshll.u32 [#allocation7], 4
      %s42 = int_to_ptr.vmem [resolvable:$true] %s41
      %44 = dma.hbm_to_vmem [thread:$0]  %s2, 16, %s42, [#allocation6]
    $region13: #{base_model_forward.21} parent=1 // pred_fallthru
      _
    // Predicated region
    $region14: #{base_model_forward.21} parent=1 // pred_check
      _
    $region15: #{base_model_forward.21} parent=1 // pred_check_branch
      %46 = sbr.rel (0) target = $region17
    $region16: #{base_model_forward.21} parent=1 // pred_region
      %s48 = ssub.s32 512, 512
      %49 = vsyncadd [#allocation9], %s48
      %s50 = sshll.u32 [#allocation8], 4
      %s51 = int_to_ptr.vmem [resolvable:$true] %s50
      %56 = dma.hbm_to_vmem [thread:$0]  %s3, 512, %s51, [#allocation9], 64, 64, 4
    $region17: #{base_model_forward.21} parent=1 // pred_fallthru
      _
    // Predicated region
    $region18: #{base_model_forward.21} parent=1 // pred_check
      _
    $region19: #{base_model_forward.21} parent=1 // pred_check_branch
      %58 = sbr.rel (0) target = $region21
    $region20: #{base_model_forward.21} parent=1 // pred_region
      %59 = dma.done [#allocation3], 256
    $region21: #{base_model_forward.21} parent=1 // pred_fallthru
      _
    // Predicated region
    $region22: #{base_model_forward.21} parent=1 // pred_check
      _
    $region23: #{base_model_forward.21} parent=1 // pred_check_branch
      %61 = sbr.rel (0) target = $region25
    $region24: #{base_model_forward.21} parent=1 // pred_region
      %62 = dma.done [#allocation6], 16
    $region25: #{base_model_forward.21} parent=1 // pred_fallthru
      _
    // Predicated region
    $region26: #{base_model_forward.21} parent=1 // pred_check
      _
    $region27: #{base_model_forward.21} parent=1 // pred_check_branch
      %64 = sbr.rel (0) target = $region29
    $region28: #{base_model_forward.21} parent=1 // pred_region
      %65 = dma.done [#allocation6], 16
    $region29: #{base_model_forward.21} parent=1 // pred_fallthru
      _
    // Predicated region
    $region30: #{base_model_forward.21} parent=1 // pred_check
      _
    $region31: #{base_model_forward.21} parent=1 // pred_check_branch
      %67 = sbr.rel (0) target = $region33
    $region32: #{base_model_forward.21} parent=1 // pred_region
      %68 = dma.done [#allocation9], 512
    $region33: #{base_model_forward.21} parent=1 // pred_fallthru
      _
    %v70 = vld [vmem:[#allocation2] sm:$0xff]
    %v71 = vld [vmem:[#allocation2 + $0x8] sm:$0xff]
    %vm72 = vcmask 261120
    %v73 = vsel %vm72, %v70, 0.0
    %74 = vadd.xlane.f32.xlu0 %v73
    %v75 = vpop.xlane.xlu0 %74
    %v76 = vsel %vm72, %v71, 0.0
    %77 = vadd.xlane.f32.xlu0 %v76
    %v78 = vpop.xlane.xlu0 %77
    %v79 = vrcp.pop 32.0
    %v80 = vmul.f32 %v75, %v79
    %v81 = vmul.f32 %v78, %v79
    %v82 = vsub.f32 %v70, %v80
    %v83 = vsub.f32 %v71, %v81
    %v84 = vmul.f32 %v82, %v82
    %v85 = vmul.f32 %v83, %v83
    %v86 = vsel %vm72, %v84, 0.0
    %87 = vadd.xlane.f32.xlu0 %v86
    %v88 = vpop.xlane.xlu0 %87
    %v89 = vsel %vm72, %v85, 0.0
    %90 = vadd.xlane.f32.xlu0 %v89
    %v91 = vpop.xlane.xlu0 %90
    %v92 = vmul.f32 %v88, %v79
    %v93 = vmul.f32 %v91, %v79
    %v94 = vadd.f32 %v92, 1e-05
    %v95 = vadd.f32 %v93, 1e-05
    %v96 = vrsqrt.pop %v94
    %v97 = vrsqrt.pop %v95
    %v98 = vmul.f32 %v82, %v96
    %v99 = vmul.f32 %v83, %v97
    %v100 = vld [vmem:[#allocation5] sm:$0x1]
    %v102 = vlaneseq
    %v103 = vshrl.u32 %v102, 7
    %v104 = vsub.s32 0, %v103
    %v105 = vrot.slane %v100, %v104
    %v107 = vmul.f32 %v98, %v105
    %v108 = vmul.f32 %v99, %v105
    %v109 = vld [vmem:[#allocation7] sm:$0x1]
    %v111 = vlaneseq
    %v112 = vshrl.u32 %v111, 7
    %v113 = vsub.s32 0, %v112
    %v114 = vrot.slane %v109, %v113
    %v116 = vadd.f32 %v107, %v114
    %v117 = vadd.f32 %v108, %v114
    %v118 = vpack.c.bf16 %v117, %v116
    %v119 = vld [vmem:[#allocation8] sm:$0xf]
    %v120 = vld [vmem:[#allocation8 + $0x4] sm:$0xf]
    %v121 = vld [vmem:[#allocation8 + $0x8] sm:$0xf]
    %v122 = vld [vmem:[#allocation8 + $0xc] sm:$0xf]
    %v123 = vld [vmem:[#allocation8 + $0x10] sm:$0xf]
    %v124 = vld [vmem:[#allocation8 + $0x14] sm:$0xf]
    %v125 = vld [vmem:[#allocation8 + $0x18] sm:$0xf]
    %v126 = vld [vmem:[#allocation8 + $0x1c] sm:$0xf]
    %v135 = vunpack.c.l.b16 %v119
    %v136 = vunpack.c.l.b16 %v120
    %v137 = vunpack.c.l.b16 %v121
    %v138 = vunpack.c.l.b16 %v122
    %v139 = vunpack.c.l.b16 %v123
    %v140 = vunpack.c.l.b16 %v124
    %v141 = vunpack.c.l.b16 %v125
    %v142 = vunpack.c.l.b16 %v126
    %v143 = vpack.c.b16 %v136, %v135
    %v144 = vpack.c.b16 %v138, %v137
    %v145 = vpack.c.b16 %v140, %v139
    %v146 = vpack.c.b16 %v142, %v141
    %v148 = vsel %vm72, %v118, 0
    %v151 = vsel %vm72, %v143, 0
    %v154 = vsel %vm72, %v144, 0
    %v157 = vsel %vm72, %v145, 0
    %v160 = vsel %vm72, %v146, 0
    %162 = vmatprep.subr.bf16.mxu0 0
    %163 = vmatpush1.bf16.xpose.msra.mxu0 %v151
    %164 = vmatprep.subr.bf16.mxu0 0
    %165 = vmatpush1.bf16.xpose.msra.mxu0 %v154
    %166 = vmatprep.subr.bf16.mxu0 0
    %167 = vmatpush1.bf16.xpose.msra.mxu0 %v157
    %168 = vmatprep.subr.bf16.mxu0 0
    %169 = vmatpush1.bf16.xpose.msra.mxu0 %v160
    %170 = vmatprep.subr.bf16.mxu0 0
    %171 = vmatpush1.bf16.xpose.msra.mxu0 0
    %172 = vmatprep.subr.bf16.mxu0 0
    %173 = vmatpush1.bf16.xpose.msra.mxu0 0
    %174 = vmatprep.subr.bf16.mxu0 0
    %175 = vmatpush1.bf16.xpose.msra.mxu0 0
    %176 = vmatprep.subr.bf16.mxu0 0
    %177 = vmatpush1.bf16.xpose.msra.mxu0 0
    %178 = vmatprep.subr.bf16.mxu0 0
    %179 = vmatpush1.bf16.xpose.msra.mxu0 0
    %180 = vmatprep.subr.bf16.mxu0 0
    %181 = vmatpush1.bf16.xpose.msra.mxu0 0
    %182 = vmatprep.subr.bf16.mxu0 0
    %183 = vmatpush1.bf16.xpose.msra.mxu0 0
    %184 = vmatprep.subr.bf16.mxu0 0
    %185 = vmatpush1.bf16.xpose.msra.mxu0 0
    %186 = vmatprep.subr.bf16.mxu0 0
    %187 = vmatpush1.bf16.xpose.msra.mxu0 0
    %188 = vmatprep.subr.bf16.mxu0 0
    %189 = vmatpush1.bf16.xpose.msra.mxu0 0
    %190 = vmatprep.subr.bf16.mxu0 0
    %191 = vmatpush1.bf16.xpose.msra.mxu0 0
    %192 = vmatprep.subr.bf16.mxu0 0
    %193 = vmatpush1.bf16.xpose.msra.mxu0 0
    %194 = vmatprep.mubr.bf16.mxu0 0
    %195 = vmatmul.mubr.bf16.gmra.mrb[0].mxu0 %v148
    %v196 = vpop.f32.mrb[0].mxu0
    %v197 = vadd.f32 0.0, %v196
    %v198 = vpop.f32.mrb[0].mxu0
    %v199 = vpop.f32.mrb[0].mxu0
    %v200 = vadd.f32 0.0, %v199
    %v201 = vpop.f32.mrb[0].mxu0
    %202 = vdwg.mxu0
    %vm203 = vcmask 523264
    %204 = vst.msk [vmem:[#allocation10] sm:$0xff] %vm203, %v197
    %205 = vst.msk [vmem:[#allocation10 + $0x8] sm:$0xff] %vm203, %v200
    // Predicated region
    $region34: #{base_model_forward.21} parent=1 // pred_check
      _
    $region35: #{base_model_forward.21} parent=1 // pred_check_branch
      %207 = sbr.rel (0) target = $region37
    $region36: #{base_model_forward.21} parent=1 // pred_region
      %s209 = ssub.s32 256, 256
      %210 = vsyncadd [#allocation4], %s209
      %s211 = sshll.u32 [#allocation10], 4
      %s212 = int_to_ptr.vmem [resolvable:$true] %s211
      %217 = dma.vmem_to_hbm [thread:$0]  %s212, 256, %s4, [#allocation4], 128, 128, 8
    $region37: #{base_model_forward.21} parent=1 // pred_fallthru
      _
    // Predicated region
    $region38: #{base_model_forward.21} parent=1 // pred_check
      _
    $region39: #{base_model_forward.21} parent=1 // pred_check_branch
      %219 = sbr.rel (0) target = $region41
    $region40: #{base_model_forward.21} parent=1 // pred_region
      %220 = dma.done [#allocation4], 256
    $region41: #{base_model_forward.21} parent=1 // pred_fallthru
      _
    %221 = vsyncpa [#allocation3], 1
    %222 = vsyncpa [#allocation6], 1
    %223 = vsyncpa [#allocation9], 1
    %224 = vsyncpa [#allocation4], 1

// kernel: base_model_forward.15
$region0: #{base_model_forward.15}
  #allocation0 [shape = 'u32[]', space=smem, size = 0x4, offset = 0x4, fixed_abs, tag = 'smem constant byte address 0x4 - core index']
  #allocation1 [shape = 'u32[144,128]{1,0:T(1,128)}', space=vmem, size = 0x12000, scoped, tag = 'internal scratch']
  #allocation2 [shape = 'f32[16,32]{1,0:T(8,128)}', space=vmem, size = 0x2000, scoped, tag = 'scratch operand']
  %s0 = inlined_call_operand.hbm [shape: bf16[16,128], index: 0, kind: input, shape index: {}]
  %s1 = inlined_call_operand.hbm [shape: bf16[128,32], index: 1, kind: input, shape index: {}]
  %s2 = inlined_call_operand.hbm [shape: f32[1,32], index: 2, kind: input, shape index: {}]
  %s3 = inlined_call_operand.hbm [shape: f32[16,32], index: 3, kind: input, shape index: {}]
  %s4 = inlined_call_operand.hbm [shape: f32[16,32], index: 4, kind: output, shape index: {}]
  %s5 = sld [smem:[#allocation0]]
  $region50: #{base_model_forward.15} parent=0
    _
  %s7 = ssub.s32 1, %s5
  %s8 = scalar_select 0, %s7, %s5
  $region1: #{base_model_forward.15} parent=0
    #allocation3 [shape = 'u8[4096]{0}', space=vmem, size = 0x1000, scoped, tag = 'input window, operand 0, single buffered']
    #allocation4 [shape = 's32[1]{0}', space=sflag, size = 0x4, scoped, tag = 'scoped memory for base_model_forward.15']
    #allocation5 [shape = 's32[1]{0}', space=sflag, size = 0x4, scoped, tag = 'scoped memory for base_model_forward.15']
    #allocation6 [shape = 'u8[32768]{0}', space=vmem, size = 0x8000, scoped, tag = 'input window, operand 1, single buffered']
    #allocation7 [shape = 's32[1]{0}', space=sflag, size = 0x4, scoped, tag = 'scoped memory for base_model_forward.15']
    #allocation8 [shape = 'u8[512]{0}', space=vmem, size = 0x400, scoped, tag = 'input window, operand 2, single buffered']
    #allocation9 [shape = 'u8[8192]{0}', space=vmem, size = 0x2000, scoped, tag = 'input window, operand 3, single buffered']
    #allocation10 [shape = 's32[1]{0}', space=sflag, size = 0x4, scoped, tag = 'scoped memory for base_model_forward.15']
    #allocation11 [shape = 'u8[8192]{0}', space=vmem, size = 0x2000, scoped, tag = 'output window, operand 0, single buffered']
    %9 = vsyncpa [#allocation4], 0
    %10 = vsyncpa [#allocation7], 0
    %11 = vsyncpa [#allocation10], 0
    %12 = vsyncpa [#allocation5], 0
    // Predicated region
    $region2: #{base_model_forward.15} parent=1 // pred_check
      _
    $region3: #{base_model_forward.15} parent=1 // pred_check_branch
      %14 = sbr.rel (0) target = $region5
    $region4: #{base_model_forward.15} parent=1 // pred_region
      %s16 = ssub.s32 128, 128
      %17 = vsyncadd [#allocation4], %s16
      %s18 = sshll.u32 [#allocation3], 4
      %s19 = int_to_ptr.vmem [resolvable:$true] %s18
      %24 = dma.hbm_to_vmem [thread:$0]  %s0, 128, %s19, [#allocation4], 64, 64, 4
    $region5: #{base_model_forward.15} parent=1 // pred_fallthru
      _
    // Predicated region
    $region6: #{base_model_forward.15} parent=1 // pred_check
      _
    $region7: #{base_model_forward.15} parent=1 // pred_check_branch
      %26 = sbr.rel (0) target = $region9
    $region8: #{base_model_forward.15} parent=1 // pred_region
      %s28 = ssub.s32 1024, 1024
      %29 = vsyncadd [#allocation7], %s28
      %s30 = sshll.u32 [#allocation6], 4
      %s31 = int_to_ptr.vmem [resolvable:$true] %s30
      %36 = dma.hbm_to_vmem [thread:$0]  %s1, 1024, %s31, [#allocation7], 64, 64, 4
    $region9: #{base_model_forward.15} parent=1 // pred_fallthru
      _
    // Predicated region
    $region10: #{base_model_forward.15} parent=1 // pred_check
      _
    $region11: #{base_model_forward.15} parent=1 // pred_check_branch
      %38 = sbr.rel (0) target = $region13
    $region12: #{base_model_forward.15} parent=1 // pred_region
      %s40 = ssub.s32 16, 16
      %41 = vsyncadd [#allocation7], %s40
      %s43 = sshll.u32 [#allocation8], 4
      %s44 = int_to_ptr.vmem [resolvable:$true] %s43
      %46 = dma.hbm_to_vmem [thread:$0]  %s2, 16, %s44, [#allocation7]
    $region13: #{base_model_forward.15} parent=1 // pred_fallthru
      _
    // Predicated region
    $region14: #{base_model_forward.15} parent=1 // pred_check
      _
    $region15: #{base_model_forward.15} parent=1 // pred_check_branch
      %48 = sbr.rel (0) target = $region17
    $region16: #{base_model_forward.15} parent=1 // pred_region
      %s50 = ssub.s32 256, 256
      %51 = vsyncadd [#allocation10], %s50
      %s52 = sshll.u32 [#allocation9], 4
      %s53 = int_to_ptr.vmem [resolvable:$true] %s52
      %58 = dma.hbm_to_vmem [thread:$0]  %s3, 256, %s53, [#allocation10], 128, 128, 8
    $region17: #{base_model_forward.15} parent=1 // pred_fallthru
      _
    // Predicated region
    $region18: #{base_model_forward.15} parent=1 // pred_check
      _
    $region19: #{base_model_forward.15} parent=1 // pred_check_branch
      %60 = sbr.rel (0) target = $region21
    $region20: #{base_model_forward.15} parent=1 // pred_region
      %61 = dma.done [#allocation4], 128
    $region21: #{base_model_forward.15} parent=1 // pred_fallthru
      _
    // Predicated region
    $region22: #{base_model_forward.15} parent=1 // pred_check
      _
    $region23: #{base_model_forward.15} parent=1 // pred_check_branch
      %63 = sbr.rel (0) target = $region25
    $region24: #{base_model_forward.15} parent=1 // pred_region
      %64 = dma.done [#allocation7], 1024
    $region25: #{base_model_forward.15} parent=1 // pred_fallthru
      _
    // Predicated region
    $region26: #{base_model_forward.15} parent=1 // pred_check
      _
    $region27: #{base_model_forward.15} parent=1 // pred_check_branch
      %66 = sbr.rel (0) target = $region29
    $region28: #{base_model_forward.15} parent=1 // pred_region
      %67 = dma.done [#allocation7], 16
    $region29: #{base_model_forward.15} parent=1 // pred_fallthru
      _
    // Predicated region
    $region30: #{base_model_forward.15} parent=1 // pred_check
      _
    $region31: #{base_model_forward.15} parent=1 // pred_check_branch
      %69 = sbr.rel (0) target = $region33
    $region32: #{base_model_forward.15} parent=1 // pred_region
      %70 = dma.done [#allocation10], 256
    $region33: #{base_model_forward.15} parent=1 // pred_fallthru
      _
    %p72 = scmp.eq.s32.totalorder 0, 0
    // Predicated region
    $region34: #{base_model_forward.15} parent=1 // pred_check
      %p73 = pneg %p72
    $region35: #{base_model_forward.15} parent=1 // pred_check_branch
      %75 = sbr.rel (%p73) target = $region37
    $region36: #{base_model_forward.15} parent=1 // pred_region
      %vm76 = vcmask 261120
      %77 = vst.msk [vmem:[#allocation2] sm:$0xff] %vm76, 0.0
      %78 = vst.msk [vmem:[#allocation2 + $0x8] sm:$0xff] %vm76, 0.0
    $region37: #{base_model_forward.15} parent=1 // pred_fallthru
      _
    %v79 = vld [vmem:[#allocation2] sm:$0xff]
    %v80 = vld [vmem:[#allocation2 + $0x8] sm:$0xff]
    %v81 = vld [vmem:[#allocation3] sm:$0xf]
    %v82 = vld [vmem:[#allocation3 + $0x4] sm:$0xf]
    %v83 = vld [vmem:[#allocation6] sm:$0xf]
    %v84 = vld [vmem:[#allocation6 + $0x4] sm:$0xf]
    %v85 = vld [vmem:[#allocation6 + $0x8] sm:$0xf]
    %v86 = vld [vmem:[#allocation6 + $0xc] sm:$0xf]
    %v87 = vld [vmem:[#allocation6 + $0x10] sm:$0xf]
    %v88 = vld [vmem:[#allocation6 + $0x14] sm:$0xf]
    %v89 = vld [vmem:[#allocation6 + $0x18] sm:$0xf]
    %v90 = vld [vmem:[#allocation6 + $0x1c] sm:$0xf]
    %v91 = vld [vmem:[#allocation6 + $0x20] sm:$0xf]
    %v92 = vld [vmem:[#allocation6 + $0x24] sm:$0xf]
    %v93 = vld [vmem:[#allocation6 + $0x28] sm:$0xf]
    %v94 = vld [vmem:[#allocation6 + $0x2c] sm:$0xf]
    %v95 = vld [vmem:[#allocation6 + $0x30] sm:$0xf]
    %v96 = vld [vmem:[#allocation6 + $0x34] sm:$0xf]
    %v97 = vld [vmem:[#allocation6 + $0x38] sm:$0xf]
    %v98 = vld [vmem:[#allocation6 + $0x3c] sm:$0xf]
    %v101 = vunpack.c.l.b16 %v81
    %v102 = vunpack.c.l.b16 %v82
    %v103 = vpack.c.b16 %v102, %v101
    %v121 = vunpack.c.l.b16 %v83
    %v122 = vunpack.c.l.b16 %v84
    %v123 = vunpack.c.l.b16 %v85
    %v124 = vunpack.c.l.b16 %v86
    %v125 = vunpack.c.l.b16 %v87
    %v126 = vunpack.c.l.b16 %v88
    %v127 = vunpack.c.l.b16 %v89
    %v128 = vunpack.c.l.b16 %v90
    %v129 = vunpack.c.l.b16 %v91
    %v130 = vunpack.c.l.b16 %v92
    %v131 = vunpack.c.l.b16 %v93
    %v132 = vunpack.c.l.b16 %v94
    %v133 = vunpack.c.l.b16 %v95
    %v134 = vunpack.c.l.b16 %v96
    %v135 = vunpack.c.l.b16 %v97
    %v136 = vunpack.c.l.b16 %v98
    %v137 = vpack.c.b16 %v122, %v121
    %v138 = vpack.c.b16 %v124, %v123
    %v139 = vpack.c.b16 %v126, %v125
    %v140 = vpack.c.b16 %v128, %v127
    %v141 = vpack.c.b16 %v130, %v129
    %v142 = vpack.c.b16 %v132, %v131
    %v143 = vpack.c.b16 %v134, %v133
    %v144 = vpack.c.b16 %v136, %v135
    %153 = vmatprep.subr.bf16.mxu0 0
    %154 = vmatpush1.bf16.msra.mxu0 %v137
    %155 = vmatprep.subr.bf16.mxu0 0
    %156 = vmatpush1.bf16.msra.mxu0 %v138
    %157 = vmatprep.subr.bf16.mxu0 0
    %158 = vmatpush1.bf16.msra.mxu0 %v139
    %159 = vmatprep.subr.bf16.mxu0 0
    %160 = vmatpush1.bf16.msra.mxu0 %v140
    %161 = vmatprep.subr.bf16.mxu0 0
    %162 = vmatpush1.bf16.msra.mxu0 %v141
    %163 = vmatprep.subr.bf16.mxu0 0
    %164 = vmatpush1.bf16.msra.mxu0 %v142
    %165 = vmatprep.subr.bf16.mxu0 0
    %166 = vmatpush1.bf16.msra.mxu0 %v143
    %167 = vmatprep.subr.bf16.mxu0 0
    %168 = vmatpush1.bf16.msra.mxu0 %v144
    %169 = vmatprep.subr.bf16.mxu0 0
    %170 = vmatpush1.bf16.msra.mxu0 0
    %171 = vmatprep.subr.bf16.mxu0 0
    %172 = vmatpush1.bf16.msra.mxu0 0
    %173 = vmatprep.subr.bf16.mxu0 0
    %174 = vmatpush1.bf16.msra.mxu0 0
    %175 = vmatprep.subr.bf16.mxu0 0
    %176 = vmatpush1.bf16.msra.mxu0 0
    %177 = vmatprep.subr.bf16.mxu0 0
    %178 = vmatpush1.bf16.msra.mxu0 0
    %179 = vmatprep.subr.bf16.mxu0 0
    %180 = vmatpush1.bf16.msra.mxu0 0
    %181 = vmatprep.subr.bf16.mxu0 0
    %182 = vmatpush1.bf16.msra.mxu0 0
    %183 = vmatprep.subr.bf16.mxu0 0
    %184 = vmatpush1.bf16.msra.mxu0 0
    %185 = vmatprep.mubr.bf16.mxu0 0
    %186 = vmatmul.mubr.bf16.gmra.mrb[0].mxu0 %v103
    %v187 = vpop.f32.mrb[0].mxu0
    %v188 = vadd.f32 0.0, %v187
    %v189 = vpop.f32.mrb[0].mxu0
    %v190 = vpop.f32.mrb[0].mxu0
    %v191 = vadd.f32 0.0, %v190
    %v192 = vpop.f32.mrb[0].mxu0
    %193 = vdwg.mxu0
    %v194 = vadd.f32 %v79, %v188
    %v195 = vadd.f32 %v80, %v191
    %vm196 = vcmask 261120
    %197 = vst.msk [vmem:[#allocation2] sm:$0xff] %vm196, %v194
    %198 = vst.msk [vmem:[#allocation2 + $0x8] sm:$0xff] %vm196, %v195
    // Predicated region
    $region38: #{base_model_forward.15} parent=1 // pred_check
      %p199 = pneg %p72
    $region39: #{base_model_forward.15} parent=1 // pred_check_branch
      %201 = sbr.rel (%p199) target = $region41
    $region40: #{base_model_forward.15} parent=1 // pred_region
      %v202 = vld [vmem:[#allocation2] sm:$0xff]
      %v203 = vld [vmem:[#allocation2 + $0x8] sm:$0xff]
      %v204 = vld [vmem:[#allocation8] sm:$0x1]
      %v206 = vlaneseq
      %v207 = vshrl.u32 %v206, 7
      %v208 = vsub.s32 0, %v207
      %v209 = vrot.slane %v204, %v208
      %v211 = vadd.f32 %v202, %v209
      %v212 = vadd.f32 %v203, %v209
      %v213 = vld [vmem:[#allocation9] sm:$0xff]
      %v214 = vld [vmem:[#allocation9 + $0x8] sm:$0xff]
      %v215 = vadd.f32 %v211, %v213
      %v216 = vadd.f32 %v212, %v214
      %217 = vst.msk [vmem:[#allocation11] sm:$0xff] %vm196, %v215
      %218 = vst.msk [vmem:[#allocation11 + $0x8] sm:$0xff] %vm196, %v216
    $region41: #{base_model_forward.15} parent=1 // pred_fallthru
      _
    // Predicated region
    $region42: #{base_model_forward.15} parent=1 // pred_check
      _
    $region43: #{base_model_forward.15} parent=1 // pred_check_branch
      %220 = sbr.rel (0) target = $region45
    $region44: #{base_model_forward.15} parent=1 // pred_region
      %s222 = ssub.s32 256, 256
      %223 = vsyncadd [#allocation5], %s222
      %s224 = sshll.u32 [#allocation11], 4
      %s225 = int_to_ptr.vmem [resolvable:$true] %s224
      %230 = dma.vmem_to_hbm [thread:$0]  %s225, 256, %s4, [#allocation5], 128, 128, 8
    $region45: #{base_model_forward.15} parent=1 // pred_fallthru
      _
    // Predicated region
    $region46: #{base_model_forward.15} parent=1 // pred_check
      _
    $region47: #{base_model_forward.15} parent=1 // pred_check_branch
      %232 = sbr.rel (0) target = $region49
    $region48: #{base_model_forward.15} parent=1 // pred_region
      %233 = dma.done [#allocation5], 256
    $region49: #{base_model_forward.15} parent=1 // pred_fallthru
      _
    %234 = vsyncpa [#allocation4], 1
    %235 = vsyncpa [#allocation7], 1
    %236 = vsyncpa [#allocation10], 1
    %237 = vsyncpa [#allocation5], 1

</llo_original>
